<compile_context>
chip_gen: v5e
topology: v5e:2x2
jax: 0.10.0
libtpu: 0.0.40
codegen_flags: <defaults>
</compile_context>

<pallas_src>
import functools

import jax
import jax.numpy as jnp
from jax import lax
from jax.experimental import pallas as pl
from jax.experimental.pallas import tpu as pltpu


def _ode_rk4_kernel(x_ref, w1_ref, b1_ref, wt_ref, w2_ref, b2_ref, o_ref,
                    *, n_steps: int):
    """Integrate dy/dt = f(t, y) from t=0 to t=1 with (n_steps-1) RK4 steps."""
    h = jnp.float32(1.0 / (n_steps - 1))

    # Weights (already bf16) stay resident in VMEM across the whole loop.
    w1 = w1_ref[...]                     # (H, H) bf16
    w2 = w2_ref[...]                     # (H, H) bf16
    b1 = b1_ref[...]                     # (1, H) f32
    wt = wt_ref[...]                     # (1, H) f32
    b2 = b2_ref[...]                     # (1, H) f32

    def f(bias1, y):
        # bias1 is (1, H): one vreg row, broadcast implicitly by the add.
        mm1 = jnp.dot(y.astype(jnp.bfloat16), w1,
                      preferred_element_type=jnp.float32)
        act = jnp.tanh(mm1 + bias1)
        mm2 = jnp.dot(act.astype(jnp.bfloat16), w2,
                      preferred_element_type=jnp.float32)
        return mm2 + b2

    def rk4_step(i, y):
        t = i.astype(jnp.float32) * h
        # One (1, H) time-conditioned bias per distinct t (k2/k3 share t+h/2).
        bias_t0 = b1 + t * wt
        bias_th = b1 + (t + 0.5 * h) * wt
        bias_t1 = b1 + (t + h) * wt
        # Running-accumulator RK4 combine keeps the live set small.
        k1 = f(bias_t0, y)
        acc = k1
        k2 = f(bias_th, y + (0.5 * h) * k1)        # k1 dead after this line
        acc = acc + 2.0 * k2
        k3 = f(bias_th, y + (0.5 * h) * k2)        # k2 dead
        acc = acc + 2.0 * k3
        k4 = f(bias_t1, y + h * k3)                # k3 dead
        return y + (h / 6.0) * (acc + k4)

    y0 = x_ref[...].astype(jnp.float32)
    n_rk4 = n_steps - 1
    # Full unroll only for short trip counts; partial unroll otherwise.
    unroll = True if n_rk4 <= 8 else 2
    y_final = lax.fori_loop(0, n_rk4, rk4_step, y0, unroll=unroll)
    o_ref[...] = y_final.astype(o_ref.dtype)


def ode_block_forward(x, w1, b1, wt, w2, b2, *, n_steps: int,
                      tile_b: int = 128):
    """Pallas equivalent of ODEblock.forward(x): returns y(t=1)."""
    assert n_steps >= 2
    B, H = x.shape
    tile_b = min(tile_b, B)
    assert B % tile_b == 0, "batch must be divisible by the batch tile"
    nb = B // tile_b
    # nb=2 shards across the two TensorCores on v7x; on single-TC v5e/v6e,
    # passing tile_b=B collapses to one grid step and is preferred.

    # bf16 matmul operands, f32 accumulation (documented accuracy tradeoff).
    w1b = w1.astype(jnp.bfloat16)
    w2b = w2.astype(jnp.bfloat16)

    kernel = functools.partial(_ode_rk4_kernel, n_steps=n_steps)
    return pl.pallas_call(
        kernel,
        out_shape=jax.ShapeDtypeStruct((B, H), x.dtype),
        grid_spec=pltpu.PrefetchScalarGridSpec(
            num_scalar_prefetch=0,
            grid=(nb,),
            in_specs=[
                pl.BlockSpec((tile_b, H), lambda i: (i, 0)),   # x (streams)
                pl.BlockSpec((H, H), lambda i: (0, 0)),        # W1 (resident)
                pl.BlockSpec((1, H), lambda i: (0, 0)),        # b1
                pl.BlockSpec((1, H), lambda i: (0, 0)),        # wt
                pl.BlockSpec((H, H), lambda i: (0, 0)),        # W2 (resident)
                pl.BlockSpec((1, H), lambda i: (0, 0)),        # b2
            ],
            out_specs=pl.BlockSpec((tile_b, H), lambda i: (i, 0)),
        ),
        compiler_params=pltpu.CompilerParams(
            dimension_semantics=("parallel",)),
    )(x, w1b, b1, wt, w2b, b2)


def ode_block_reference(x, w1, b1, wt, w2, b2, *, n_steps: int):
    """Pure-JAX f32 reference for correctness checking."""
    h = 1.0 / (n_steps - 1)

    def f(t, y):
        return jnp.tanh(y @ w1 + (b1 + t * wt)) @ w2 + b2

    y = x.astype(jnp.float32)
    for i in range(n_steps - 1):
        t = i * h
        k1 = f(t, y)
        k2 = f(t + 0.5 * h, y + 0.5 * h * k1)
        k3 = f(t + 0.5 * h, y + 0.5 * h * k2)
        k4 = f(t + h, y + h * k3)
        y = y + (h / 6.0) * (k1 + 2.0 * k2 + 2.0 * k3 + k4)
    return y.astype(x.dtype)


if __name__ == "__main__":
    B, H = 256, 128    # batch of independent ODE states, hidden (state dim)
    N_STEPS = 8        # integration time points (>= 2), as in ODEblock.__init__
    TILE_B = 128       # batch tile per grid step (nb=2 -> both TCs on v7x)

    key = jax.random.PRNGKey(0)
    kx, k1, kb1, kt, k2, kb2 = jax.random.split(key, 6)

    x = jax.random.normal(kx, (B, H), dtype=jnp.float32)
    # small-scale deterministic weights so tanh stays in its smooth regime
    w1 = 0.05 * jax.random.normal(k1, (H, H), dtype=jnp.float32)
    b1 = 0.05 * jax.random.normal(kb1, (1, H), dtype=jnp.float32)
    wt = 0.05 * jax.random.normal(kt, (1, H), dtype=jnp.float32)
    w2 = 0.05 * jax.random.normal(k2, (H, H), dtype=jnp.float32)
    b2 = 0.05 * jax.random.normal(kb2, (1, H), dtype=jnp.float32)

    out = ode_block_forward(x, w1, b1, wt, w2, b2,
                            n_steps=N_STEPS, tile_b=TILE_B)
    out = jax.block_until_ready(out)

    ref = ode_block_reference(x, w1, b1, wt, w2, b2, n_steps=N_STEPS)
    assert out.shape == (B, H)
    # Looser tolerance is intentional: kernel uses bf16 matmul operands
    # (f32 accumulation) for MXU throughput; reference is pure f32.
    assert jnp.allclose(out, ref, atol=5e-2, rtol=5e-2), (
        float(jnp.max(jnp.abs(out - ref))))

    print("KERNEL_OK")
</pallas_src>

<mosaic_0001>
module attributes {stable_mosaic.version = 11 : i64} {
  func.func @_ode_rk4_kernel(%arg0: i32, %arg1: memref<128x128xf32, #tpu.memory_space<vmem>>, %arg2: memref<128x128xbf16, #tpu.memory_space<vmem>>, %arg3: memref<1x128xf32, #tpu.memory_space<vmem>>, %arg4: memref<1x128xf32, #tpu.memory_space<vmem>>, %arg5: memref<128x128xbf16, #tpu.memory_space<vmem>>, %arg6: memref<1x128xf32, #tpu.memory_space<vmem>>, %arg7: memref<128x128xf32, #tpu.memory_space<vmem>>) attributes {dimension_semantics = [#tpu.dimension_semantics<parallel>], iteration_bounds = array<i64: 2>, scalar_prefetch = 0 : i64, scratch_operands = 0 : i64, tpu.core_type = #tpu.core_type<tc>, window_params = [{transform_indices = @transform_0, window_bounds = array<i64: 128, 128>}, {pipeline_mode = #tpu.pipeline_mode<synchronous>, transform_indices = @transform_1, window_bounds = array<i64: 128, 128>}, {pipeline_mode = #tpu.pipeline_mode<synchronous>, transform_indices = @transform_2, window_bounds = array<i64: 1, 128>}, {pipeline_mode = #tpu.pipeline_mode<synchronous>, transform_indices = @transform_3, window_bounds = array<i64: 1, 128>}, {pipeline_mode = #tpu.pipeline_mode<synchronous>, transform_indices = @transform_4, window_bounds = array<i64: 128, 128>}, {pipeline_mode = #tpu.pipeline_mode<synchronous>, transform_indices = @transform_5, window_bounds = array<i64: 1, 128>}, {transform_indices = @transform_6, window_bounds = array<i64: 128, 128>}]} {
    %c0 = arith.constant 0 : index
    %c0_0 = arith.constant 0 : index
    %0 = vector.load %arg2[%c0, %c0_0] : memref<128x128xbf16, #tpu.memory_space<vmem>>, vector<128x128xbf16>
    %c0_1 = arith.constant 0 : index
    %c0_2 = arith.constant 0 : index
    %1 = vector.load %arg5[%c0_1, %c0_2] : memref<128x128xbf16, #tpu.memory_space<vmem>>, vector<128x128xbf16>
    %c0_3 = arith.constant 0 : index
    %c0_4 = arith.constant 0 : index
    %2 = vector.load %arg3[%c0_3, %c0_4] : memref<1x128xf32, #tpu.memory_space<vmem>>, vector<1x128xf32>
    %c0_5 = arith.constant 0 : index
    %c0_6 = arith.constant 0 : index
    %3 = vector.load %arg4[%c0_5, %c0_6] : memref<1x128xf32, #tpu.memory_space<vmem>>, vector<1x128xf32>
    %c0_7 = arith.constant 0 : index
    %c0_8 = arith.constant 0 : index
    %4 = vector.load %arg6[%c0_7, %c0_8] : memref<1x128xf32, #tpu.memory_space<vmem>>, vector<1x128xf32>
    %c0_9 = arith.constant 0 : index
    %c0_10 = arith.constant 0 : index
    %5 = vector.load %arg1[%c0_9, %c0_10] : memref<128x128xf32, #tpu.memory_space<vmem>>, vector<128x128xf32>
    %cst = arith.constant 0.142857149 : f32
    %c0_i32 = arith.constant 0 : i32
    %6 = arith.sitofp %c0_i32 : i32 to f32
    %7 = arith.mulf %6, %cst : f32
    %8 = vector.broadcast %7 : f32 to vector<1x128xf32>
    %9 = arith.mulf %8, %3 : vector<1x128xf32>
    %10 = arith.addf %2, %9 : vector<1x128xf32>
    %cst_11 = arith.constant 5.000000e-01 : f32
    %11 = arith.mulf %cst_11, %cst : f32
    %12 = arith.addf %7, %11 : f32
    %13 = vector.broadcast %12 : f32 to vector<1x128xf32>
    %14 = arith.mulf %13, %3 : vector<1x128xf32>
    %15 = arith.addf %2, %14 : vector<1x128xf32>
    %16 = arith.addf %7, %cst : f32
    %17 = vector.broadcast %16 : f32 to vector<1x128xf32>
    %18 = arith.mulf %17, %3 : vector<1x128xf32>
    %19 = arith.addf %2, %18 : vector<1x128xf32>
    %20 = arith.truncf %5 : vector<128x128xf32> to vector<128x128xbf16>
    %cst_12 = arith.constant dense<0.000000e+00> : vector<128x128xf32>
    %21 = tpu.matmul %20, %0, %cst_12 {dimension_numbers = #tpu.dot_dimension_numbers<[1], [0], [0], [1], [0, 0, 1, 1], [], []>} : vector<128x128xbf16>, vector<128x128xbf16>, vector<128x128xf32> -> vector<128x128xf32>
    %22 = vector.broadcast %10 : vector<1x128xf32> to vector<128x128xf32>
    %23 = arith.addf %21, %22 : vector<128x128xf32>
    %24 = math.tanh %23 : vector<128x128xf32>
    %25 = arith.truncf %24 : vector<128x128xf32> to vector<128x128xbf16>
    %cst_13 = arith.constant dense<0.000000e+00> : vector<128x128xf32>
    %26 = tpu.matmul %25, %1, %cst_13 {dimension_numbers = #tpu.dot_dimension_numbers<[1], [0], [0], [1], [0, 0, 1, 1], [], []>} : vector<128x128xbf16>, vector<128x128xbf16>, vector<128x128xf32> -> vector<128x128xf32>
    %27 = vector.broadcast %4 : vector<1x128xf32> to vector<128x128xf32>
    %28 = arith.addf %26, %27 : vector<128x128xf32>
    %cst_14 = arith.constant 5.000000e-01 : f32
    %29 = arith.mulf %cst_14, %cst : f32
    %30 = vector.broadcast %29 : f32 to vector<128x128xf32>
    %31 = arith.mulf %30, %28 : vector<128x128xf32>
    %32 = arith.addf %5, %31 : vector<128x128xf32>
    %33 = arith.truncf %32 : vector<128x128xf32> to vector<128x128xbf16>
    %cst_15 = arith.constant dense<0.000000e+00> : vector<128x128xf32>
    %34 = tpu.matmul %33, %0, %cst_15 {dimension_numbers = #tpu.dot_dimension_numbers<[1], [0], [0], [1], [0, 0, 1, 1], [], []>} : vector<128x128xbf16>, vector<128x128xbf16>, vector<128x128xf32> -> vector<128x128xf32>
    %35 = vector.broadcast %15 : vector<1x128xf32> to vector<128x128xf32>
    %36 = arith.addf %34, %35 : vector<128x128xf32>
    %37 = math.tanh %36 : vector<128x128xf32>
    %38 = arith.truncf %37 : vector<128x128xf32> to vector<128x128xbf16>
    %cst_16 = arith.constant dense<0.000000e+00> : vector<128x128xf32>
    %39 = tpu.matmul %38, %1, %cst_16 {dimension_numbers = #tpu.dot_dimension_numbers<[1], [0], [0], [1], [0, 0, 1, 1], [], []>} : vector<128x128xbf16>, vector<128x128xbf16>, vector<128x128xf32> -> vector<128x128xf32>
    %40 = vector.broadcast %4 : vector<1x128xf32> to vector<128x128xf32>
    %41 = arith.addf %39, %40 : vector<128x128xf32>
    %cst_17 = arith.constant 2.000000e+00 : f32
    %42 = vector.broadcast %cst_17 : f32 to vector<128x128xf32>
    %43 = arith.mulf %42, %41 : vector<128x128xf32>
    %44 = arith.addf %28, %43 : vector<128x128xf32>
    %cst_18 = arith.constant 5.000000e-01 : f32
    %45 = arith.mulf %cst_18, %cst : f32
    %46 = vector.broadcast %45 : f32 to vector<128x128xf32>
    %47 = arith.mulf %46, %41 : vector<128x128xf32>
    %48 = arith.addf %5, %47 : vector<128x128xf32>
    %49 = arith.truncf %48 : vector<128x128xf32> to vector<128x128xbf16>
    %cst_19 = arith.constant dense<0.000000e+00> : vector<128x128xf32>
    %50 = tpu.matmul %49, %0, %cst_19 {dimension_numbers = #tpu.dot_dimension_numbers<[1], [0], [0], [1], [0, 0, 1, 1], [], []>} : vector<128x128xbf16>, vector<128x128xbf16>, vector<128x128xf32> -> vector<128x128xf32>
    %51 = vector.broadcast %15 : vector<1x128xf32> to vector<128x128xf32>
    %52 = arith.addf %50, %51 : vector<128x128xf32>
    %53 = math.tanh %52 : vector<128x128xf32>
    %54 = arith.truncf %53 : vector<128x128xf32> to vector<128x128xbf16>
    %cst_20 = arith.constant dense<0.000000e+00> : vector<128x128xf32>
    %55 = tpu.matmul %54, %1, %cst_20 {dimension_numbers = #tpu.dot_dimension_numbers<[1], [0], [0], [1], [0, 0, 1, 1], [], []>} : vector<128x128xbf16>, vector<128x128xbf16>, vector<128x128xf32> -> vector<128x128xf32>
    %56 = vector.broadcast %4 : vector<1x128xf32> to vector<128x128xf32>
    %57 = arith.addf %55, %56 : vector<128x128xf32>
    %cst_21 = arith.constant 2.000000e+00 : f32
    %58 = vector.broadcast %cst_21 : f32 to vector<128x128xf32>
    %59 = arith.mulf %58, %57 : vector<128x128xf32>
    %60 = arith.addf %44, %59 : vector<128x128xf32>
    %61 = vector.broadcast %cst : f32 to vector<128x128xf32>
    %62 = arith.mulf %61, %57 : vector<128x128xf32>
    %63 = arith.addf %5, %62 : vector<128x128xf32>
    %64 = arith.truncf %63 : vector<128x128xf32> to vector<128x128xbf16>
    %cst_22 = arith.constant dense<0.000000e+00> : vector<128x128xf32>
    %65 = tpu.matmul %64, %0, %cst_22 {dimension_numbers = #tpu.dot_dimension_numbers<[1], [0], [0], [1], [0, 0, 1, 1], [], []>} : vector<128x128xbf16>, vector<128x128xbf16>, vector<128x128xf32> -> vector<128x128xf32>
    %66 = vector.broadcast %19 : vector<1x128xf32> to vector<128x128xf32>
    %67 = arith.addf %65, %66 : vector<128x128xf32>
    %68 = math.tanh %67 : vector<128x128xf32>
    %69 = arith.truncf %68 : vector<128x128xf32> to vector<128x128xbf16>
    %cst_23 = arith.constant dense<0.000000e+00> : vector<128x128xf32>
    %70 = tpu.matmul %69, %1, %cst_23 {dimension_numbers = #tpu.dot_dimension_numbers<[1], [0], [0], [1], [0, 0, 1, 1], [], []>} : vector<128x128xbf16>, vector<128x128xbf16>, vector<128x128xf32> -> vector<128x128xf32>
    %71 = vector.broadcast %4 : vector<1x128xf32> to vector<128x128xf32>
    %72 = arith.addf %70, %71 : vector<128x128xf32>
    %cst_24 = arith.constant 6.000000e+00 : f32
    %73 = arith.divf %cst, %cst_24 : f32
    %74 = arith.addf %60, %72 : vector<128x128xf32>
    %75 = vector.broadcast %73 : f32 to vector<128x128xf32>
    %76 = arith.mulf %75, %74 : vector<128x128xf32>
    %77 = arith.addf %5, %76 : vector<128x128xf32>
    %c1_i32 = arith.constant 1 : i32
    %78 = arith.sitofp %c1_i32 : i32 to f32
    %79 = arith.mulf %78, %cst : f32
    %80 = vector.broadcast %79 : f32 to vector<1x128xf32>
    %81 = arith.mulf %80, %3 : vector<1x128xf32>
    %82 = arith.addf %2, %81 : vector<1x128xf32>
    %cst_25 = arith.constant 5.000000e-01 : f32
    %83 = arith.mulf %cst_25, %cst : f32
    %84 = arith.addf %79, %83 : f32
    %85 = vector.broadcast %84 : f32 to vector<1x128xf32>
    %86 = arith.mulf %85, %3 : vector<1x128xf32>
    %87 = arith.addf %2, %86 : vector<1x128xf32>
    %88 = arith.addf %79, %cst : f32
    %89 = vector.broadcast %88 : f32 to vector<1x128xf32>
    %90 = arith.mulf %89, %3 : vector<1x128xf32>
    %91 = arith.addf %2, %90 : vector<1x128xf32>
    %92 = arith.truncf %77 : vector<128x128xf32> to vector<128x128xbf16>
    %cst_26 = arith.constant dense<0.000000e+00> : vector<128x128xf32>
    %93 = tpu.matmul %92, %0, %cst_26 {dimension_numbers = #tpu.dot_dimension_numbers<[1], [0], [0], [1], [0, 0, 1, 1], [], []>} : vector<128x128xbf16>, vector<128x128xbf16>, vector<128x128xf32> -> vector<128x128xf32>
    %94 = vector.broadcast %82 : vector<1x128xf32> to vector<128x128xf32>
    %95 = arith.addf %93, %94 : vector<128x128xf32>
    %96 = math.tanh %95 : vector<128x128xf32>
    %97 = arith.truncf %96 : vector<128x128xf32> to vector<128x128xbf16>
    %cst_27 = arith.constant dense<0.000000e+00> : vector<128x128xf32>
    %98 = tpu.matmul %97, %1, %cst_27 {dimension_numbers = #tpu.dot_dimension_numbers<[1], [0], [0], [1], [0, 0, 1, 1], [], []>} : vector<128x128xbf16>, vector<128x128xbf16>, vector<128x128xf32> -> vector<128x128xf32>
    %99 = vector.broadcast %4 : vector<1x128xf32> to vector<128x128xf32>
    %100 = arith.addf %98, %99 : vector<128x128xf32>
    %cst_28 = arith.constant 5.000000e-01 : f32
    %101 = arith.mulf %cst_28, %cst : f32
    %102 = vector.broadcast %101 : f32 to vector<128x128xf32>
    %103 = arith.mulf %102, %100 : vector<128x128xf32>
    %104 = arith.addf %77, %103 : vector<128x128xf32>
    %105 = arith.truncf %104 : vector<128x128xf32> to vector<128x128xbf16>
    %cst_29 = arith.constant dense<0.000000e+00> : vector<128x128xf32>
    %106 = tpu.matmul %105, %0, %cst_29 {dimension_numbers = #tpu.dot_dimension_numbers<[1], [0], [0], [1], [0, 0, 1, 1], [], []>} : vector<128x128xbf16>, vector<128x128xbf16>, vector<128x128xf32> -> vector<128x128xf32>
    %107 = vector.broadcast %87 : vector<1x128xf32> to vector<128x128xf32>
    %108 = arith.addf %106, %107 : vector<128x128xf32>
    %109 = math.tanh %108 : vector<128x128xf32>
    %110 = arith.truncf %109 : vector<128x128xf32> to vector<128x128xbf16>
    %cst_30 = arith.constant dense<0.000000e+00> : vector<128x128xf32>
    %111 = tpu.matmul %110, %1, %cst_30 {dimension_numbers = #tpu.dot_dimension_numbers<[1], [0], [0], [1], [0, 0, 1, 1], [], []>} : vector<128x128xbf16>, vector<128x128xbf16>, vector<128x128xf32> -> vector<128x128xf32>
    %112 = vector.broadcast %4 : vector<1x128xf32> to vector<128x128xf32>
    %113 = arith.addf %111, %112 : vector<128x128xf32>
    %cst_31 = arith.constant 2.000000e+00 : f32
    %114 = vector.broadcast %cst_31 : f32 to vector<128x128xf32>
    %115 = arith.mulf %114, %113 : vector<128x128xf32>
    %116 = arith.addf %100, %115 : vector<128x128xf32>
    %cst_32 = arith.constant 5.000000e-01 : f32
    %117 = arith.mulf %cst_32, %cst : f32
    %118 = vector.broadcast %117 : f32 to vector<128x128xf32>
    %119 = arith.mulf %118, %113 : vector<128x128xf32>
    %120 = arith.addf %77, %119 : vector<128x128xf32>
    %121 = arith.truncf %120 : vector<128x128xf32> to vector<128x128xbf16>
    %cst_33 = arith.constant dense<0.000000e+00> : vector<128x128xf32>
    %122 = tpu.matmul %121, %0, %cst_33 {dimension_numbers = #tpu.dot_dimension_numbers<[1], [0], [0], [1], [0, 0, 1, 1], [], []>} : vector<128x128xbf16>, vector<128x128xbf16>, vector<128x128xf32> -> vector<128x128xf32>
    %123 = vector.broadcast %87 : vector<1x128xf32> to vector<128x128xf32>
    %124 = arith.addf %122, %123 : vector<128x128xf32>
    %125 = math.tanh %124 : vector<128x128xf32>
    %126 = arith.truncf %125 : vector<128x128xf32> to vector<128x128xbf16>
    %cst_34 = arith.constant dense<0.000000e+00> : vector<128x128xf32>
    %127 = tpu.matmul %126, %1, %cst_34 {dimension_numbers = #tpu.dot_dimension_numbers<[1], [0], [0], [1], [0, 0, 1, 1], [], []>} : vector<128x128xbf16>, vector<128x128xbf16>, vector<128x128xf32> -> vector<128x128xf32>
    %128 = vector.broadcast %4 : vector<1x128xf32> to vector<128x128xf32>
    %129 = arith.addf %127, %128 : vector<128x128xf32>
    %cst_35 = arith.constant 2.000000e+00 : f32
    %130 = vector.broadcast %cst_35 : f32 to vector<128x128xf32>
    %131 = arith.mulf %130, %129 : vector<128x128xf32>
    %132 = arith.addf %116, %131 : vector<128x128xf32>
    %133 = vector.broadcast %cst : f32 to vector<128x128xf32>
    %134 = arith.mulf %133, %129 : vector<128x128xf32>
    %135 = arith.addf %77, %134 : vector<128x128xf32>
    %136 = arith.truncf %135 : vector<128x128xf32> to vector<128x128xbf16>
    %cst_36 = arith.constant dense<0.000000e+00> : vector<128x128xf32>
    %137 = tpu.matmul %136, %0, %cst_36 {dimension_numbers = #tpu.dot_dimension_numbers<[1], [0], [0], [1], [0, 0, 1, 1], [], []>} : vector<128x128xbf16>, vector<128x128xbf16>, vector<128x128xf32> -> vector<128x128xf32>
    %138 = vector.broadcast %91 : vector<1x128xf32> to vector<128x128xf32>
    %139 = arith.addf %137, %138 : vector<128x128xf32>
    %140 = math.tanh %139 : vector<128x128xf32>
    %141 = arith.truncf %140 : vector<128x128xf32> to vector<128x128xbf16>
    %cst_37 = arith.constant dense<0.000000e+00> : vector<128x128xf32>
    %142 = tpu.matmul %141, %1, %cst_37 {dimension_numbers = #tpu.dot_dimension_numbers<[1], [0], [0], [1], [0, 0, 1, 1], [], []>} : vector<128x128xbf16>, vector<128x128xbf16>, vector<128x128xf32> -> vector<128x128xf32>
    %143 = vector.broadcast %4 : vector<1x128xf32> to vector<128x128xf32>
    %144 = arith.addf %142, %143 : vector<128x128xf32>
    %cst_38 = arith.constant 6.000000e+00 : f32
    %145 = arith.divf %cst, %cst_38 : f32
    %146 = arith.addf %132, %144 : vector<128x128xf32>
    %147 = vector.broadcast %145 : f32 to vector<128x128xf32>
    %148 = arith.mulf %147, %146 : vector<128x128xf32>
    %149 = arith.addf %77, %148 : vector<128x128xf32>
    %c2_i32 = arith.constant 2 : i32
    %150 = arith.sitofp %c2_i32 : i32 to f32
    %151 = arith.mulf %150, %cst : f32
    %152 = vector.broadcast %151 : f32 to vector<1x128xf32>
    %153 = arith.mulf %152, %3 : vector<1x128xf32>
    %154 = arith.addf %2, %153 : vector<1x128xf32>
    %cst_39 = arith.constant 5.000000e-01 : f32
    %155 = arith.mulf %cst_39, %cst : f32
    %156 = arith.addf %151, %155 : f32
    %157 = vector.broadcast %156 : f32 to vector<1x128xf32>
    %158 = arith.mulf %157, %3 : vector<1x128xf32>
    %159 = arith.addf %2, %158 : vector<1x128xf32>
    %160 = arith.addf %151, %cst : f32
    %161 = vector.broadcast %160 : f32 to vector<1x128xf32>
    %162 = arith.mulf %161, %3 : vector<1x128xf32>
    %163 = arith.addf %2, %162 : vector<1x128xf32>
    %164 = arith.truncf %149 : vector<128x128xf32> to vector<128x128xbf16>
    %cst_40 = arith.constant dense<0.000000e+00> : vector<128x128xf32>
    %165 = tpu.matmul %164, %0, %cst_40 {dimension_numbers = #tpu.dot_dimension_numbers<[1], [0], [0], [1], [0, 0, 1, 1], [], []>} : vector<128x128xbf16>, vector<128x128xbf16>, vector<128x128xf32> -> vector<128x128xf32>
    %166 = vector.broadcast %154 : vector<1x128xf32> to vector<128x128xf32>
    %167 = arith.addf %165, %166 : vector<128x128xf32>
    %168 = math.tanh %167 : vector<128x128xf32>
    %169 = arith.truncf %168 : vector<128x128xf32> to vector<128x128xbf16>
    %cst_41 = arith.constant dense<0.000000e+00> : vector<128x128xf32>
    %170 = tpu.matmul %169, %1, %cst_41 {dimension_numbers = #tpu.dot_dimension_numbers<[1], [0], [0], [1], [0, 0, 1, 1], [], []>} : vector<128x128xbf16>, vector<128x128xbf16>, vector<128x128xf32> -> vector<128x128xf32>
    %171 = vector.broadcast %4 : vector<1x128xf32> to vector<128x128xf32>
    %172 = arith.addf %170, %171 : vector<128x128xf32>
    %cst_42 = arith.constant 5.000000e-01 : f32
    %173 = arith.mulf %cst_42, %cst : f32
    %174 = vector.broadcast %173 : f32 to vector<128x128xf32>
    %175 = arith.mulf %174, %172 : vector<128x128xf32>
    %176 = arith.addf %149, %175 : vector<128x128xf32>
    %177 = arith.truncf %176 : vector<128x128xf32> to vector<128x128xbf16>
    %cst_43 = arith.constant dense<0.000000e+00> : vector<128x128xf32>
    %178 = tpu.matmul %177, %0, %cst_43 {dimension_numbers = #tpu.dot_dimension_numbers<[1], [0], [0], [1], [0, 0, 1, 1], [], []>} : vector<128x128xbf16>, vector<128x128xbf16>, vector<128x128xf32> -> vector<128x128xf32>
    %179 = vector.broadcast %159 : vector<1x128xf32> to vector<128x128xf32>
    %180 = arith.addf %178, %179 : vector<128x128xf32>
    %181 = math.tanh %180 : vector<128x128xf32>
    %182 = arith.truncf %181 : vector<128x128xf32> to vector<128x128xbf16>
    %cst_44 = arith.constant dense<0.000000e+00> : vector<128x128xf32>
    %183 = tpu.matmul %182, %1, %cst_44 {dimension_numbers = #tpu.dot_dimension_numbers<[1], [0], [0], [1], [0, 0, 1, 1], [], []>} : vector<128x128xbf16>, vector<128x128xbf16>, vector<128x128xf32> -> vector<128x128xf32>
    %184 = vector.broadcast %4 : vector<1x128xf32> to vector<128x128xf32>
    %185 = arith.addf %183, %184 : vector<128x128xf32>
    %cst_45 = arith.constant 2.000000e+00 : f32
    %186 = vector.broadcast %cst_45 : f32 to vector<128x128xf32>
    %187 = arith.mulf %186, %185 : vector<128x128xf32>
    %188 = arith.addf %172, %187 : vector<128x128xf32>
    %cst_46 = arith.constant 5.000000e-01 : f32
    %189 = arith.mulf %cst_46, %cst : f32
    %190 = vector.broadcast %189 : f32 to vector<128x128xf32>
    %191 = arith.mulf %190, %185 : vector<128x128xf32>
    %192 = arith.addf %149, %191 : vector<128x128xf32>
    %193 = arith.truncf %192 : vector<128x128xf32> to vector<128x128xbf16>
    %cst_47 = arith.constant dense<0.000000e+00> : vector<128x128xf32>
    %194 = tpu.matmul %193, %0, %cst_47 {dimension_numbers = #tpu.dot_dimension_numbers<[1], [0], [0], [1], [0, 0, 1, 1], [], []>} : vector<128x128xbf16>, vector<128x128xbf16>, vector<128x128xf32> -> vector<128x128xf32>
    %195 = vector.broadcast %159 : vector<1x128xf32> to vector<128x128xf32>
    %196 = arith.addf %194, %195 : vector<128x128xf32>
    %197 = math.tanh %196 : vector<128x128xf32>
    %198 = arith.truncf %197 : vector<128x128xf32> to vector<128x128xbf16>
    %cst_48 = arith.constant dense<0.000000e+00> : vector<128x128xf32>
    %199 = tpu.matmul %198, %1, %cst_48 {dimension_numbers = #tpu.dot_dimension_numbers<[1], [0], [0], [1], [0, 0, 1, 1], [], []>} : vector<128x128xbf16>, vector<128x128xbf16>, vector<128x128xf32> -> vector<128x128xf32>
    %200 = vector.broadcast %4 : vector<1x128xf32> to vector<128x128xf32>
    %201 = arith.addf %199, %200 : vector<128x128xf32>
    %cst_49 = arith.constant 2.000000e+00 : f32
    %202 = vector.broadcast %cst_49 : f32 to vector<128x128xf32>
    %203 = arith.mulf %202, %201 : vector<128x128xf32>
    %204 = arith.addf %188, %203 : vector<128x128xf32>
    %205 = vector.broadcast %cst : f32 to vector<128x128xf32>
    %206 = arith.mulf %205, %201 : vector<128x128xf32>
    %207 = arith.addf %149, %206 : vector<128x128xf32>
    %208 = arith.truncf %207 : vector<128x128xf32> to vector<128x128xbf16>
    %cst_50 = arith.constant dense<0.000000e+00> : vector<128x128xf32>
    %209 = tpu.matmul %208, %0, %cst_50 {dimension_numbers = #tpu.dot_dimension_numbers<[1], [0], [0], [1], [0, 0, 1, 1], [], []>} : vector<128x128xbf16>, vector<128x128xbf16>, vector<128x128xf32> -> vector<128x128xf32>
    %210 = vector.broadcast %163 : vector<1x128xf32> to vector<128x128xf32>
    %211 = arith.addf %209, %210 : vector<128x128xf32>
    %212 = math.tanh %211 : vector<128x128xf32>
    %213 = arith.truncf %212 : vector<128x128xf32> to vector<128x128xbf16>
    %cst_51 = arith.constant dense<0.000000e+00> : vector<128x128xf32>
    %214 = tpu.matmul %213, %1, %cst_51 {dimension_numbers = #tpu.dot_dimension_numbers<[1], [0], [0], [1], [0, 0, 1, 1], [], []>} : vector<128x128xbf16>, vector<128x128xbf16>, vector<128x128xf32> -> vector<128x128xf32>
    %215 = vector.broadcast %4 : vector<1x128xf32> to vector<128x128xf32>
    %216 = arith.addf %214, %215 : vector<128x128xf32>
    %cst_52 = arith.constant 6.000000e+00 : f32
    %217 = arith.divf %cst, %cst_52 : f32
    %218 = arith.addf %204, %216 : vector<128x128xf32>
    %219 = vector.broadcast %217 : f32 to vector<128x128xf32>
    %220 = arith.mulf %219, %218 : vector<128x128xf32>
    %221 = arith.addf %149, %220 : vector<128x128xf32>
    %c3_i32 = arith.constant 3 : i32
    %222 = arith.sitofp %c3_i32 : i32 to f32
    %223 = arith.mulf %222, %cst : f32
    %224 = vector.broadcast %223 : f32 to vector<1x128xf32>
    %225 = arith.mulf %224, %3 : vector<1x128xf32>
    %226 = arith.addf %2, %225 : vector<1x128xf32>
    %cst_53 = arith.constant 5.000000e-01 : f32
    %227 = arith.mulf %cst_53, %cst : f32
    %228 = arith.addf %223, %227 : f32
    %229 = vector.broadcast %228 : f32 to vector<1x128xf32>
    %230 = arith.mulf %229, %3 : vector<1x128xf32>
    %231 = arith.addf %2, %230 : vector<1x128xf32>
    %232 = arith.addf %223, %cst : f32
    %233 = vector.broadcast %232 : f32 to vector<1x128xf32>
    %234 = arith.mulf %233, %3 : vector<1x128xf32>
    %235 = arith.addf %2, %234 : vector<1x128xf32>
    %236 = arith.truncf %221 : vector<128x128xf32> to vector<128x128xbf16>
    %cst_54 = arith.constant dense<0.000000e+00> : vector<128x128xf32>
    %237 = tpu.matmul %236, %0, %cst_54 {dimension_numbers = #tpu.dot_dimension_numbers<[1], [0], [0], [1], [0, 0, 1, 1], [], []>} : vector<128x128xbf16>, vector<128x128xbf16>, vector<128x128xf32> -> vector<128x128xf32>
    %238 = vector.broadcast %226 : vector<1x128xf32> to vector<128x128xf32>
    %239 = arith.addf %237, %238 : vector<128x128xf32>
    %240 = math.tanh %239 : vector<128x128xf32>
    %241 = arith.truncf %240 : vector<128x128xf32> to vector<128x128xbf16>
    %cst_55 = arith.constant dense<0.000000e+00> : vector<128x128xf32>
    %242 = tpu.matmul %241, %1, %cst_55 {dimension_numbers = #tpu.dot_dimension_numbers<[1], [0], [0], [1], [0, 0, 1, 1], [], []>} : vector<128x128xbf16>, vector<128x128xbf16>, vector<128x128xf32> -> vector<128x128xf32>
    %243 = vector.broadcast %4 : vector<1x128xf32> to vector<128x128xf32>
    %244 = arith.addf %242, %243 : vector<128x128xf32>
    %cst_56 = arith.constant 5.000000e-01 : f32
    %245 = arith.mulf %cst_56, %cst : f32
    %246 = vector.broadcast %245 : f32 to vector<128x128xf32>
    %247 = arith.mulf %246, %244 : vector<128x128xf32>
    %248 = arith.addf %221, %247 : vector<128x128xf32>
    %249 = arith.truncf %248 : vector<128x128xf32> to vector<128x128xbf16>
    %cst_57 = arith.constant dense<0.000000e+00> : vector<128x128xf32>
    %250 = tpu.matmul %249, %0, %cst_57 {dimension_numbers = #tpu.dot_dimension_numbers<[1], [0], [0], [1], [0, 0, 1, 1], [], []>} : vector<128x128xbf16>, vector<128x128xbf16>, vector<128x128xf32> -> vector<128x128xf32>
    %251 = vector.broadcast %231 : vector<1x128xf32> to vector<128x128xf32>
    %252 = arith.addf %250, %251 : vector<128x128xf32>
    %253 = math.tanh %252 : vector<128x128xf32>
    %254 = arith.truncf %253 : vector<128x128xf32> to vector<128x128xbf16>
    %cst_58 = arith.constant dense<0.000000e+00> : vector<128x128xf32>
    %255 = tpu.matmul %254, %1, %cst_58 {dimension_numbers = #tpu.dot_dimension_numbers<[1], [0], [0], [1], [0, 0, 1, 1], [], []>} : vector<128x128xbf16>, vector<128x128xbf16>, vector<128x128xf32> -> vector<128x128xf32>
    %256 = vector.broadcast %4 : vector<1x128xf32> to vector<128x128xf32>
    %257 = arith.addf %255, %256 : vector<128x128xf32>
    %cst_59 = arith.constant 2.000000e+00 : f32
    %258 = vector.broadcast %cst_59 : f32 to vector<128x128xf32>
    %259 = arith.mulf %258, %257 : vector<128x128xf32>
    %260 = arith.addf %244, %259 : vector<128x128xf32>
    %cst_60 = arith.constant 5.000000e-01 : f32
    %261 = arith.mulf %cst_60, %cst : f32
    %262 = vector.broadcast %261 : f32 to vector<128x128xf32>
    %263 = arith.mulf %262, %257 : vector<128x128xf32>
    %264 = arith.addf %221, %263 : vector<128x128xf32>
    %265 = arith.truncf %264 : vector<128x128xf32> to vector<128x128xbf16>
    %cst_61 = arith.constant dense<0.000000e+00> : vector<128x128xf32>
    %266 = tpu.matmul %265, %0, %cst_61 {dimension_numbers = #tpu.dot_dimension_numbers<[1], [0], [0], [1], [0, 0, 1, 1], [], []>} : vector<128x128xbf16>, vector<128x128xbf16>, vector<128x128xf32> -> vector<128x128xf32>
    %267 = vector.broadcast %231 : vector<1x128xf32> to vector<128x128xf32>
    %268 = arith.addf %266, %267 : vector<128x128xf32>
    %269 = math.tanh %268 : vector<128x128xf32>
    %270 = arith.truncf %269 : vector<128x128xf32> to vector<128x128xbf16>
    %cst_62 = arith.constant dense<0.000000e+00> : vector<128x128xf32>
    %271 = tpu.matmul %270, %1, %cst_62 {dimension_numbers = #tpu.dot_dimension_numbers<[1], [0], [0], [1], [0, 0, 1, 1], [], []>} : vector<128x128xbf16>, vector<128x128xbf16>, vector<128x128xf32> -> vector<128x128xf32>
    %272 = vector.broadcast %4 : vector<1x128xf32> to vector<128x128xf32>
    %273 = arith.addf %271, %272 : vector<128x128xf32>
    %cst_63 = arith.constant 2.000000e+00 : f32
    %274 = vector.broadcast %cst_63 : f32 to vector<128x128xf32>
    %275 = arith.mulf %274, %273 : vector<128x128xf32>
    %276 = arith.addf %260, %275 : vector<128x128xf32>
    %277 = vector.broadcast %cst : f32 to vector<128x128xf32>
    %278 = arith.mulf %277, %273 : vector<128x128xf32>
    %279 = arith.addf %221, %278 : vector<128x128xf32>
    %280 = arith.truncf %279 : vector<128x128xf32> to vector<128x128xbf16>
    %cst_64 = arith.constant dense<0.000000e+00> : vector<128x128xf32>
    %281 = tpu.matmul %280, %0, %cst_64 {dimension_numbers = #tpu.dot_dimension_numbers<[1], [0], [0], [1], [0, 0, 1, 1], [], []>} : vector<128x128xbf16>, vector<128x128xbf16>, vector<128x128xf32> -> vector<128x128xf32>
    %282 = vector.broadcast %235 : vector<1x128xf32> to vector<128x128xf32>
    %283 = arith.addf %281, %282 : vector<128x128xf32>
    %284 = math.tanh %283 : vector<128x128xf32>
    %285 = arith.truncf %284 : vector<128x128xf32> to vector<128x128xbf16>
    %cst_65 = arith.constant dense<0.000000e+00> : vector<128x128xf32>
    %286 = tpu.matmul %285, %1, %cst_65 {dimension_numbers = #tpu.dot_dimension_numbers<[1], [0], [0], [1], [0, 0, 1, 1], [], []>} : vector<128x128xbf16>, vector<128x128xbf16>, vector<128x128xf32> -> vector<128x128xf32>
    %287 = vector.broadcast %4 : vector<1x128xf32> to vector<128x128xf32>
    %288 = arith.addf %286, %287 : vector<128x128xf32>
    %cst_66 = arith.constant 6.000000e+00 : f32
    %289 = arith.divf %cst, %cst_66 : f32
    %290 = arith.addf %276, %288 : vector<128x128xf32>
    %291 = vector.broadcast %289 : f32 to vector<128x128xf32>
    %292 = arith.mulf %291, %290 : vector<128x128xf32>
    %293 = arith.addf %221, %292 : vector<128x128xf32>
    %c4_i32 = arith.constant 4 : i32
    %294 = arith.sitofp %c4_i32 : i32 to f32
    %295 = arith.mulf %294, %cst : f32
    %296 = vector.broadcast %295 : f32 to vector<1x128xf32>
    %297 = arith.mulf %296, %3 : vector<1x128xf32>
    %298 = arith.addf %2, %297 : vector<1x128xf32>
    %cst_67 = arith.constant 5.000000e-01 : f32
    %299 = arith.mulf %cst_67, %cst : f32
    %300 = arith.addf %295, %299 : f32
    %301 = vector.broadcast %300 : f32 to vector<1x128xf32>
    %302 = arith.mulf %301, %3 : vector<1x128xf32>
    %303 = arith.addf %2, %302 : vector<1x128xf32>
    %304 = arith.addf %295, %cst : f32
    %305 = vector.broadcast %304 : f32 to vector<1x128xf32>
    %306 = arith.mulf %305, %3 : vector<1x128xf32>
    %307 = arith.addf %2, %306 : vector<1x128xf32>
    %308 = arith.truncf %293 : vector<128x128xf32> to vector<128x128xbf16>
    %cst_68 = arith.constant dense<0.000000e+00> : vector<128x128xf32>
    %309 = tpu.matmul %308, %0, %cst_68 {dimension_numbers = #tpu.dot_dimension_numbers<[1], [0], [0], [1], [0, 0, 1, 1], [], []>} : vector<128x128xbf16>, vector<128x128xbf16>, vector<128x128xf32> -> vector<128x128xf32>
    %310 = vector.broadcast %298 : vector<1x128xf32> to vector<128x128xf32>
    %311 = arith.addf %309, %310 : vector<128x128xf32>
    %312 = math.tanh %311 : vector<128x128xf32>
    %313 = arith.truncf %312 : vector<128x128xf32> to vector<128x128xbf16>
    %cst_69 = arith.constant dense<0.000000e+00> : vector<128x128xf32>
    %314 = tpu.matmul %313, %1, %cst_69 {dimension_numbers = #tpu.dot_dimension_numbers<[1], [0], [0], [1], [0, 0, 1, 1], [], []>} : vector<128x128xbf16>, vector<128x128xbf16>, vector<128x128xf32> -> vector<128x128xf32>
    %315 = vector.broadcast %4 : vector<1x128xf32> to vector<128x128xf32>
    %316 = arith.addf %314, %315 : vector<128x128xf32>
    %cst_70 = arith.constant 5.000000e-01 : f32
    %317 = arith.mulf %cst_70, %cst : f32
    %318 = vector.broadcast %317 : f32 to vector<128x128xf32>
    %319 = arith.mulf %318, %316 : vector<128x128xf32>
    %320 = arith.addf %293, %319 : vector<128x128xf32>
    %321 = arith.truncf %320 : vector<128x128xf32> to vector<128x128xbf16>
    %cst_71 = arith.constant dense<0.000000e+00> : vector<128x128xf32>
    %322 = tpu.matmul %321, %0, %cst_71 {dimension_numbers = #tpu.dot_dimension_numbers<[1], [0], [0], [1], [0, 0, 1, 1], [], []>} : vector<128x128xbf16>, vector<128x128xbf16>, vector<128x128xf32> -> vector<128x128xf32>
    %323 = vector.broadcast %303 : vector<1x128xf32> to vector<128x128xf32>
    %324 = arith.addf %322, %323 : vector<128x128xf32>
    %325 = math.tanh %324 : vector<128x128xf32>
    %326 = arith.truncf %325 : vector<128x128xf32> to vector<128x128xbf16>
    %cst_72 = arith.constant dense<0.000000e+00> : vector<128x128xf32>
    %327 = tpu.matmul %326, %1, %cst_72 {dimension_numbers = #tpu.dot_dimension_numbers<[1], [0], [0], [1], [0, 0, 1, 1], [], []>} : vector<128x128xbf16>, vector<128x128xbf16>, vector<128x128xf32> -> vector<128x128xf32>
    %328 = vector.broadcast %4 : vector<1x128xf32> to vector<128x128xf32>
    %329 = arith.addf %327, %328 : vector<128x128xf32>
    %cst_73 = arith.constant 2.000000e+00 : f32
    %330 = vector.broadcast %cst_73 : f32 to vector<128x128xf32>
    %331 = arith.mulf %330, %329 : vector<128x128xf32>
    %332 = arith.addf %316, %331 : vector<128x128xf32>
    %cst_74 = arith.constant 5.000000e-01 : f32
    %333 = arith.mulf %cst_74, %cst : f32
    %334 = vector.broadcast %333 : f32 to vector<128x128xf32>
    %335 = arith.mulf %334, %329 : vector<128x128xf32>
    %336 = arith.addf %293, %335 : vector<128x128xf32>
    %337 = arith.truncf %336 : vector<128x128xf32> to vector<128x128xbf16>
    %cst_75 = arith.constant dense<0.000000e+00> : vector<128x128xf32>
    %338 = tpu.matmul %337, %0, %cst_75 {dimension_numbers = #tpu.dot_dimension_numbers<[1], [0], [0], [1], [0, 0, 1, 1], [], []>} : vector<128x128xbf16>, vector<128x128xbf16>, vector<128x128xf32> -> vector<128x128xf32>
    %339 = vector.broadcast %303 : vector<1x128xf32> to vector<128x128xf32>
    %340 = arith.addf %338, %339 : vector<128x128xf32>
    %341 = math.tanh %340 : vector<128x128xf32>
    %342 = arith.truncf %341 : vector<128x128xf32> to vector<128x128xbf16>
    %cst_76 = arith.constant dense<0.000000e+00> : vector<128x128xf32>
    %343 = tpu.matmul %342, %1, %cst_76 {dimension_numbers = #tpu.dot_dimension_numbers<[1], [0], [0], [1], [0, 0, 1, 1], [], []>} : vector<128x128xbf16>, vector<128x128xbf16>, vector<128x128xf32> -> vector<128x128xf32>
    %344 = vector.broadcast %4 : vector<1x128xf32> to vector<128x128xf32>
    %345 = arith.addf %343, %344 : vector<128x128xf32>
    %cst_77 = arith.constant 2.000000e+00 : f32
    %346 = vector.broadcast %cst_77 : f32 to vector<128x128xf32>
    %347 = arith.mulf %346, %345 : vector<128x128xf32>
    %348 = arith.addf %332, %347 : vector<128x128xf32>
    %349 = vector.broadcast %cst : f32 to vector<128x128xf32>
    %350 = arith.mulf %349, %345 : vector<128x128xf32>
    %351 = arith.addf %293, %350 : vector<128x128xf32>
    %352 = arith.truncf %351 : vector<128x128xf32> to vector<128x128xbf16>
    %cst_78 = arith.constant dense<0.000000e+00> : vector<128x128xf32>
    %353 = tpu.matmul %352, %0, %cst_78 {dimension_numbers = #tpu.dot_dimension_numbers<[1], [0], [0], [1], [0, 0, 1, 1], [], []>} : vector<128x128xbf16>, vector<128x128xbf16>, vector<128x128xf32> -> vector<128x128xf32>
    %354 = vector.broadcast %307 : vector<1x128xf32> to vector<128x128xf32>
    %355 = arith.addf %353, %354 : vector<128x128xf32>
    %356 = math.tanh %355 : vector<128x128xf32>
    %357 = arith.truncf %356 : vector<128x128xf32> to vector<128x128xbf16>
    %cst_79 = arith.constant dense<0.000000e+00> : vector<128x128xf32>
    %358 = tpu.matmul %357, %1, %cst_79 {dimension_numbers = #tpu.dot_dimension_numbers<[1], [0], [0], [1], [0, 0, 1, 1], [], []>} : vector<128x128xbf16>, vector<128x128xbf16>, vector<128x128xf32> -> vector<128x128xf32>
    %359 = vector.broadcast %4 : vector<1x128xf32> to vector<128x128xf32>
    %360 = arith.addf %358, %359 : vector<128x128xf32>
    %cst_80 = arith.constant 6.000000e+00 : f32
    %361 = arith.divf %cst, %cst_80 : f32
    %362 = arith.addf %348, %360 : vector<128x128xf32>
    %363 = vector.broadcast %361 : f32 to vector<128x128xf32>
    %364 = arith.mulf %363, %362 : vector<128x128xf32>
    %365 = arith.addf %293, %364 : vector<128x128xf32>
    %c5_i32 = arith.constant 5 : i32
    %366 = arith.sitofp %c5_i32 : i32 to f32
    %367 = arith.mulf %366, %cst : f32
    %368 = vector.broadcast %367 : f32 to vector<1x128xf32>
    %369 = arith.mulf %368, %3 : vector<1x128xf32>
    %370 = arith.addf %2, %369 : vector<1x128xf32>
    %cst_81 = arith.constant 5.000000e-01 : f32
    %371 = arith.mulf %cst_81, %cst : f32
    %372 = arith.addf %367, %371 : f32
    %373 = vector.broadcast %372 : f32 to vector<1x128xf32>
    %374 = arith.mulf %373, %3 : vector<1x128xf32>
    %375 = arith.addf %2, %374 : vector<1x128xf32>
    %376 = arith.addf %367, %cst : f32
    %377 = vector.broadcast %376 : f32 to vector<1x128xf32>
    %378 = arith.mulf %377, %3 : vector<1x128xf32>
    %379 = arith.addf %2, %378 : vector<1x128xf32>
    %380 = arith.truncf %365 : vector<128x128xf32> to vector<128x128xbf16>
    %cst_82 = arith.constant dense<0.000000e+00> : vector<128x128xf32>
    %381 = tpu.matmul %380, %0, %cst_82 {dimension_numbers = #tpu.dot_dimension_numbers<[1], [0], [0], [1], [0, 0, 1, 1], [], []>} : vector<128x128xbf16>, vector<128x128xbf16>, vector<128x128xf32> -> vector<128x128xf32>
    %382 = vector.broadcast %370 : vector<1x128xf32> to vector<128x128xf32>
    %383 = arith.addf %381, %382 : vector<128x128xf32>
    %384 = math.tanh %383 : vector<128x128xf32>
    %385 = arith.truncf %384 : vector<128x128xf32> to vector<128x128xbf16>
    %cst_83 = arith.constant dense<0.000000e+00> : vector<128x128xf32>
    %386 = tpu.matmul %385, %1, %cst_83 {dimension_numbers = #tpu.dot_dimension_numbers<[1], [0], [0], [1], [0, 0, 1, 1], [], []>} : vector<128x128xbf16>, vector<128x128xbf16>, vector<128x128xf32> -> vector<128x128xf32>
    %387 = vector.broadcast %4 : vector<1x128xf32> to vector<128x128xf32>
    %388 = arith.addf %386, %387 : vector<128x128xf32>
    %cst_84 = arith.constant 5.000000e-01 : f32
    %389 = arith.mulf %cst_84, %cst : f32
    %390 = vector.broadcast %389 : f32 to vector<128x128xf32>
    %391 = arith.mulf %390, %388 : vector<128x128xf32>
    %392 = arith.addf %365, %391 : vector<128x128xf32>
    %393 = arith.truncf %392 : vector<128x128xf32> to vector<128x128xbf16>
    %cst_85 = arith.constant dense<0.000000e+00> : vector<128x128xf32>
    %394 = tpu.matmul %393, %0, %cst_85 {dimension_numbers = #tpu.dot_dimension_numbers<[1], [0], [0], [1], [0, 0, 1, 1], [], []>} : vector<128x128xbf16>, vector<128x128xbf16>, vector<128x128xf32> -> vector<128x128xf32>
    %395 = vector.broadcast %375 : vector<1x128xf32> to vector<128x128xf32>
    %396 = arith.addf %394, %395 : vector<128x128xf32>
    %397 = math.tanh %396 : vector<128x128xf32>
    %398 = arith.truncf %397 : vector<128x128xf32> to vector<128x128xbf16>
    %cst_86 = arith.constant dense<0.000000e+00> : vector<128x128xf32>
    %399 = tpu.matmul %398, %1, %cst_86 {dimension_numbers = #tpu.dot_dimension_numbers<[1], [0], [0], [1], [0, 0, 1, 1], [], []>} : vector<128x128xbf16>, vector<128x128xbf16>, vector<128x128xf32> -> vector<128x128xf32>
    %400 = vector.broadcast %4 : vector<1x128xf32> to vector<128x128xf32>
    %401 = arith.addf %399, %400 : vector<128x128xf32>
    %cst_87 = arith.constant 2.000000e+00 : f32
    %402 = vector.broadcast %cst_87 : f32 to vector<128x128xf32>
    %403 = arith.mulf %402, %401 : vector<128x128xf32>
    %404 = arith.addf %388, %403 : vector<128x128xf32>
    %cst_88 = arith.constant 5.000000e-01 : f32
    %405 = arith.mulf %cst_88, %cst : f32
    %406 = vector.broadcast %405 : f32 to vector<128x128xf32>
    %407 = arith.mulf %406, %401 : vector<128x128xf32>
    %408 = arith.addf %365, %407 : vector<128x128xf32>
    %409 = arith.truncf %408 : vector<128x128xf32> to vector<128x128xbf16>
    %cst_89 = arith.constant dense<0.000000e+00> : vector<128x128xf32>
    %410 = tpu.matmul %409, %0, %cst_89 {dimension_numbers = #tpu.dot_dimension_numbers<[1], [0], [0], [1], [0, 0, 1, 1], [], []>} : vector<128x128xbf16>, vector<128x128xbf16>, vector<128x128xf32> -> vector<128x128xf32>
    %411 = vector.broadcast %375 : vector<1x128xf32> to vector<128x128xf32>
    %412 = arith.addf %410, %411 : vector<128x128xf32>
    %413 = math.tanh %412 : vector<128x128xf32>
    %414 = arith.truncf %413 : vector<128x128xf32> to vector<128x128xbf16>
    %cst_90 = arith.constant dense<0.000000e+00> : vector<128x128xf32>
    %415 = tpu.matmul %414, %1, %cst_90 {dimension_numbers = #tpu.dot_dimension_numbers<[1], [0], [0], [1], [0, 0, 1, 1], [], []>} : vector<128x128xbf16>, vector<128x128xbf16>, vector<128x128xf32> -> vector<128x128xf32>
    %416 = vector.broadcast %4 : vector<1x128xf32> to vector<128x128xf32>
    %417 = arith.addf %415, %416 : vector<128x128xf32>
    %cst_91 = arith.constant 2.000000e+00 : f32
    %418 = vector.broadcast %cst_91 : f32 to vector<128x128xf32>
    %419 = arith.mulf %418, %417 : vector<128x128xf32>
    %420 = arith.addf %404, %419 : vector<128x128xf32>
    %421 = vector.broadcast %cst : f32 to vector<128x128xf32>
    %422 = arith.mulf %421, %417 : vector<128x128xf32>
    %423 = arith.addf %365, %422 : vector<128x128xf32>
    %424 = arith.truncf %423 : vector<128x128xf32> to vector<128x128xbf16>
    %cst_92 = arith.constant dense<0.000000e+00> : vector<128x128xf32>
    %425 = tpu.matmul %424, %0, %cst_92 {dimension_numbers = #tpu.dot_dimension_numbers<[1], [0], [0], [1], [0, 0, 1, 1], [], []>} : vector<128x128xbf16>, vector<128x128xbf16>, vector<128x128xf32> -> vector<128x128xf32>
    %426 = vector.broadcast %379 : vector<1x128xf32> to vector<128x128xf32>
    %427 = arith.addf %425, %426 : vector<128x128xf32>
    %428 = math.tanh %427 : vector<128x128xf32>
    %429 = arith.truncf %428 : vector<128x128xf32> to vector<128x128xbf16>
    %cst_93 = arith.constant dense<0.000000e+00> : vector<128x128xf32>
    %430 = tpu.matmul %429, %1, %cst_93 {dimension_numbers = #tpu.dot_dimension_numbers<[1], [0], [0], [1], [0, 0, 1, 1], [], []>} : vector<128x128xbf16>, vector<128x128xbf16>, vector<128x128xf32> -> vector<128x128xf32>
    %431 = vector.broadcast %4 : vector<1x128xf32> to vector<128x128xf32>
    %432 = arith.addf %430, %431 : vector<128x128xf32>
    %cst_94 = arith.constant 6.000000e+00 : f32
    %433 = arith.divf %cst, %cst_94 : f32
    %434 = arith.addf %420, %432 : vector<128x128xf32>
    %435 = vector.broadcast %433 : f32 to vector<128x128xf32>
    %436 = arith.mulf %435, %434 : vector<128x128xf32>
    %437 = arith.addf %365, %436 : vector<128x128xf32>
    %c6_i32 = arith.constant 6 : i32
    %438 = arith.sitofp %c6_i32 : i32 to f32
    %439 = arith.mulf %438, %cst : f32
    %440 = vector.broadcast %439 : f32 to vector<1x128xf32>
    %441 = arith.mulf %440, %3 : vector<1x128xf32>
    %442 = arith.addf %2, %441 : vector<1x128xf32>
    %cst_95 = arith.constant 5.000000e-01 : f32
    %443 = arith.mulf %cst_95, %cst : f32
    %444 = arith.addf %439, %443 : f32
    %445 = vector.broadcast %444 : f32 to vector<1x128xf32>
    %446 = arith.mulf %445, %3 : vector<1x128xf32>
    %447 = arith.addf %2, %446 : vector<1x128xf32>
    %448 = arith.addf %439, %cst : f32
    %449 = vector.broadcast %448 : f32 to vector<1x128xf32>
    %450 = arith.mulf %449, %3 : vector<1x128xf32>
    %451 = arith.addf %2, %450 : vector<1x128xf32>
    %452 = arith.truncf %437 : vector<128x128xf32> to vector<128x128xbf16>
    %cst_96 = arith.constant dense<0.000000e+00> : vector<128x128xf32>
    %453 = tpu.matmul %452, %0, %cst_96 {dimension_numbers = #tpu.dot_dimension_numbers<[1], [0], [0], [1], [0, 0, 1, 1], [], []>} : vector<128x128xbf16>, vector<128x128xbf16>, vector<128x128xf32> -> vector<128x128xf32>
    %454 = vector.broadcast %442 : vector<1x128xf32> to vector<128x128xf32>
    %455 = arith.addf %453, %454 : vector<128x128xf32>
    %456 = math.tanh %455 : vector<128x128xf32>
    %457 = arith.truncf %456 : vector<128x128xf32> to vector<128x128xbf16>
    %cst_97 = arith.constant dense<0.000000e+00> : vector<128x128xf32>
    %458 = tpu.matmul %457, %1, %cst_97 {dimension_numbers = #tpu.dot_dimension_numbers<[1], [0], [0], [1], [0, 0, 1, 1], [], []>} : vector<128x128xbf16>, vector<128x128xbf16>, vector<128x128xf32> -> vector<128x128xf32>
    %459 = vector.broadcast %4 : vector<1x128xf32> to vector<128x128xf32>
    %460 = arith.addf %458, %459 : vector<128x128xf32>
    %cst_98 = arith.constant 5.000000e-01 : f32
    %461 = arith.mulf %cst_98, %cst : f32
    %462 = vector.broadcast %461 : f32 to vector<128x128xf32>
    %463 = arith.mulf %462, %460 : vector<128x128xf32>
    %464 = arith.addf %437, %463 : vector<128x128xf32>
    %465 = arith.truncf %464 : vector<128x128xf32> to vector<128x128xbf16>
    %cst_99 = arith.constant dense<0.000000e+00> : vector<128x128xf32>
    %466 = tpu.matmul %465, %0, %cst_99 {dimension_numbers = #tpu.dot_dimension_numbers<[1], [0], [0], [1], [0, 0, 1, 1], [], []>} : vector<128x128xbf16>, vector<128x128xbf16>, vector<128x128xf32> -> vector<128x128xf32>
    %467 = vector.broadcast %447 : vector<1x128xf32> to vector<128x128xf32>
    %468 = arith.addf %466, %467 : vector<128x128xf32>
    %469 = math.tanh %468 : vector<128x128xf32>
    %470 = arith.truncf %469 : vector<128x128xf32> to vector<128x128xbf16>
    %cst_100 = arith.constant dense<0.000000e+00> : vector<128x128xf32>
    %471 = tpu.matmul %470, %1, %cst_100 {dimension_numbers = #tpu.dot_dimension_numbers<[1], [0], [0], [1], [0, 0, 1, 1], [], []>} : vector<128x128xbf16>, vector<128x128xbf16>, vector<128x128xf32> -> vector<128x128xf32>
    %472 = vector.broadcast %4 : vector<1x128xf32> to vector<128x128xf32>
    %473 = arith.addf %471, %472 : vector<128x128xf32>
    %cst_101 = arith.constant 2.000000e+00 : f32
    %474 = vector.broadcast %cst_101 : f32 to vector<128x128xf32>
    %475 = arith.mulf %474, %473 : vector<128x128xf32>
    %476 = arith.addf %460, %475 : vector<128x128xf32>
    %cst_102 = arith.constant 5.000000e-01 : f32
    %477 = arith.mulf %cst_102, %cst : f32
    %478 = vector.broadcast %477 : f32 to vector<128x128xf32>
    %479 = arith.mulf %478, %473 : vector<128x128xf32>
    %480 = arith.addf %437, %479 : vector<128x128xf32>
    %481 = arith.truncf %480 : vector<128x128xf32> to vector<128x128xbf16>
    %cst_103 = arith.constant dense<0.000000e+00> : vector<128x128xf32>
    %482 = tpu.matmul %481, %0, %cst_103 {dimension_numbers = #tpu.dot_dimension_numbers<[1], [0], [0], [1], [0, 0, 1, 1], [], []>} : vector<128x128xbf16>, vector<128x128xbf16>, vector<128x128xf32> -> vector<128x128xf32>
    %483 = vector.broadcast %447 : vector<1x128xf32> to vector<128x128xf32>
    %484 = arith.addf %482, %483 : vector<128x128xf32>
    %485 = math.tanh %484 : vector<128x128xf32>
    %486 = arith.truncf %485 : vector<128x128xf32> to vector<128x128xbf16>
    %cst_104 = arith.constant dense<0.000000e+00> : vector<128x128xf32>
    %487 = tpu.matmul %486, %1, %cst_104 {dimension_numbers = #tpu.dot_dimension_numbers<[1], [0], [0], [1], [0, 0, 1, 1], [], []>} : vector<128x128xbf16>, vector<128x128xbf16>, vector<128x128xf32> -> vector<128x128xf32>
    %488 = vector.broadcast %4 : vector<1x128xf32> to vector<128x128xf32>
    %489 = arith.addf %487, %488 : vector<128x128xf32>
    %cst_105 = arith.constant 2.000000e+00 : f32
    %490 = vector.broadcast %cst_105 : f32 to vector<128x128xf32>
    %491 = arith.mulf %490, %489 : vector<128x128xf32>
    %492 = arith.addf %476, %491 : vector<128x128xf32>
    %493 = vector.broadcast %cst : f32 to vector<128x128xf32>
    %494 = arith.mulf %493, %489 : vector<128x128xf32>
    %495 = arith.addf %437, %494 : vector<128x128xf32>
    %496 = arith.truncf %495 : vector<128x128xf32> to vector<128x128xbf16>
    %cst_106 = arith.constant dense<0.000000e+00> : vector<128x128xf32>
    %497 = tpu.matmul %496, %0, %cst_106 {dimension_numbers = #tpu.dot_dimension_numbers<[1], [0], [0], [1], [0, 0, 1, 1], [], []>} : vector<128x128xbf16>, vector<128x128xbf16>, vector<128x128xf32> -> vector<128x128xf32>
    %498 = vector.broadcast %451 : vector<1x128xf32> to vector<128x128xf32>
    %499 = arith.addf %497, %498 : vector<128x128xf32>
    %500 = math.tanh %499 : vector<128x128xf32>
    %501 = arith.truncf %500 : vector<128x128xf32> to vector<128x128xbf16>
    %cst_107 = arith.constant dense<0.000000e+00> : vector<128x128xf32>
    %502 = tpu.matmul %501, %1, %cst_107 {dimension_numbers = #tpu.dot_dimension_numbers<[1], [0], [0], [1], [0, 0, 1, 1], [], []>} : vector<128x128xbf16>, vector<128x128xbf16>, vector<128x128xf32> -> vector<128x128xf32>
    %503 = vector.broadcast %4 : vector<1x128xf32> to vector<128x128xf32>
    %504 = arith.addf %502, %503 : vector<128x128xf32>
    %cst_108 = arith.constant 6.000000e+00 : f32
    %505 = arith.divf %cst, %cst_108 : f32
    %506 = arith.addf %492, %504 : vector<128x128xf32>
    %507 = vector.broadcast %505 : f32 to vector<128x128xf32>
    %508 = arith.mulf %507, %506 : vector<128x128xf32>
    %509 = arith.addf %437, %508 : vector<128x128xf32>
    %c7_i32 = arith.constant 7 : i32
    %c0_109 = arith.constant 0 : index
    %c0_110 = arith.constant 0 : index
    %510 = vector.load %arg7[%c0_109, %c0_110] : memref<128x128xf32, #tpu.memory_space<vmem>>, vector<128x128xf32>
    tpu.vector_store %arg7[%c0_109, %c0_110], %509 {strides = array<i32>} : memref<128x128xf32, #tpu.memory_space<vmem>>, vector<128x128xf32>,
    return
  }
  func.func @transform_0(%arg0: i32) -> (i32, i32) {
    %c0_i32 = arith.constant 0 : i32
    %c0_i32_0 = arith.constant 0 : i32
    return %arg0, %c0_i32 : i32, i32
  }
  func.func @transform_1(%arg0: i32) -> (i32, i32) {
    %c0_i32 = arith.constant 0 : i32
    %c0_i32_0 = arith.constant 0 : i32
    %c0_i32_1 = arith.constant 0 : i32
    return %c0_i32, %c0_i32_0 : i32, i32
  }
  func.func @transform_2(%arg0: i32) -> (i32, i32) {
    %c0_i32 = arith.constant 0 : i32
    %c0_i32_0 = arith.constant 0 : i32
    %c0_i32_1 = arith.constant 0 : i32
    return %c0_i32, %c0_i32_0 : i32, i32
  }
  func.func @transform_3(%arg0: i32) -> (i32, i32) {
    %c0_i32 = arith.constant 0 : i32
    %c0_i32_0 = arith.constant 0 : i32
    %c0_i32_1 = arith.constant 0 : i32
    return %c0_i32, %c0_i32_0 : i32, i32
  }
  func.func @transform_4(%arg0: i32) -> (i32, i32) {
    %c0_i32 = arith.constant 0 : i32
    %c0_i32_0 = arith.constant 0 : i32
    %c0_i32_1 = arith.constant 0 : i32
    return %c0_i32, %c0_i32_0 : i32, i32
  }
  func.func @transform_5(%arg0: i32) -> (i32, i32) {
    %c0_i32 = arith.constant 0 : i32
    %c0_i32_0 = arith.constant 0 : i32
    %c0_i32_1 = arith.constant 0 : i32
    return %c0_i32, %c0_i32_0 : i32, i32
  }
  func.func @transform_6(%arg0: i32) -> (i32, i32) {
    %c0_i32 = arith.constant 0 : i32
    %c0_i32_0 = arith.constant 0 : i32
    return %arg0, %c0_i32 : i32, i32
  }
}

</mosaic_0001>

<llo_original>
// kernel: tpu_custom_call.1
$region0: #{tpu_custom_call.1}
  #allocation0 [shape = 'u32[]', space=smem, size = 0x4, offset = 0x4, fixed_abs, tag = 'smem constant byte address 0x4 - core index']
  #allocation1 [shape = 'u32[72,128]{1,0:T(1,128)}', space=vmem, size = 0x9000, scoped, tag = 'internal scratch']
  %s0 = inlined_call_operand.hbm [shape: f32[256,128], index: 0, kind: input, shape index: {}]
  %s1 = inlined_call_operand.hbm [shape: bf16[128,128], index: 1, kind: input, shape index: {}]
  %s2 = inlined_call_operand.vmem [shape: f32[1,128], index: 2, kind: input, shape index: {}]
  %s3 = inlined_call_operand.vmem [shape: f32[1,128], index: 3, kind: input, shape index: {}]
  %s4 = inlined_call_operand.hbm [shape: bf16[128,128], index: 4, kind: input, shape index: {}]
  %s5 = inlined_call_operand.vmem [shape: f32[1,128], index: 5, kind: input, shape index: {}]
  %s6 = inlined_call_operand.hbm [shape: f32[256,128], index: 6, kind: output, shape index: {}]
  %s7 = sld [smem:[#allocation0]]
  $region69: #{tpu_custom_call.1} parent=0
    _
  %s9 = ssub.s32 1, %s7
  %s10 = scalar_select 0, %s9, %s7
  $region1: #{tpu_custom_call.1} parent=0
    #allocation2 [shape = 'u8[131072]{0}', space=vmem, size = 0x20000, scoped, tag = 'input window, operand 0']
    #allocation3 [shape = 's32[2]{0}', space=sflag, size = 0x8, scoped, tag = 'scoped memory for tpu_custom_call.1']
    #allocation4 [shape = 's32[2]{0}', space=sflag, size = 0x8, scoped, tag = 'scoped memory for tpu_custom_call.1']
    #allocation5 [shape = 'u8[32768]{0}', space=vmem, size = 0x8000, scoped, tag = 'input window, operand 1, single buffered']
    #allocation6 [shape = 's32[1]{0}', space=sflag, size = 0x4, scoped, tag = 'scoped memory for tpu_custom_call.1']
    #allocation7 [shape = 'u8[32768]{0}', space=vmem, size = 0x8000, scoped, tag = 'input window, operand 4, single buffered']
    #allocation8 [shape = 'u8[131072]{0}', space=vmem, size = 0x20000, scoped, tag = 'output window, operand 0']
    %11 = vsyncpa [#allocation3], 0
    %s12 = scalar_lea.sflag [#allocation3], 1
    %13 = vsyncpa %s12, 0
    %14 = vsyncpa [#allocation6], 0
    %15 = vsyncpa [#allocation4], 0
    %s16 = scalar_lea.sflag [#allocation4], 1
    %17 = vsyncpa %s16, 0
    loop: start=0, step=1, limit=4
    $region2: #{tpu_custom_call.1} parent=1 // loop_pre_header
      _
    $region3: #{tpu_custom_call.1} parent=1 // loop_header
      %s19 = sphi 0, %s23
      %p20 = scmp.ge.s32.totalorder %s19, 4
      %s29 = sphi 0, %s31
      %s32 = sphi 0, %s29
      %s33 = sphi 0, %s32
      %s49 = sphi 0, %s33
      %s53 = sphi 0, %s53
      %s55 = sphi 0, %s53
      %s56 = sphi 0, %s55
      %s70 = sphi 0, %s56
      %s74 = sphi 0, %s74
      %s76 = sphi 0, %s74
      %s77 = sphi 0, %s76
      %s91 = sphi 0, %s77
      %s95 = sphi 0, %s95
      %s97 = sphi 0, %s95
      %s98 = sphi 0, %s97
      %s112 = sphi 0, %s98
      %s116 = sphi 0, %s116
      %s118 = sphi 0, %s116
      %s119 = sphi 0, %s118
      %s133 = sphi 0, %s119
      %s137 = sphi 0, %s137
      %s139 = sphi 0, %s137
      %s140 = sphi 0, %s139
      %s154 = sphi 0, %s140
      %s160 = sphi 0, %s162
      %s163 = sphi 0, %s160
      %s164 = sphi 0, %s163
      %s180 = sphi 0, %s164
    $region4: #{tpu_custom_call.1} parent=1 // loop_header_branch
      %22 = sbr.rel (%p20) target = $region8
    $region5: #{tpu_custom_call.1} parent=1 // loop_body
      %s24 = ssub.s32 %s19, 1
      %s25 = ssub.s32 %s19, 2
      %s26 = sadd.s32 %s19, 1
      %s27 = ssub.s32 %s19, %s26
      %p28 = scmp.eq.s32.totalorder %s27, 0
      %s30 = sadd.s32 %s29, 1
      %s31 = scalar_select %p28, %s29, %s30
      %p34 = pneg %p28
      %p35 = scmp.eq.s32.totalorder %s19, 1
      %p36 = por %p34, %p35
      %p37 = scmp.ne.s32.totalorder %s29, %s32
      %p38 = scmp.eq.s32.totalorder %s19, 0
      %p39 = por %p37, %p38
      %p40 = scmp.ne.s32.totalorder %s29, %s32
      %p41 = scmp.eq.s32.totalorder %s24, 1
      %p42 = por %p40, %p41
      %p43 = scmp.ne.s32.totalorder %s32, %s33
      %p44 = scmp.eq.s32.totalorder %s24, 0
      %p45 = por %p43, %p44
      %p46 = scmp.ne.s32.totalorder %s32, %s33
      %p47 = scmp.eq.s32.totalorder %s25, 1
      %p48 = por %p46, %p47
      %p50 = scmp.ne.s32.totalorder %s33, %s49
      %p51 = scmp.eq.s32.totalorder %s25, 0
      %p52 = por %p50, %p51
      %s54 = sadd.s32 %s53, 1
      %p57 = scmp.eq.s32.totalorder %s19, 1
      %p58 = scmp.ne.s32.totalorder %s53, %s55
      %p59 = scmp.eq.s32.totalorder %s19, 0
      %p60 = por %p58, %p59
      %p61 = scmp.ne.s32.totalorder %s53, %s55
      %p62 = scmp.eq.s32.totalorder %s24, 1
      %p63 = por %p61, %p62
      %p64 = scmp.ne.s32.totalorder %s55, %s56
      %p65 = scmp.eq.s32.totalorder %s24, 0
      %p66 = por %p64, %p65
      %p67 = scmp.ne.s32.totalorder %s55, %s56
      %p68 = scmp.eq.s32.totalorder %s25, 1
      %p69 = por %p67, %p68
      %p71 = scmp.ne.s32.totalorder %s56, %s70
      %p72 = scmp.eq.s32.totalorder %s25, 0
      %p73 = por %p71, %p72
      %s75 = sadd.s32 %s74, 1
      %p78 = scmp.eq.s32.totalorder %s19, 1
      %p79 = scmp.ne.s32.totalorder %s74, %s76
      %p80 = scmp.eq.s32.totalorder %s19, 0
      %p81 = por %p79, %p80
      %p82 = scmp.ne.s32.totalorder %s74, %s76
      %p83 = scmp.eq.s32.totalorder %s24, 1
      %p84 = por %p82, %p83
      %p85 = scmp.ne.s32.totalorder %s76, %s77
      %p86 = scmp.eq.s32.totalorder %s24, 0
      %p87 = por %p85, %p86
      %p88 = scmp.ne.s32.totalorder %s76, %s77
      %p89 = scmp.eq.s32.totalorder %s25, 1
      %p90 = por %p88, %p89
      %p92 = scmp.ne.s32.totalorder %s77, %s91
      %p93 = scmp.eq.s32.totalorder %s25, 0
      %p94 = por %p92, %p93
      %s96 = sadd.s32 %s95, 1
      %p99 = scmp.eq.s32.totalorder %s19, 1
      %p100 = scmp.ne.s32.totalorder %s95, %s97
      %p101 = scmp.eq.s32.totalorder %s19, 0
      %p102 = por %p100, %p101
      %p103 = scmp.ne.s32.totalorder %s95, %s97
      %p104 = scmp.eq.s32.totalorder %s24, 1
      %p105 = por %p103, %p104
      %p106 = scmp.ne.s32.totalorder %s97, %s98
      %p107 = scmp.eq.s32.totalorder %s24, 0
      %p108 = por %p106, %p107
      %p109 = scmp.ne.s32.totalorder %s97, %s98
      %p110 = scmp.eq.s32.totalorder %s25, 1
      %p111 = por %p109, %p110
      %p113 = scmp.ne.s32.totalorder %s98, %s112
      %p114 = scmp.eq.s32.totalorder %s25, 0
      %p115 = por %p113, %p114
      %s117 = sadd.s32 %s116, 1
      %p120 = scmp.eq.s32.totalorder %s19, 1
      %p121 = scmp.ne.s32.totalorder %s116, %s118
      %p122 = scmp.eq.s32.totalorder %s19, 0
      %p123 = por %p121, %p122
      %p124 = scmp.ne.s32.totalorder %s116, %s118
      %p125 = scmp.eq.s32.totalorder %s24, 1
      %p126 = por %p124, %p125
      %p127 = scmp.ne.s32.totalorder %s118, %s119
      %p128 = scmp.eq.s32.totalorder %s24, 0
      %p129 = por %p127, %p128
      %p130 = scmp.ne.s32.totalorder %s118, %s119
      %p131 = scmp.eq.s32.totalorder %s25, 1
      %p132 = por %p130, %p131
      %p134 = scmp.ne.s32.totalorder %s119, %s133
      %p135 = scmp.eq.s32.totalorder %s25, 0
      %p136 = por %p134, %p135
      %s138 = sadd.s32 %s137, 1
      %p141 = scmp.eq.s32.totalorder %s19, 1
      %p142 = scmp.ne.s32.totalorder %s137, %s139
      %p143 = scmp.eq.s32.totalorder %s19, 0
      %p144 = por %p142, %p143
      %p145 = scmp.ne.s32.totalorder %s137, %s139
      %p146 = scmp.eq.s32.totalorder %s24, 1
      %p147 = por %p145, %p146
      %p148 = scmp.ne.s32.totalorder %s139, %s140
      %p149 = scmp.eq.s32.totalorder %s24, 0
      %p150 = por %p148, %p149
      %p151 = scmp.ne.s32.totalorder %s139, %s140
      %p152 = scmp.eq.s32.totalorder %s25, 1
      %p153 = por %p151, %p152
      %p155 = scmp.ne.s32.totalorder %s140, %s154
      %p156 = scmp.eq.s32.totalorder %s25, 0
      %p157 = por %p155, %p156
      %s158 = ssub.s32 %s19, %s26
      %p159 = scmp.eq.s32.totalorder %s158, 0
      %s161 = sadd.s32 %s160, 1
      %s162 = scalar_select %p159, %s160, %s161
      %p165 = pneg %p159
      %p166 = scmp.eq.s32.totalorder %s19, 1
      %p167 = por %p165, %p166
      %p168 = scmp.ne.s32.totalorder %s160, %s163
      %p169 = scmp.eq.s32.totalorder %s19, 0
      %p170 = por %p168, %p169
      %p171 = scmp.ne.s32.totalorder %s160, %s163
      %p172 = scmp.eq.s32.totalorder %s24, 1
      %p173 = por %p171, %p172
      %p174 = scmp.ne.s32.totalorder %s163, %s164
      %p175 = scmp.eq.s32.totalorder %s24, 0
      %p176 = por %p174, %p175
      %p177 = scmp.ne.s32.totalorder %s163, %s164
      %p178 = scmp.eq.s32.totalorder %s25, 1
      %p179 = por %p177, %p178
      %p181 = scmp.ne.s32.totalorder %s164, %s180
      %p182 = scmp.eq.s32.totalorder %s25, 0
      %p183 = por %p181, %p182
      %p184 = scmp.le.s32.totalorder 1, %s19
      %p185 = scmp.lt.s32.totalorder %s19, 3
      %p186 = pnand %p184, %p185
      %p187 = pneg %p186
      // Predicated region
      $region9: #{tpu_custom_call.1} parent=5 // pred_check
        _
      $region10: #{tpu_custom_call.1} parent=5 // pred_check_branch
        %189 = sbr.rel (%p186) target = $region12
      $region11: #{tpu_custom_call.1} parent=5 // pred_region
        %s190 = ssub.s32 %s19, 1
        // Predicated region
        $region13: #{tpu_custom_call.1} parent=11 // pred_check
          %p191 = pneg %p66
        $region14: #{tpu_custom_call.1} parent=11 // pred_check_branch
          %193 = sbr.rel (%p191) target = $region16
        $region15: #{tpu_custom_call.1} parent=11 // pred_region
          %195 = vsyncadd [#allocation6], 0
          %s196 = sshll.u32 %s1, 4
          %s197 = int_to_ptr.hbm [resolvable:$true] %s196
          %s198 = sshll.u32 [#allocation5], 4
          %s199 = int_to_ptr.vmem [resolvable:$true] %s198
          %204 = dma.hbm_to_vmem [thread:$0]  %s197, 1024, %s199, [#allocation6], 64, 64, 4
        $region16: #{tpu_custom_call.1} parent=11 // pred_fallthru
          _
        // Predicated region
        $region17: #{tpu_custom_call.1} parent=11 // pred_check
          %p205 = pneg %p87
        $region18: #{tpu_custom_call.1} parent=11 // pred_check_branch
          %207 = sbr.rel (%p205) target = $region20
        $region19: #{tpu_custom_call.1} parent=11 // pred_region
          _
        $region20: #{tpu_custom_call.1} parent=11 // pred_fallthru
          _
        // Predicated region
        $region21: #{tpu_custom_call.1} parent=11 // pred_check
          %p208 = pneg %p108
        $region22: #{tpu_custom_call.1} parent=11 // pred_check_branch
          %210 = sbr.rel (%p208) target = $region24
        $region23: #{tpu_custom_call.1} parent=11 // pred_region
          _
        $region24: #{tpu_custom_call.1} parent=11 // pred_fallthru
          _
        // Predicated region
        $region25: #{tpu_custom_call.1} parent=11 // pred_check
          %p211 = pneg %p129
        $region26: #{tpu_custom_call.1} parent=11 // pred_check_branch
          %213 = sbr.rel (%p211) target = $region28
        $region27: #{tpu_custom_call.1} parent=11 // pred_region
          %215 = vsyncadd [#allocation6], 0
          %s216 = sshll.u32 %s4, 4
          %s217 = int_to_ptr.hbm [resolvable:$true] %s216
          %s218 = sshll.u32 [#allocation7], 4
          %s219 = int_to_ptr.vmem [resolvable:$true] %s218
          %224 = dma.hbm_to_vmem [thread:$0]  %s217, 1024, %s219, [#allocation6], 64, 64, 4
        $region28: #{tpu_custom_call.1} parent=11 // pred_fallthru
          _
        // Predicated region
        $region29: #{tpu_custom_call.1} parent=11 // pred_check
          %p225 = pneg %p150
        $region30: #{tpu_custom_call.1} parent=11 // pred_check_branch
          %227 = sbr.rel (%p225) target = $region32
        $region31: #{tpu_custom_call.1} parent=11 // pred_region
          _
        $region32: #{tpu_custom_call.1} parent=11 // pred_fallthru
          _
      $region12: #{tpu_custom_call.1} parent=5 // pred_fallthru
        _
      %p228 = scmp.lt.s32.totalorder %s19, 2
      // Predicated region
      $region33: #{tpu_custom_call.1} parent=5 // pred_check
        %p229 = pneg %p228
      $region34: #{tpu_custom_call.1} parent=5 // pred_check_branch
        %231 = sbr.rel (%p229) target = $region36
      $region35: #{tpu_custom_call.1} parent=5 // pred_region
        // Predicated region
        $region37: #{tpu_custom_call.1} parent=35 // pred_check
          %p232 = pneg %p39
        $region38: #{tpu_custom_call.1} parent=35 // pred_check_branch
          %234 = sbr.rel (%p232) target = $region40
        $region39: #{tpu_custom_call.1} parent=35 // pred_region
          %s235 = sand.u32 %s29, 1
          %s236 = scalar_lea.sflag [#allocation3], %s235
          %s237 = sand.u32 %s29, 1
          %s238 = smul.addr %s237, 128
          %s239 = scalar_lea.vmem [#allocation2], %s238
          %s240 = smul.u32 16, %s19
          %242 = vsyncadd %s236, 0
          %s243 = smul.addr %s240, 8
          %s244 = scalar_lea.hbm %s0, %s243
          %s245 = sshll.u32 %s244, 4
          %s246 = int_to_ptr.hbm [resolvable:$true] %s245
          %s247 = sshll.u32 %s239, 4
          %s248 = int_to_ptr.vmem [resolvable:$true] %s247
          %253 = dma.hbm_to_vmem [thread:$0]  %s246, 2048, %s248, %s236, 128, 128, 8
        $region40: #{tpu_custom_call.1} parent=35 // pred_fallthru
          _
      $region36: #{tpu_custom_call.1} parent=5 // pred_fallthru
        _
      %p254 = scmp.le.s32.totalorder 1, %s19
      %p255 = scmp.lt.s32.totalorder %s19, 3
      %p256 = pnand %p254, %p255
      %p257 = pneg %p256
      // Predicated region
      $region41: #{tpu_custom_call.1} parent=5 // pred_check
        _
      $region42: #{tpu_custom_call.1} parent=5 // pred_check_branch
        %259 = sbr.rel (%p256) target = $region44
      $region43: #{tpu_custom_call.1} parent=5 // pred_region
        %s260 = ssub.s32 %s19, 1
        %s261 = sand.u32 %s32, 1
        %s262 = scalar_lea.sflag [#allocation3], %s261
        %s263 = sand.u32 %s32, 1
        %s264 = smul.addr %s263, 128
        %s265 = scalar_lea.vmem [#allocation2], %s264
        // Predicated region
        $region45: #{tpu_custom_call.1} parent=43 // pred_check
          %p266 = pneg %p45
        $region46: #{tpu_custom_call.1} parent=43 // pred_check_branch
          %268 = sbr.rel (%p266) target = $region48
        $region47: #{tpu_custom_call.1} parent=43 // pred_region
          %270 = dma.done %s262, 2048
        $region48: #{tpu_custom_call.1} parent=43 // pred_fallthru
          _
        // Predicated region
        $region49: #{tpu_custom_call.1} parent=43 // pred_check
          %p271 = pneg %p66
        $region50: #{tpu_custom_call.1} parent=43 // pred_check_branch
          %273 = sbr.rel (%p271) target = $region52
        $region51: #{tpu_custom_call.1} parent=43 // pred_region
          %275 = dma.done [#allocation6], 1024
        $region52: #{tpu_custom_call.1} parent=43 // pred_fallthru
          _
        // Predicated region
        $region53: #{tpu_custom_call.1} parent=43 // pred_check
          %p276 = pneg %p129
        $region54: #{tpu_custom_call.1} parent=43 // pred_check_branch
          %278 = sbr.rel (%p276) target = $region56
        $region55: #{tpu_custom_call.1} parent=43 // pred_region
          %280 = dma.done [#allocation6], 1024
        $region56: #{tpu_custom_call.1} parent=43 // pred_fallthru
          _
        %s281 = sand.u32 %s32, 1
        %s282 = scalar_lea.sflag [#allocation3], %s281
        %s283 = sand.u32 %s32, 1
        %s284 = smul.addr %s283, 128
        %s285 = scalar_lea.vmem [#allocation2], %s284
        %p286 = pneg %p45
        %p287 = pneg %p42
        %p288 = pneg %p66
        %p289 = pneg %p63
        %p290 = pneg %p87
        %p291 = pneg %p84
        %p292 = pneg %p108
        %p293 = pneg %p105
        %p294 = pneg %p129
        %p295 = pneg %p126
        %p296 = pneg %p150
        %p297 = pneg %p147
        %p298 = pneg %p176
        %p299 = pneg %p173
        %s300 = sand.u32 %s163, 1
        %s301 = scalar_lea.sflag [#allocation4], %s300
        %s302 = sand.u32 %s163, 1
        %s303 = smul.addr %s302, 128
        %s304 = scalar_lea.vmem [#allocation8], %s303
        %s305 = smul.u32 16, %s24
        %s306 = smul.u32 16, %s24
        %v307 = vld [vmem:[#allocation5] sm:$0xf]
        %v308 = vld [vmem:[#allocation5 + $0x4] sm:$0xf]
        %v309 = vld [vmem:[#allocation5 + $0x8] sm:$0xf]
        %v310 = vld [vmem:[#allocation5 + $0xc] sm:$0xf]
        %v311 = vld [vmem:[#allocation5 + $0x10] sm:$0xf]
        %v312 = vld [vmem:[#allocation5 + $0x14] sm:$0xf]
        %v313 = vld [vmem:[#allocation5 + $0x18] sm:$0xf]
        %v314 = vld [vmem:[#allocation5 + $0x1c] sm:$0xf]
        %v315 = vld [vmem:[#allocation5 + $0x20] sm:$0xf]
        %v316 = vld [vmem:[#allocation5 + $0x24] sm:$0xf]
        %v317 = vld [vmem:[#allocation5 + $0x28] sm:$0xf]
        %v318 = vld [vmem:[#allocation5 + $0x2c] sm:$0xf]
        %v319 = vld [vmem:[#allocation5 + $0x30] sm:$0xf]
        %v320 = vld [vmem:[#allocation5 + $0x34] sm:$0xf]
        %v321 = vld [vmem:[#allocation5 + $0x38] sm:$0xf]
        %v322 = vld [vmem:[#allocation5 + $0x3c] sm:$0xf]
        %v323 = vld [vmem:[#allocation7] sm:$0xf]
        %v324 = vld [vmem:[#allocation7 + $0x4] sm:$0xf]
        %v325 = vld [vmem:[#allocation7 + $0x8] sm:$0xf]
        %v326 = vld [vmem:[#allocation7 + $0xc] sm:$0xf]
        %v327 = vld [vmem:[#allocation7 + $0x10] sm:$0xf]
        %v328 = vld [vmem:[#allocation7 + $0x14] sm:$0xf]
        %v329 = vld [vmem:[#allocation7 + $0x18] sm:$0xf]
        %v330 = vld [vmem:[#allocation7 + $0x1c] sm:$0xf]
        %v331 = vld [vmem:[#allocation7 + $0x20] sm:$0xf]
        %v332 = vld [vmem:[#allocation7 + $0x24] sm:$0xf]
        %v333 = vld [vmem:[#allocation7 + $0x28] sm:$0xf]
        %v334 = vld [vmem:[#allocation7 + $0x2c] sm:$0xf]
        %v335 = vld [vmem:[#allocation7 + $0x30] sm:$0xf]
        %v336 = vld [vmem:[#allocation7 + $0x34] sm:$0xf]
        %v337 = vld [vmem:[#allocation7 + $0x38] sm:$0xf]
        %v338 = vld [vmem:[#allocation7 + $0x3c] sm:$0xf]
        %v339 = vld [vmem:[%s2] sm:$0x1]
        %v340 = vld [vmem:[%s3] sm:$0x1]
        %v341 = vld [vmem:[%s5] sm:$0x1]
        %v342 = vld [vmem:[%s265] sm:$0xff]
        %v343 = vld [vmem:[%s265 + $0x8] sm:$0xff]
        %v344 = vld [vmem:[%s265 + $0x10] sm:$0xff]
        %v345 = vld [vmem:[%s265 + $0x18] sm:$0xff]
        %v346 = vld [vmem:[%s265 + $0x20] sm:$0xff]
        %v347 = vld [vmem:[%s265 + $0x28] sm:$0xff]
        %v348 = vld [vmem:[%s265 + $0x30] sm:$0xff]
        %v349 = vld [vmem:[%s265 + $0x38] sm:$0xff]
        %v350 = vld [vmem:[%s265 + $0x40] sm:$0xff]
        %v351 = vld [vmem:[%s265 + $0x48] sm:$0xff]
        %v352 = vld [vmem:[%s265 + $0x50] sm:$0xff]
        %v353 = vld [vmem:[%s265 + $0x58] sm:$0xff]
        %v354 = vld [vmem:[%s265 + $0x60] sm:$0xff]
        %v355 = vld [vmem:[%s265 + $0x68] sm:$0xff]
        %v356 = vld [vmem:[%s265 + $0x70] sm:$0xff]
        %v357 = vld [vmem:[%s265 + $0x78] sm:$0xff]
        %v358 = vmul.f32 %v340, 0.0
        %v359 = vadd.f32 %v339, %v358
        %v360 = vmul.f32 %v340, 0.071428575
        %v361 = vadd.f32 %v339, %v360
        %v362 = vmul.f32 %v340, 0.14285715
        %v363 = vadd.f32 %v339, %v362
        %v364 = vpack.c.bf16 %v343, %v342
        %v365 = vpack.c.bf16 %v345, %v344
        %v366 = vpack.c.bf16 %v347, %v346
        %v367 = vpack.c.bf16 %v349, %v348
        %v368 = vpack.c.bf16 %v351, %v350
        %v369 = vpack.c.bf16 %v353, %v352
        %v370 = vpack.c.bf16 %v355, %v354
        %v371 = vpack.c.bf16 %v357, %v356
        %v373 = vperm.slane %v359, 0
        %v391 = vunpack.c.l.b16 %v307
        %v392 = vunpack.c.l.b16 %v308
        %v393 = vunpack.c.l.b16 %v309
        %v394 = vunpack.c.l.b16 %v310
        %v395 = vunpack.c.l.b16 %v311
        %v396 = vunpack.c.l.b16 %v312
        %v397 = vunpack.c.l.b16 %v313
        %v398 = vunpack.c.l.b16 %v314
        %v399 = vunpack.c.l.b16 %v315
        %v400 = vunpack.c.l.b16 %v316
        %v401 = vunpack.c.l.b16 %v317
        %v402 = vunpack.c.l.b16 %v318
        %v403 = vunpack.c.l.b16 %v319
        %v404 = vunpack.c.l.b16 %v320
        %v405 = vunpack.c.l.b16 %v321
        %v406 = vunpack.c.l.b16 %v322
        %v407 = vpack.c.b16 %v392, %v391
        %v408 = vpack.c.b16 %v394, %v393
        %v409 = vpack.c.b16 %v396, %v395
        %v410 = vpack.c.b16 %v398, %v397
        %v411 = vpack.c.b16 %v400, %v399
        %v412 = vpack.c.b16 %v402, %v401
        %v413 = vpack.c.b16 %v404, %v403
        %v414 = vpack.c.b16 %v406, %v405
        %423 = vmatpush.bf16.msra.mxu0 %v414
        %424 = vmatpush.bf16.msra.mxu0 %v413
        %425 = vmatpush.bf16.msra.mxu0 %v412
        %426 = vmatpush.bf16.msra.mxu0 %v411
        %427 = vmatpush.bf16.msra.mxu0 %v410
        %428 = vmatpush.bf16.msra.mxu0 %v409
        %429 = vmatpush.bf16.msra.mxu0 %v408
        %430 = vmatpush.bf16.msra.mxu0 %v407
        %431 = vmatmul.bf16.gmra.mxu0 %v364
        %v432 = vpop.f32.mrf.mxu0
        %v433 = vadd.f32 %v373, %v432
        %v434 = vpop.f32.mrf.mxu0
        %v435 = vadd.f32 %v373, %v434
        %436 = vmatmul.bf16.gmra.mxu0 %v365
        %v437 = vpop.f32.mrf.mxu0
        %v438 = vadd.f32 %v373, %v437
        %v439 = vpop.f32.mrf.mxu0
        %v440 = vadd.f32 %v373, %v439
        %441 = vmatmul.bf16.gmra.mxu0 %v366
        %v442 = vpop.f32.mrf.mxu0
        %v443 = vadd.f32 %v373, %v442
        %v444 = vpop.f32.mrf.mxu0
        %v445 = vadd.f32 %v373, %v444
        %446 = vmatmul.bf16.gmra.mxu0 %v367
        %v447 = vpop.f32.mrf.mxu0
        %v448 = vadd.f32 %v373, %v447
        %v449 = vpop.f32.mrf.mxu0
        %v450 = vadd.f32 %v373, %v449
        %451 = vmatmul.bf16.gmra.mxu0 %v368
        %v452 = vpop.f32.mrf.mxu0
        %v453 = vadd.f32 %v373, %v452
        %v454 = vpop.f32.mrf.mxu0
        %v455 = vadd.f32 %v373, %v454
        %456 = vmatmul.bf16.gmra.mxu0 %v369
        %v457 = vpop.f32.mrf.mxu0
        %v458 = vadd.f32 %v373, %v457
        %v459 = vpop.f32.mrf.mxu0
        %v460 = vadd.f32 %v373, %v459
        %461 = vmatmul.bf16.gmra.mxu0 %v370
        %v462 = vpop.f32.mrf.mxu0
        %v463 = vadd.f32 %v373, %v462
        %v464 = vpop.f32.mrf.mxu0
        %v465 = vadd.f32 %v373, %v464
        %466 = vmatmul.bf16.gmra.mxu0 %v371
        %v467 = vpop.f32.mrf.mxu0
        %v468 = vadd.f32 %v373, %v467
        %v469 = vpop.f32.mrf.mxu0
        %v470 = vadd.f32 %v373, %v469
        %471 = vdwg.mxu0
        %v472 = vtanh.pop %v433
        %v473 = vtanh.pop %v435
        %v474 = vtanh.pop %v438
        %v475 = vtanh.pop %v440
        %v476 = vtanh.pop %v443
        %v477 = vtanh.pop %v445
        %v478 = vtanh.pop %v448
        %v479 = vtanh.pop %v450
        %v480 = vtanh.pop %v453
        %v481 = vtanh.pop %v455
        %v482 = vtanh.pop %v458
        %v483 = vtanh.pop %v460
        %v484 = vtanh.pop %v463
        %v485 = vtanh.pop %v465
        %v486 = vtanh.pop %v468
        %v487 = vtanh.pop %v470
        %v488 = vpack.c.bf16 %v473, %v472
        %v489 = vpack.c.bf16 %v475, %v474
        %v490 = vpack.c.bf16 %v477, %v476
        %v491 = vpack.c.bf16 %v479, %v478
        %v492 = vpack.c.bf16 %v481, %v480
        %v493 = vpack.c.bf16 %v483, %v482
        %v494 = vpack.c.bf16 %v485, %v484
        %v495 = vpack.c.bf16 %v487, %v486
        %v497 = vperm.slane %v341, 0
        %v515 = vunpack.c.l.b16 %v323
        %v516 = vunpack.c.l.b16 %v324
        %v517 = vunpack.c.l.b16 %v325
        %v518 = vunpack.c.l.b16 %v326
        %v519 = vunpack.c.l.b16 %v327
        %v520 = vunpack.c.l.b16 %v328
        %v521 = vunpack.c.l.b16 %v329
        %v522 = vunpack.c.l.b16 %v330
        %v523 = vunpack.c.l.b16 %v331
        %v524 = vunpack.c.l.b16 %v332
        %v525 = vunpack.c.l.b16 %v333
        %v526 = vunpack.c.l.b16 %v334
        %v527 = vunpack.c.l.b16 %v335
        %v528 = vunpack.c.l.b16 %v336
        %v529 = vunpack.c.l.b16 %v337
        %v530 = vunpack.c.l.b16 %v338
        %v531 = vpack.c.b16 %v516, %v515
        %v532 = vpack.c.b16 %v518, %v517
        %v533 = vpack.c.b16 %v520, %v519
        %v534 = vpack.c.b16 %v522, %v521
        %v535 = vpack.c.b16 %v524, %v523
        %v536 = vpack.c.b16 %v526, %v525
        %v537 = vpack.c.b16 %v528, %v527
        %v538 = vpack.c.b16 %v530, %v529
        %547 = vmatpush.bf16.msra.mxu0 %v538
        %548 = vmatpush.bf16.msra.mxu0 %v537
        %549 = vmatpush.bf16.msra.mxu0 %v536
        %550 = vmatpush.bf16.msra.mxu0 %v535
        %551 = vmatpush.bf16.msra.mxu0 %v534
        %552 = vmatpush.bf16.msra.mxu0 %v533
        %553 = vmatpush.bf16.msra.mxu0 %v532
        %554 = vmatpush.bf16.msra.mxu0 %v531
        %555 = vmatmul.bf16.gmra.mxu0 %v488
        %v556 = vpop.f32.mrf.mxu0
        %v557 = vadd.f32 %v497, %v556
        %v558 = vpop.f32.mrf.mxu0
        %v559 = vadd.f32 %v497, %v558
        %560 = vmatmul.bf16.gmra.mxu0 %v489
        %v561 = vpop.f32.mrf.mxu0
        %v562 = vadd.f32 %v497, %v561
        %v563 = vpop.f32.mrf.mxu0
        %v564 = vadd.f32 %v497, %v563
        %565 = vmatmul.bf16.gmra.mxu0 %v490
        %v566 = vpop.f32.mrf.mxu0
        %v567 = vadd.f32 %v497, %v566
        %v568 = vpop.f32.mrf.mxu0
        %v569 = vadd.f32 %v497, %v568
        %570 = vmatmul.bf16.gmra.mxu0 %v491
        %v571 = vpop.f32.mrf.mxu0
        %v572 = vadd.f32 %v497, %v571
        %v573 = vpop.f32.mrf.mxu0
        %v574 = vadd.f32 %v497, %v573
        %575 = vmatmul.bf16.gmra.mxu0 %v492
        %v576 = vpop.f32.mrf.mxu0
        %v577 = vadd.f32 %v497, %v576
        %v578 = vpop.f32.mrf.mxu0
        %v579 = vadd.f32 %v497, %v578
        %580 = vmatmul.bf16.gmra.mxu0 %v493
        %v581 = vpop.f32.mrf.mxu0
        %v582 = vadd.f32 %v497, %v581
        %v583 = vpop.f32.mrf.mxu0
        %v584 = vadd.f32 %v497, %v583
        %585 = vmatmul.bf16.gmra.mxu0 %v494
        %v586 = vpop.f32.mrf.mxu0
        %v587 = vadd.f32 %v497, %v586
        %v588 = vpop.f32.mrf.mxu0
        %v589 = vadd.f32 %v497, %v588
        %590 = vmatmul.bf16.gmra.mxu0 %v495
        %v591 = vpop.f32.mrf.mxu0
        %v592 = vadd.f32 %v497, %v591
        %v593 = vpop.f32.mrf.mxu0
        %v594 = vadd.f32 %v497, %v593
        %595 = vdwg.mxu0
        %v596 = vmul.f32 %v557, 0.071428575
        %v597 = vmul.f32 %v559, 0.071428575
        %v598 = vmul.f32 %v562, 0.071428575
        %v599 = vmul.f32 %v564, 0.071428575
        %v600 = vmul.f32 %v567, 0.071428575
        %v601 = vmul.f32 %v569, 0.071428575
        %v602 = vmul.f32 %v572, 0.071428575
        %v603 = vmul.f32 %v574, 0.071428575
        %v604 = vmul.f32 %v577, 0.071428575
        %v605 = vmul.f32 %v579, 0.071428575
        %v606 = vmul.f32 %v582, 0.071428575
        %v607 = vmul.f32 %v584, 0.071428575
        %v608 = vmul.f32 %v587, 0.071428575
        %v609 = vmul.f32 %v589, 0.071428575
        %v610 = vmul.f32 %v592, 0.071428575
        %v611 = vmul.f32 %v594, 0.071428575
        %v612 = vadd.f32 %v342, %v596
        %v613 = vadd.f32 %v343, %v597
        %v614 = vadd.f32 %v344, %v598
        %v615 = vadd.f32 %v345, %v599
        %v616 = vadd.f32 %v346, %v600
        %v617 = vadd.f32 %v347, %v601
        %v618 = vadd.f32 %v348, %v602
        %v619 = vadd.f32 %v349, %v603
        %v620 = vadd.f32 %v350, %v604
        %v621 = vadd.f32 %v351, %v605
        %v622 = vadd.f32 %v352, %v606
        %v623 = vadd.f32 %v353, %v607
        %v624 = vadd.f32 %v354, %v608
        %v625 = vadd.f32 %v355, %v609
        %v626 = vadd.f32 %v356, %v610
        %v627 = vadd.f32 %v357, %v611
        %v628 = vpack.c.bf16 %v613, %v612
        %v629 = vpack.c.bf16 %v615, %v614
        %v630 = vpack.c.bf16 %v617, %v616
        %v631 = vpack.c.bf16 %v619, %v618
        %v632 = vpack.c.bf16 %v621, %v620
        %v633 = vpack.c.bf16 %v623, %v622
        %v634 = vpack.c.bf16 %v625, %v624
        %v635 = vpack.c.bf16 %v627, %v626
        %v637 = vperm.slane %v361, 0
        %639 = vmatpush.bf16.msra.mxu0 %v414
        %640 = vmatpush.bf16.msra.mxu0 %v413
        %641 = vmatpush.bf16.msra.mxu0 %v412
        %642 = vmatpush.bf16.msra.mxu0 %v411
        %643 = vmatpush.bf16.msra.mxu0 %v410
        %644 = vmatpush.bf16.msra.mxu0 %v409
        %645 = vmatpush.bf16.msra.mxu0 %v408
        %646 = vmatpush.bf16.msra.mxu0 %v407
        %647 = vmatmul.bf16.gmra.mxu0 %v628
        %v648 = vpop.f32.mrf.mxu0
        %v649 = vadd.f32 %v637, %v648
        %v650 = vpop.f32.mrf.mxu0
        %v651 = vadd.f32 %v637, %v650
        %652 = vmatmul.bf16.gmra.mxu0 %v629
        %v653 = vpop.f32.mrf.mxu0
        %v654 = vadd.f32 %v637, %v653
        %v655 = vpop.f32.mrf.mxu0
        %v656 = vadd.f32 %v637, %v655
        %657 = vmatmul.bf16.gmra.mxu0 %v630
        %v658 = vpop.f32.mrf.mxu0
        %v659 = vadd.f32 %v637, %v658
        %v660 = vpop.f32.mrf.mxu0
        %v661 = vadd.f32 %v637, %v660
        %662 = vmatmul.bf16.gmra.mxu0 %v631
        %v663 = vpop.f32.mrf.mxu0
        %v664 = vadd.f32 %v637, %v663
        %v665 = vpop.f32.mrf.mxu0
        %v666 = vadd.f32 %v637, %v665
        %667 = vmatmul.bf16.gmra.mxu0 %v632
        %v668 = vpop.f32.mrf.mxu0
        %v669 = vadd.f32 %v637, %v668
        %v670 = vpop.f32.mrf.mxu0
        %v671 = vadd.f32 %v637, %v670
        %672 = vmatmul.bf16.gmra.mxu0 %v633
        %v673 = vpop.f32.mrf.mxu0
        %v674 = vadd.f32 %v637, %v673
        %v675 = vpop.f32.mrf.mxu0
        %v676 = vadd.f32 %v637, %v675
        %677 = vmatmul.bf16.gmra.mxu0 %v634
        %v678 = vpop.f32.mrf.mxu0
        %v679 = vadd.f32 %v637, %v678
        %v680 = vpop.f32.mrf.mxu0
        %v681 = vadd.f32 %v637, %v680
        %682 = vmatmul.bf16.gmra.mxu0 %v635
        %v683 = vpop.f32.mrf.mxu0
        %v684 = vadd.f32 %v637, %v683
        %v685 = vpop.f32.mrf.mxu0
        %v686 = vadd.f32 %v637, %v685
        %687 = vdwg.mxu0
        %v688 = vtanh.pop %v649
        %v689 = vtanh.pop %v651
        %v690 = vtanh.pop %v654
        %v691 = vtanh.pop %v656
        %v692 = vtanh.pop %v659
        %v693 = vtanh.pop %v661
        %v694 = vtanh.pop %v664
        %v695 = vtanh.pop %v666
        %v696 = vtanh.pop %v669
        %v697 = vtanh.pop %v671
        %v698 = vtanh.pop %v674
        %v699 = vtanh.pop %v676
        %v700 = vtanh.pop %v679
        %v701 = vtanh.pop %v681
        %v702 = vtanh.pop %v684
        %v703 = vtanh.pop %v686
        %v704 = vpack.c.bf16 %v689, %v688
        %v705 = vpack.c.bf16 %v691, %v690
        %v706 = vpack.c.bf16 %v693, %v692
        %v707 = vpack.c.bf16 %v695, %v694
        %v708 = vpack.c.bf16 %v697, %v696
        %v709 = vpack.c.bf16 %v699, %v698
        %v710 = vpack.c.bf16 %v701, %v700
        %v711 = vpack.c.bf16 %v703, %v702
        %712 = vmatpush.bf16.msra.mxu0 %v538
        %713 = vmatpush.bf16.msra.mxu0 %v537
        %714 = vmatpush.bf16.msra.mxu0 %v536
        %715 = vmatpush.bf16.msra.mxu0 %v535
        %716 = vmatpush.bf16.msra.mxu0 %v534
        %717 = vmatpush.bf16.msra.mxu0 %v533
        %718 = vmatpush.bf16.msra.mxu0 %v532
        %719 = vmatpush.bf16.msra.mxu0 %v531
        %720 = vmatmul.bf16.gmra.mxu0 %v704
        %v721 = vpop.f32.mrf.mxu0
        %v722 = vadd.f32 %v497, %v721
        %v723 = vpop.f32.mrf.mxu0
        %v724 = vadd.f32 %v497, %v723
        %725 = vmatmul.bf16.gmra.mxu0 %v705
        %v726 = vpop.f32.mrf.mxu0
        %v727 = vadd.f32 %v497, %v726
        %v728 = vpop.f32.mrf.mxu0
        %v729 = vadd.f32 %v497, %v728
        %730 = vmatmul.bf16.gmra.mxu0 %v706
        %v731 = vpop.f32.mrf.mxu0
        %v732 = vadd.f32 %v497, %v731
        %v733 = vpop.f32.mrf.mxu0
        %v734 = vadd.f32 %v497, %v733
        %735 = vmatmul.bf16.gmra.mxu0 %v707
        %v736 = vpop.f32.mrf.mxu0
        %v737 = vadd.f32 %v497, %v736
        %v738 = vpop.f32.mrf.mxu0
        %v739 = vadd.f32 %v497, %v738
        %740 = vmatmul.bf16.gmra.mxu0 %v708
        %v741 = vpop.f32.mrf.mxu0
        %v742 = vadd.f32 %v497, %v741
        %v743 = vpop.f32.mrf.mxu0
        %v744 = vadd.f32 %v497, %v743
        %745 = vmatmul.bf16.gmra.mxu0 %v709
        %v746 = vpop.f32.mrf.mxu0
        %v747 = vadd.f32 %v497, %v746
        %v748 = vpop.f32.mrf.mxu0
        %v749 = vadd.f32 %v497, %v748
        %750 = vmatmul.bf16.gmra.mxu0 %v710
        %v751 = vpop.f32.mrf.mxu0
        %v752 = vadd.f32 %v497, %v751
        %v753 = vpop.f32.mrf.mxu0
        %v754 = vadd.f32 %v497, %v753
        %755 = vmatmul.bf16.gmra.mxu0 %v711
        %v756 = vpop.f32.mrf.mxu0
        %v757 = vadd.f32 %v497, %v756
        %v758 = vpop.f32.mrf.mxu0
        %v759 = vadd.f32 %v497, %v758
        %760 = vdwg.mxu0
        %v761 = vmul.f32 %v722, 2.0
        %v762 = vmul.f32 %v724, 2.0
        %v763 = vmul.f32 %v727, 2.0
        %v764 = vmul.f32 %v729, 2.0
        %v765 = vmul.f32 %v732, 2.0
        %v766 = vmul.f32 %v734, 2.0
        %v767 = vmul.f32 %v737, 2.0
        %v768 = vmul.f32 %v739, 2.0
        %v769 = vmul.f32 %v742, 2.0
        %v770 = vmul.f32 %v744, 2.0
        %v771 = vmul.f32 %v747, 2.0
        %v772 = vmul.f32 %v749, 2.0
        %v773 = vmul.f32 %v752, 2.0
        %v774 = vmul.f32 %v754, 2.0
        %v775 = vmul.f32 %v757, 2.0
        %v776 = vmul.f32 %v759, 2.0
        %v777 = vadd.f32 %v557, %v761
        %v778 = vadd.f32 %v559, %v762
        %v779 = vadd.f32 %v562, %v763
        %v780 = vadd.f32 %v564, %v764
        %v781 = vadd.f32 %v567, %v765
        %v782 = vadd.f32 %v569, %v766
        %v783 = vadd.f32 %v572, %v767
        %v784 = vadd.f32 %v574, %v768
        %v785 = vadd.f32 %v577, %v769
        %v786 = vadd.f32 %v579, %v770
        %v787 = vadd.f32 %v582, %v771
        %v788 = vadd.f32 %v584, %v772
        %v789 = vadd.f32 %v587, %v773
        %v790 = vadd.f32 %v589, %v774
        %v791 = vadd.f32 %v592, %v775
        %v792 = vadd.f32 %v594, %v776
        %v793 = vmul.f32 %v722, 0.071428575
        %v794 = vmul.f32 %v724, 0.071428575
        %v795 = vmul.f32 %v727, 0.071428575
        %v796 = vmul.f32 %v729, 0.071428575
        %v797 = vmul.f32 %v732, 0.071428575
        %v798 = vmul.f32 %v734, 0.071428575
        %v799 = vmul.f32 %v737, 0.071428575
        %v800 = vmul.f32 %v739, 0.071428575
        %v801 = vmul.f32 %v742, 0.071428575
        %v802 = vmul.f32 %v744, 0.071428575
        %v803 = vmul.f32 %v747, 0.071428575
        %v804 = vmul.f32 %v749, 0.071428575
        %v805 = vmul.f32 %v752, 0.071428575
        %v806 = vmul.f32 %v754, 0.071428575
        %v807 = vmul.f32 %v757, 0.071428575
        %v808 = vmul.f32 %v759, 0.071428575
        %v809 = vadd.f32 %v342, %v793
        %v810 = vadd.f32 %v343, %v794
        %v811 = vadd.f32 %v344, %v795
        %v812 = vadd.f32 %v345, %v796
        %v813 = vadd.f32 %v346, %v797
        %v814 = vadd.f32 %v347, %v798
        %v815 = vadd.f32 %v348, %v799
        %v816 = vadd.f32 %v349, %v800
        %v817 = vadd.f32 %v350, %v801
        %v818 = vadd.f32 %v351, %v802
        %v819 = vadd.f32 %v352, %v803
        %v820 = vadd.f32 %v353, %v804
        %v821 = vadd.f32 %v354, %v805
        %v822 = vadd.f32 %v355, %v806
        %v823 = vadd.f32 %v356, %v807
        %v824 = vadd.f32 %v357, %v808
        %v825 = vpack.c.bf16 %v810, %v809
        %v826 = vpack.c.bf16 %v812, %v811
        %v827 = vpack.c.bf16 %v814, %v813
        %v828 = vpack.c.bf16 %v816, %v815
        %v829 = vpack.c.bf16 %v818, %v817
        %v830 = vpack.c.bf16 %v820, %v819
        %v831 = vpack.c.bf16 %v822, %v821
        %v832 = vpack.c.bf16 %v824, %v823
        %833 = vmatpush.bf16.msra.mxu0 %v414
        %834 = vmatpush.bf16.msra.mxu0 %v413
        %835 = vmatpush.bf16.msra.mxu0 %v412
        %836 = vmatpush.bf16.msra.mxu0 %v411
        %837 = vmatpush.bf16.msra.mxu0 %v410
        %838 = vmatpush.bf16.msra.mxu0 %v409
        %839 = vmatpush.bf16.msra.mxu0 %v408
        %840 = vmatpush.bf16.msra.mxu0 %v407
        %841 = vmatmul.bf16.gmra.mxu0 %v825
        %v842 = vpop.f32.mrf.mxu0
        %v843 = vadd.f32 %v637, %v842
        %v844 = vpop.f32.mrf.mxu0
        %v845 = vadd.f32 %v637, %v844
        %846 = vmatmul.bf16.gmra.mxu0 %v826
        %v847 = vpop.f32.mrf.mxu0
        %v848 = vadd.f32 %v637, %v847
        %v849 = vpop.f32.mrf.mxu0
        %v850 = vadd.f32 %v637, %v849
        %851 = vmatmul.bf16.gmra.mxu0 %v827
        %v852 = vpop.f32.mrf.mxu0
        %v853 = vadd.f32 %v637, %v852
        %v854 = vpop.f32.mrf.mxu0
        %v855 = vadd.f32 %v637, %v854
        %856 = vmatmul.bf16.gmra.mxu0 %v828
        %v857 = vpop.f32.mrf.mxu0
        %v858 = vadd.f32 %v637, %v857
        %v859 = vpop.f32.mrf.mxu0
        %v860 = vadd.f32 %v637, %v859
        %861 = vmatmul.bf16.gmra.mxu0 %v829
        %v862 = vpop.f32.mrf.mxu0
        %v863 = vadd.f32 %v637, %v862
        %v864 = vpop.f32.mrf.mxu0
        %v865 = vadd.f32 %v637, %v864
        %866 = vmatmul.bf16.gmra.mxu0 %v830
        %v867 = vpop.f32.mrf.mxu0
        %v868 = vadd.f32 %v637, %v867
        %v869 = vpop.f32.mrf.mxu0
        %v870 = vadd.f32 %v637, %v869
        %871 = vmatmul.bf16.gmra.mxu0 %v831
        %v872 = vpop.f32.mrf.mxu0
        %v873 = vadd.f32 %v637, %v872
        %v874 = vpop.f32.mrf.mxu0
        %v875 = vadd.f32 %v637, %v874
        %876 = vmatmul.bf16.gmra.mxu0 %v832
        %v877 = vpop.f32.mrf.mxu0
        %v878 = vadd.f32 %v637, %v877
        %v879 = vpop.f32.mrf.mxu0
        %v880 = vadd.f32 %v637, %v879
        %881 = vdwg.mxu0
        %v882 = vtanh.pop %v843
        %v883 = vtanh.pop %v845
        %v884 = vtanh.pop %v848
        %v885 = vtanh.pop %v850
        %v886 = vtanh.pop %v853
        %v887 = vtanh.pop %v855
        %v888 = vtanh.pop %v858
        %v889 = vtanh.pop %v860
        %v890 = vtanh.pop %v863
        %v891 = vtanh.pop %v865
        %v892 = vtanh.pop %v868
        %v893 = vtanh.pop %v870
        %v894 = vtanh.pop %v873
        %v895 = vtanh.pop %v875
        %v896 = vtanh.pop %v878
        %v897 = vtanh.pop %v880
        %v898 = vpack.c.bf16 %v883, %v882
        %v899 = vpack.c.bf16 %v885, %v884
        %v900 = vpack.c.bf16 %v887, %v886
        %v901 = vpack.c.bf16 %v889, %v888
        %v902 = vpack.c.bf16 %v891, %v890
        %v903 = vpack.c.bf16 %v893, %v892
        %v904 = vpack.c.bf16 %v895, %v894
        %v905 = vpack.c.bf16 %v897, %v896
        %906 = vmatpush.bf16.msra.mxu0 %v538
        %907 = vmatpush.bf16.msra.mxu0 %v537
        %908 = vmatpush.bf16.msra.mxu0 %v536
        %909 = vmatpush.bf16.msra.mxu0 %v535
        %910 = vmatpush.bf16.msra.mxu0 %v534
        %911 = vmatpush.bf16.msra.mxu0 %v533
        %912 = vmatpush.bf16.msra.mxu0 %v532
        %913 = vmatpush.bf16.msra.mxu0 %v531
        %914 = vmatmul.bf16.gmra.mxu0 %v898
        %v915 = vpop.f32.mrf.mxu0
        %v916 = vadd.f32 %v497, %v915
        %v917 = vpop.f32.mrf.mxu0
        %v918 = vadd.f32 %v497, %v917
        %919 = vmatmul.bf16.gmra.mxu0 %v899
        %v920 = vpop.f32.mrf.mxu0
        %v921 = vadd.f32 %v497, %v920
        %v922 = vpop.f32.mrf.mxu0
        %v923 = vadd.f32 %v497, %v922
        %924 = vmatmul.bf16.gmra.mxu0 %v900
        %v925 = vpop.f32.mrf.mxu0
        %v926 = vadd.f32 %v497, %v925
        %v927 = vpop.f32.mrf.mxu0
        %v928 = vadd.f32 %v497, %v927
        %929 = vmatmul.bf16.gmra.mxu0 %v901
        %v930 = vpop.f32.mrf.mxu0
        %v931 = vadd.f32 %v497, %v930
        %v932 = vpop.f32.mrf.mxu0
        %v933 = vadd.f32 %v497, %v932
        %934 = vmatmul.bf16.gmra.mxu0 %v902
        %v935 = vpop.f32.mrf.mxu0
        %v936 = vadd.f32 %v497, %v935
        %v937 = vpop.f32.mrf.mxu0
        %v938 = vadd.f32 %v497, %v937
        %939 = vmatmul.bf16.gmra.mxu0 %v903
        %v940 = vpop.f32.mrf.mxu0
        %v941 = vadd.f32 %v497, %v940
        %v942 = vpop.f32.mrf.mxu0
        %v943 = vadd.f32 %v497, %v942
        %944 = vmatmul.bf16.gmra.mxu0 %v904
        %v945 = vpop.f32.mrf.mxu0
        %v946 = vadd.f32 %v497, %v945
        %v947 = vpop.f32.mrf.mxu0
        %v948 = vadd.f32 %v497, %v947
        %949 = vmatmul.bf16.gmra.mxu0 %v905
        %v950 = vpop.f32.mrf.mxu0
        %v951 = vadd.f32 %v497, %v950
        %v952 = vpop.f32.mrf.mxu0
        %v953 = vadd.f32 %v497, %v952
        %954 = vdwg.mxu0
        %v955 = vmul.f32 %v916, 2.0
        %v956 = vmul.f32 %v918, 2.0
        %v957 = vmul.f32 %v921, 2.0
        %v958 = vmul.f32 %v923, 2.0
        %v959 = vmul.f32 %v926, 2.0
        %v960 = vmul.f32 %v928, 2.0
        %v961 = vmul.f32 %v931, 2.0
        %v962 = vmul.f32 %v933, 2.0
        %v963 = vmul.f32 %v936, 2.0
        %v964 = vmul.f32 %v938, 2.0
        %v965 = vmul.f32 %v941, 2.0
        %v966 = vmul.f32 %v943, 2.0
        %v967 = vmul.f32 %v946, 2.0
        %v968 = vmul.f32 %v948, 2.0
        %v969 = vmul.f32 %v951, 2.0
        %v970 = vmul.f32 %v953, 2.0
        %v971 = vadd.f32 %v777, %v955
        %v972 = vadd.f32 %v778, %v956
        %v973 = vadd.f32 %v779, %v957
        %v974 = vadd.f32 %v780, %v958
        %v975 = vadd.f32 %v781, %v959
        %v976 = vadd.f32 %v782, %v960
        %v977 = vadd.f32 %v783, %v961
        %v978 = vadd.f32 %v784, %v962
        %v979 = vadd.f32 %v785, %v963
        %v980 = vadd.f32 %v786, %v964
        %v981 = vadd.f32 %v787, %v965
        %v982 = vadd.f32 %v788, %v966
        %v983 = vadd.f32 %v789, %v967
        %v984 = vadd.f32 %v790, %v968
        %v985 = vadd.f32 %v791, %v969
        %v986 = vadd.f32 %v792, %v970
        %v987 = vmul.f32 %v916, 0.14285715
        %v988 = vmul.f32 %v918, 0.14285715
        %v989 = vmul.f32 %v921, 0.14285715
        %v990 = vmul.f32 %v923, 0.14285715
        %v991 = vmul.f32 %v926, 0.14285715
        %v992 = vmul.f32 %v928, 0.14285715
        %v993 = vmul.f32 %v931, 0.14285715
        %v994 = vmul.f32 %v933, 0.14285715
        %v995 = vmul.f32 %v936, 0.14285715
        %v996 = vmul.f32 %v938, 0.14285715
        %v997 = vmul.f32 %v941, 0.14285715
        %v998 = vmul.f32 %v943, 0.14285715
        %v999 = vmul.f32 %v946, 0.14285715
        %v1000 = vmul.f32 %v948, 0.14285715
        %v1001 = vmul.f32 %v951, 0.14285715
        %v1002 = vmul.f32 %v953, 0.14285715
        %v1003 = vadd.f32 %v342, %v987
        %v1004 = vadd.f32 %v343, %v988
        %v1005 = vadd.f32 %v344, %v989
        %v1006 = vadd.f32 %v345, %v990
        %v1007 = vadd.f32 %v346, %v991
        %v1008 = vadd.f32 %v347, %v992
        %v1009 = vadd.f32 %v348, %v993
        %v1010 = vadd.f32 %v349, %v994
        %v1011 = vadd.f32 %v350, %v995
        %v1012 = vadd.f32 %v351, %v996
        %v1013 = vadd.f32 %v352, %v997
        %v1014 = vadd.f32 %v353, %v998
        %v1015 = vadd.f32 %v354, %v999
        %v1016 = vadd.f32 %v355, %v1000
        %v1017 = vadd.f32 %v356, %v1001
        %v1018 = vadd.f32 %v357, %v1002
        %v1019 = vpack.c.bf16 %v1004, %v1003
        %v1020 = vpack.c.bf16 %v1006, %v1005
        %v1021 = vpack.c.bf16 %v1008, %v1007
        %v1022 = vpack.c.bf16 %v1010, %v1009
        %v1023 = vpack.c.bf16 %v1012, %v1011
        %v1024 = vpack.c.bf16 %v1014, %v1013
        %v1025 = vpack.c.bf16 %v1016, %v1015
        %v1026 = vpack.c.bf16 %v1018, %v1017
        %v1028 = vperm.slane %v363, 0
        %1030 = vmatpush.bf16.msra.mxu0 %v414
        %1031 = vmatpush.bf16.msra.mxu0 %v413
        %1032 = vmatpush.bf16.msra.mxu0 %v412
        %1033 = vmatpush.bf16.msra.mxu0 %v411
        %1034 = vmatpush.bf16.msra.mxu0 %v410
        %1035 = vmatpush.bf16.msra.mxu0 %v409
        %1036 = vmatpush.bf16.msra.mxu0 %v408
        %1037 = vmatpush.bf16.msra.mxu0 %v407
        %1038 = vmatmul.bf16.gmra.mxu0 %v1019
        %v1039 = vpop.f32.mrf.mxu0
        %v1040 = vadd.f32 %v1028, %v1039
        %v1041 = vpop.f32.mrf.mxu0
        %v1042 = vadd.f32 %v1028, %v1041
        %1043 = vmatmul.bf16.gmra.mxu0 %v1020
        %v1044 = vpop.f32.mrf.mxu0
        %v1045 = vadd.f32 %v1028, %v1044
        %v1046 = vpop.f32.mrf.mxu0
        %v1047 = vadd.f32 %v1028, %v1046
        %1048 = vmatmul.bf16.gmra.mxu0 %v1021
        %v1049 = vpop.f32.mrf.mxu0
        %v1050 = vadd.f32 %v1028, %v1049
        %v1051 = vpop.f32.mrf.mxu0
        %v1052 = vadd.f32 %v1028, %v1051
        %1053 = vmatmul.bf16.gmra.mxu0 %v1022
        %v1054 = vpop.f32.mrf.mxu0
        %v1055 = vadd.f32 %v1028, %v1054
        %v1056 = vpop.f32.mrf.mxu0
        %v1057 = vadd.f32 %v1028, %v1056
        %1058 = vmatmul.bf16.gmra.mxu0 %v1023
        %v1059 = vpop.f32.mrf.mxu0
        %v1060 = vadd.f32 %v1028, %v1059
        %v1061 = vpop.f32.mrf.mxu0
        %v1062 = vadd.f32 %v1028, %v1061
        %1063 = vmatmul.bf16.gmra.mxu0 %v1024
        %v1064 = vpop.f32.mrf.mxu0
        %v1065 = vadd.f32 %v1028, %v1064
        %v1066 = vpop.f32.mrf.mxu0
        %v1067 = vadd.f32 %v1028, %v1066
        %1068 = vmatmul.bf16.gmra.mxu0 %v1025
        %v1069 = vpop.f32.mrf.mxu0
        %v1070 = vadd.f32 %v1028, %v1069
        %v1071 = vpop.f32.mrf.mxu0
        %v1072 = vadd.f32 %v1028, %v1071
        %1073 = vmatmul.bf16.gmra.mxu0 %v1026
        %v1074 = vpop.f32.mrf.mxu0
        %v1075 = vadd.f32 %v1028, %v1074
        %v1076 = vpop.f32.mrf.mxu0
        %v1077 = vadd.f32 %v1028, %v1076
        %1078 = vdwg.mxu0
        %v1079 = vtanh.pop %v1040
        %v1080 = vtanh.pop %v1042
        %v1081 = vtanh.pop %v1045
        %v1082 = vtanh.pop %v1047
        %v1083 = vtanh.pop %v1050
        %v1084 = vtanh.pop %v1052
        %v1085 = vtanh.pop %v1055
        %v1086 = vtanh.pop %v1057
        %v1087 = vtanh.pop %v1060
        %v1088 = vtanh.pop %v1062
        %v1089 = vtanh.pop %v1065
        %v1090 = vtanh.pop %v1067
        %v1091 = vtanh.pop %v1070
        %v1092 = vtanh.pop %v1072
        %v1093 = vtanh.pop %v1075
        %v1094 = vtanh.pop %v1077
        %v1095 = vpack.c.bf16 %v1080, %v1079
        %v1096 = vpack.c.bf16 %v1082, %v1081
        %v1097 = vpack.c.bf16 %v1084, %v1083
        %v1098 = vpack.c.bf16 %v1086, %v1085
        %v1099 = vpack.c.bf16 %v1088, %v1087
        %v1100 = vpack.c.bf16 %v1090, %v1089
        %v1101 = vpack.c.bf16 %v1092, %v1091
        %v1102 = vpack.c.bf16 %v1094, %v1093
        %1103 = vmatpush.bf16.msra.mxu0 %v538
        %1104 = vmatpush.bf16.msra.mxu0 %v537
        %1105 = vmatpush.bf16.msra.mxu0 %v536
        %1106 = vmatpush.bf16.msra.mxu0 %v535
        %1107 = vmatpush.bf16.msra.mxu0 %v534
        %1108 = vmatpush.bf16.msra.mxu0 %v533
        %1109 = vmatpush.bf16.msra.mxu0 %v532
        %1110 = vmatpush.bf16.msra.mxu0 %v531
        %1111 = vmatmul.bf16.gmra.mxu0 %v1095
        %v1112 = vpop.f32.mrf.mxu0
        %v1113 = vadd.f32 %v497, %v1112
        %v1114 = vpop.f32.mrf.mxu0
        %v1115 = vadd.f32 %v497, %v1114
        %1116 = vmatmul.bf16.gmra.mxu0 %v1096
        %v1117 = vpop.f32.mrf.mxu0
        %v1118 = vadd.f32 %v497, %v1117
        %v1119 = vpop.f32.mrf.mxu0
        %v1120 = vadd.f32 %v497, %v1119
        %1121 = vmatmul.bf16.gmra.mxu0 %v1097
        %v1122 = vpop.f32.mrf.mxu0
        %v1123 = vadd.f32 %v497, %v1122
        %v1124 = vpop.f32.mrf.mxu0
        %v1125 = vadd.f32 %v497, %v1124
        %1126 = vmatmul.bf16.gmra.mxu0 %v1098
        %v1127 = vpop.f32.mrf.mxu0
        %v1128 = vadd.f32 %v497, %v1127
        %v1129 = vpop.f32.mrf.mxu0
        %v1130 = vadd.f32 %v497, %v1129
        %1131 = vmatmul.bf16.gmra.mxu0 %v1099
        %v1132 = vpop.f32.mrf.mxu0
        %v1133 = vadd.f32 %v497, %v1132
        %v1134 = vpop.f32.mrf.mxu0
        %v1135 = vadd.f32 %v497, %v1134
        %1136 = vmatmul.bf16.gmra.mxu0 %v1100
        %v1137 = vpop.f32.mrf.mxu0
        %v1138 = vadd.f32 %v497, %v1137
        %v1139 = vpop.f32.mrf.mxu0
        %v1140 = vadd.f32 %v497, %v1139
        %1141 = vmatmul.bf16.gmra.mxu0 %v1101
        %v1142 = vpop.f32.mrf.mxu0
        %v1143 = vadd.f32 %v497, %v1142
        %v1144 = vpop.f32.mrf.mxu0
        %v1145 = vadd.f32 %v497, %v1144
        %1146 = vmatmul.bf16.gmra.mxu0 %v1102
        %v1147 = vpop.f32.mrf.mxu0
        %v1148 = vadd.f32 %v497, %v1147
        %v1149 = vpop.f32.mrf.mxu0
        %v1150 = vadd.f32 %v497, %v1149
        %1151 = vdwg.mxu0
        %v1152 = vadd.f32 %v971, %v1113
        %v1153 = vadd.f32 %v972, %v1115
        %v1154 = vadd.f32 %v973, %v1118
        %v1155 = vadd.f32 %v974, %v1120
        %v1156 = vadd.f32 %v975, %v1123
        %v1157 = vadd.f32 %v976, %v1125
        %v1158 = vadd.f32 %v977, %v1128
        %v1159 = vadd.f32 %v978, %v1130
        %v1160 = vadd.f32 %v979, %v1133
        %v1161 = vadd.f32 %v980, %v1135
        %v1162 = vadd.f32 %v981, %v1138
        %v1163 = vadd.f32 %v982, %v1140
        %v1164 = vadd.f32 %v983, %v1143
        %v1165 = vadd.f32 %v984, %v1145
        %v1166 = vadd.f32 %v985, %v1148
        %v1167 = vadd.f32 %v986, %v1150
        %v1168 = vmul.f32 %v1152, 0.023809524
        %v1169 = vmul.f32 %v1153, 0.023809524
        %v1170 = vmul.f32 %v1154, 0.023809524
        %v1171 = vmul.f32 %v1155, 0.023809524
        %v1172 = vmul.f32 %v1156, 0.023809524
        %v1173 = vmul.f32 %v1157, 0.023809524
        %v1174 = vmul.f32 %v1158, 0.023809524
        %v1175 = vmul.f32 %v1159, 0.023809524
        %v1176 = vmul.f32 %v1160, 0.023809524
        %v1177 = vmul.f32 %v1161, 0.023809524
        %v1178 = vmul.f32 %v1162, 0.023809524
        %v1179 = vmul.f32 %v1163, 0.023809524
        %v1180 = vmul.f32 %v1164, 0.023809524
        %v1181 = vmul.f32 %v1165, 0.023809524
        %v1182 = vmul.f32 %v1166, 0.023809524
        %v1183 = vmul.f32 %v1167, 0.023809524
        %v1184 = vadd.f32 %v342, %v1168
        %v1185 = vadd.f32 %v343, %v1169
        %v1186 = vadd.f32 %v344, %v1170
        %v1187 = vadd.f32 %v345, %v1171
        %v1188 = vadd.f32 %v346, %v1172
        %v1189 = vadd.f32 %v347, %v1173
        %v1190 = vadd.f32 %v348, %v1174
        %v1191 = vadd.f32 %v349, %v1175
        %v1192 = vadd.f32 %v350, %v1176
        %v1193 = vadd.f32 %v351, %v1177
        %v1194 = vadd.f32 %v352, %v1178
        %v1195 = vadd.f32 %v353, %v1179
        %v1196 = vadd.f32 %v354, %v1180
        %v1197 = vadd.f32 %v355, %v1181
        %v1198 = vadd.f32 %v356, %v1182
        %v1199 = vadd.f32 %v357, %v1183
        %v1200 = vmul.f32 %v340, 0.21428573
        %v1201 = vadd.f32 %v339, %v1200
        %v1202 = vmul.f32 %v340, 0.2857143
        %v1203 = vadd.f32 %v339, %v1202
        %v1204 = vpack.c.bf16 %v1185, %v1184
        %v1205 = vpack.c.bf16 %v1187, %v1186
        %v1206 = vpack.c.bf16 %v1189, %v1188
        %v1207 = vpack.c.bf16 %v1191, %v1190
        %v1208 = vpack.c.bf16 %v1193, %v1192
        %v1209 = vpack.c.bf16 %v1195, %v1194
        %v1210 = vpack.c.bf16 %v1197, %v1196
        %v1211 = vpack.c.bf16 %v1199, %v1198
        %1212 = vmatpush.bf16.msra.mxu0 %v414
        %1213 = vmatpush.bf16.msra.mxu0 %v413
        %1214 = vmatpush.bf16.msra.mxu0 %v412
        %1215 = vmatpush.bf16.msra.mxu0 %v411
        %1216 = vmatpush.bf16.msra.mxu0 %v410
        %1217 = vmatpush.bf16.msra.mxu0 %v409
        %1218 = vmatpush.bf16.msra.mxu0 %v408
        %1219 = vmatpush.bf16.msra.mxu0 %v407
        %1220 = vmatmul.bf16.gmra.mxu0 %v1204
        %v1221 = vpop.f32.mrf.mxu0
        %v1222 = vadd.f32 %v1028, %v1221
        %v1223 = vpop.f32.mrf.mxu0
        %v1224 = vadd.f32 %v1028, %v1223
        %1225 = vmatmul.bf16.gmra.mxu0 %v1205
        %v1226 = vpop.f32.mrf.mxu0
        %v1227 = vadd.f32 %v1028, %v1226
        %v1228 = vpop.f32.mrf.mxu0
        %v1229 = vadd.f32 %v1028, %v1228
        %1230 = vmatmul.bf16.gmra.mxu0 %v1206
        %v1231 = vpop.f32.mrf.mxu0
        %v1232 = vadd.f32 %v1028, %v1231
        %v1233 = vpop.f32.mrf.mxu0
        %v1234 = vadd.f32 %v1028, %v1233
        %1235 = vmatmul.bf16.gmra.mxu0 %v1207
        %v1236 = vpop.f32.mrf.mxu0
        %v1237 = vadd.f32 %v1028, %v1236
        %v1238 = vpop.f32.mrf.mxu0
        %v1239 = vadd.f32 %v1028, %v1238
        %1240 = vmatmul.bf16.gmra.mxu0 %v1208
        %v1241 = vpop.f32.mrf.mxu0
        %v1242 = vadd.f32 %v1028, %v1241
        %v1243 = vpop.f32.mrf.mxu0
        %v1244 = vadd.f32 %v1028, %v1243
        %1245 = vmatmul.bf16.gmra.mxu0 %v1209
        %v1246 = vpop.f32.mrf.mxu0
        %v1247 = vadd.f32 %v1028, %v1246
        %v1248 = vpop.f32.mrf.mxu0
        %v1249 = vadd.f32 %v1028, %v1248
        %1250 = vmatmul.bf16.gmra.mxu0 %v1210
        %v1251 = vpop.f32.mrf.mxu0
        %v1252 = vadd.f32 %v1028, %v1251
        %v1253 = vpop.f32.mrf.mxu0
        %v1254 = vadd.f32 %v1028, %v1253
        %1255 = vmatmul.bf16.gmra.mxu0 %v1211
        %v1256 = vpop.f32.mrf.mxu0
        %v1257 = vadd.f32 %v1028, %v1256
        %v1258 = vpop.f32.mrf.mxu0
        %v1259 = vadd.f32 %v1028, %v1258
        %1260 = vdwg.mxu0
        %v1261 = vtanh.pop %v1222
        %v1262 = vtanh.pop %v1224
        %v1263 = vtanh.pop %v1227
        %v1264 = vtanh.pop %v1229
        %v1265 = vtanh.pop %v1232
        %v1266 = vtanh.pop %v1234
        %v1267 = vtanh.pop %v1237
        %v1268 = vtanh.pop %v1239
        %v1269 = vtanh.pop %v1242
        %v1270 = vtanh.pop %v1244
        %v1271 = vtanh.pop %v1247
        %v1272 = vtanh.pop %v1249
        %v1273 = vtanh.pop %v1252
        %v1274 = vtanh.pop %v1254
        %v1275 = vtanh.pop %v1257
        %v1276 = vtanh.pop %v1259
        %v1277 = vpack.c.bf16 %v1262, %v1261
        %v1278 = vpack.c.bf16 %v1264, %v1263
        %v1279 = vpack.c.bf16 %v1266, %v1265
        %v1280 = vpack.c.bf16 %v1268, %v1267
        %v1281 = vpack.c.bf16 %v1270, %v1269
        %v1282 = vpack.c.bf16 %v1272, %v1271
        %v1283 = vpack.c.bf16 %v1274, %v1273
        %v1284 = vpack.c.bf16 %v1276, %v1275
        %1285 = vmatpush.bf16.msra.mxu0 %v538
        %1286 = vmatpush.bf16.msra.mxu0 %v537
        %1287 = vmatpush.bf16.msra.mxu0 %v536
        %1288 = vmatpush.bf16.msra.mxu0 %v535
        %1289 = vmatpush.bf16.msra.mxu0 %v534
        %1290 = vmatpush.bf16.msra.mxu0 %v533
        %1291 = vmatpush.bf16.msra.mxu0 %v532
        %1292 = vmatpush.bf16.msra.mxu0 %v531
        %1293 = vmatmul.bf16.gmra.mxu0 %v1277
        %v1294 = vpop.f32.mrf.mxu0
        %v1295 = vadd.f32 %v497, %v1294
        %v1296 = vpop.f32.mrf.mxu0
        %v1297 = vadd.f32 %v497, %v1296
        %1298 = vmatmul.bf16.gmra.mxu0 %v1278
        %v1299 = vpop.f32.mrf.mxu0
        %v1300 = vadd.f32 %v497, %v1299
        %v1301 = vpop.f32.mrf.mxu0
        %v1302 = vadd.f32 %v497, %v1301
        %1303 = vmatmul.bf16.gmra.mxu0 %v1279
        %v1304 = vpop.f32.mrf.mxu0
        %v1305 = vadd.f32 %v497, %v1304
        %v1306 = vpop.f32.mrf.mxu0
        %v1307 = vadd.f32 %v497, %v1306
        %1308 = vmatmul.bf16.gmra.mxu0 %v1280
        %v1309 = vpop.f32.mrf.mxu0
        %v1310 = vadd.f32 %v497, %v1309
        %v1311 = vpop.f32.mrf.mxu0
        %v1312 = vadd.f32 %v497, %v1311
        %1313 = vmatmul.bf16.gmra.mxu0 %v1281
        %v1314 = vpop.f32.mrf.mxu0
        %v1315 = vadd.f32 %v497, %v1314
        %v1316 = vpop.f32.mrf.mxu0
        %v1317 = vadd.f32 %v497, %v1316
        %1318 = vmatmul.bf16.gmra.mxu0 %v1282
        %v1319 = vpop.f32.mrf.mxu0
        %v1320 = vadd.f32 %v497, %v1319
        %v1321 = vpop.f32.mrf.mxu0
        %v1322 = vadd.f32 %v497, %v1321
        %1323 = vmatmul.bf16.gmra.mxu0 %v1283
        %v1324 = vpop.f32.mrf.mxu0
        %v1325 = vadd.f32 %v497, %v1324
        %v1326 = vpop.f32.mrf.mxu0
        %v1327 = vadd.f32 %v497, %v1326
        %1328 = vmatmul.bf16.gmra.mxu0 %v1284
        %v1329 = vpop.f32.mrf.mxu0
        %v1330 = vadd.f32 %v497, %v1329
        %v1331 = vpop.f32.mrf.mxu0
        %v1332 = vadd.f32 %v497, %v1331
        %1333 = vdwg.mxu0
        %v1334 = vmul.f32 %v1295, 0.071428575
        %v1335 = vmul.f32 %v1297, 0.071428575
        %v1336 = vmul.f32 %v1300, 0.071428575
        %v1337 = vmul.f32 %v1302, 0.071428575
        %v1338 = vmul.f32 %v1305, 0.071428575
        %v1339 = vmul.f32 %v1307, 0.071428575
        %v1340 = vmul.f32 %v1310, 0.071428575
        %v1341 = vmul.f32 %v1312, 0.071428575
        %v1342 = vmul.f32 %v1315, 0.071428575
        %v1343 = vmul.f32 %v1317, 0.071428575
        %v1344 = vmul.f32 %v1320, 0.071428575
        %v1345 = vmul.f32 %v1322, 0.071428575
        %v1346 = vmul.f32 %v1325, 0.071428575
        %v1347 = vmul.f32 %v1327, 0.071428575
        %v1348 = vmul.f32 %v1330, 0.071428575
        %v1349 = vmul.f32 %v1332, 0.071428575
        %v1350 = vadd.f32 %v1184, %v1334
        %v1351 = vadd.f32 %v1185, %v1335
        %v1352 = vadd.f32 %v1186, %v1336
        %v1353 = vadd.f32 %v1187, %v1337
        %v1354 = vadd.f32 %v1188, %v1338
        %v1355 = vadd.f32 %v1189, %v1339
        %v1356 = vadd.f32 %v1190, %v1340
        %v1357 = vadd.f32 %v1191, %v1341
        %v1358 = vadd.f32 %v1192, %v1342
        %v1359 = vadd.f32 %v1193, %v1343
        %v1360 = vadd.f32 %v1194, %v1344
        %v1361 = vadd.f32 %v1195, %v1345
        %v1362 = vadd.f32 %v1196, %v1346
        %v1363 = vadd.f32 %v1197, %v1347
        %v1364 = vadd.f32 %v1198, %v1348
        %v1365 = vadd.f32 %v1199, %v1349
        %v1366 = vpack.c.bf16 %v1351, %v1350
        %v1367 = vpack.c.bf16 %v1353, %v1352
        %v1368 = vpack.c.bf16 %v1355, %v1354
        %v1369 = vpack.c.bf16 %v1357, %v1356
        %v1370 = vpack.c.bf16 %v1359, %v1358
        %v1371 = vpack.c.bf16 %v1361, %v1360
        %v1372 = vpack.c.bf16 %v1363, %v1362
        %v1373 = vpack.c.bf16 %v1365, %v1364
        %v1375 = vperm.slane %v1201, 0
        %1377 = vmatpush.bf16.msra.mxu0 %v414
        %1378 = vmatpush.bf16.msra.mxu0 %v413
        %1379 = vmatpush.bf16.msra.mxu0 %v412
        %1380 = vmatpush.bf16.msra.mxu0 %v411
        %1381 = vmatpush.bf16.msra.mxu0 %v410
        %1382 = vmatpush.bf16.msra.mxu0 %v409
        %1383 = vmatpush.bf16.msra.mxu0 %v408
        %1384 = vmatpush.bf16.msra.mxu0 %v407
        %1385 = vmatmul.bf16.gmra.mxu0 %v1366
        %v1386 = vpop.f32.mrf.mxu0
        %v1387 = vadd.f32 %v1375, %v1386
        %v1388 = vpop.f32.mrf.mxu0
        %v1389 = vadd.f32 %v1375, %v1388
        %1390 = vmatmul.bf16.gmra.mxu0 %v1367
        %v1391 = vpop.f32.mrf.mxu0
        %v1392 = vadd.f32 %v1375, %v1391
        %v1393 = vpop.f32.mrf.mxu0
        %v1394 = vadd.f32 %v1375, %v1393
        %1395 = vmatmul.bf16.gmra.mxu0 %v1368
        %v1396 = vpop.f32.mrf.mxu0
        %v1397 = vadd.f32 %v1375, %v1396
        %v1398 = vpop.f32.mrf.mxu0
        %v1399 = vadd.f32 %v1375, %v1398
        %1400 = vmatmul.bf16.gmra.mxu0 %v1369
        %v1401 = vpop.f32.mrf.mxu0
        %v1402 = vadd.f32 %v1375, %v1401
        %v1403 = vpop.f32.mrf.mxu0
        %v1404 = vadd.f32 %v1375, %v1403
        %1405 = vmatmul.bf16.gmra.mxu0 %v1370
        %v1406 = vpop.f32.mrf.mxu0
        %v1407 = vadd.f32 %v1375, %v1406
        %v1408 = vpop.f32.mrf.mxu0
        %v1409 = vadd.f32 %v1375, %v1408
        %1410 = vmatmul.bf16.gmra.mxu0 %v1371
        %v1411 = vpop.f32.mrf.mxu0
        %v1412 = vadd.f32 %v1375, %v1411
        %v1413 = vpop.f32.mrf.mxu0
        %v1414 = vadd.f32 %v1375, %v1413
        %1415 = vmatmul.bf16.gmra.mxu0 %v1372
        %v1416 = vpop.f32.mrf.mxu0
        %v1417 = vadd.f32 %v1375, %v1416
        %v1418 = vpop.f32.mrf.mxu0
        %v1419 = vadd.f32 %v1375, %v1418
        %1420 = vmatmul.bf16.gmra.mxu0 %v1373
        %v1421 = vpop.f32.mrf.mxu0
        %v1422 = vadd.f32 %v1375, %v1421
        %v1423 = vpop.f32.mrf.mxu0
        %v1424 = vadd.f32 %v1375, %v1423
        %1425 = vdwg.mxu0
        %v1426 = vtanh.pop %v1387
        %v1427 = vtanh.pop %v1389
        %v1428 = vtanh.pop %v1392
        %v1429 = vtanh.pop %v1394
        %v1430 = vtanh.pop %v1397
        %v1431 = vtanh.pop %v1399
        %v1432 = vtanh.pop %v1402
        %v1433 = vtanh.pop %v1404
        %v1434 = vtanh.pop %v1407
        %v1435 = vtanh.pop %v1409
        %v1436 = vtanh.pop %v1412
        %v1437 = vtanh.pop %v1414
        %v1438 = vtanh.pop %v1417
        %v1439 = vtanh.pop %v1419
        %v1440 = vtanh.pop %v1422
        %v1441 = vtanh.pop %v1424
        %v1442 = vpack.c.bf16 %v1427, %v1426
        %v1443 = vpack.c.bf16 %v1429, %v1428
        %v1444 = vpack.c.bf16 %v1431, %v1430
        %v1445 = vpack.c.bf16 %v1433, %v1432
        %v1446 = vpack.c.bf16 %v1435, %v1434
        %v1447 = vpack.c.bf16 %v1437, %v1436
        %v1448 = vpack.c.bf16 %v1439, %v1438
        %v1449 = vpack.c.bf16 %v1441, %v1440
        %1450 = vmatpush.bf16.msra.mxu0 %v538
        %1451 = vmatpush.bf16.msra.mxu0 %v537
        %1452 = vmatpush.bf16.msra.mxu0 %v536
        %1453 = vmatpush.bf16.msra.mxu0 %v535
        %1454 = vmatpush.bf16.msra.mxu0 %v534
        %1455 = vmatpush.bf16.msra.mxu0 %v533
        %1456 = vmatpush.bf16.msra.mxu0 %v532
        %1457 = vmatpush.bf16.msra.mxu0 %v531
        %1458 = vmatmul.bf16.gmra.mxu0 %v1442
        %v1459 = vpop.f32.mrf.mxu0
        %v1460 = vadd.f32 %v497, %v1459
        %v1461 = vpop.f32.mrf.mxu0
        %v1462 = vadd.f32 %v497, %v1461
        %1463 = vmatmul.bf16.gmra.mxu0 %v1443
        %v1464 = vpop.f32.mrf.mxu0
        %v1465 = vadd.f32 %v497, %v1464
        %v1466 = vpop.f32.mrf.mxu0
        %v1467 = vadd.f32 %v497, %v1466
        %1468 = vmatmul.bf16.gmra.mxu0 %v1444
        %v1469 = vpop.f32.mrf.mxu0
        %v1470 = vadd.f32 %v497, %v1469
        %v1471 = vpop.f32.mrf.mxu0
        %v1472 = vadd.f32 %v497, %v1471
        %1473 = vmatmul.bf16.gmra.mxu0 %v1445
        %v1474 = vpop.f32.mrf.mxu0
        %v1475 = vadd.f32 %v497, %v1474
        %v1476 = vpop.f32.mrf.mxu0
        %v1477 = vadd.f32 %v497, %v1476
        %1478 = vmatmul.bf16.gmra.mxu0 %v1446
        %v1479 = vpop.f32.mrf.mxu0
        %v1480 = vadd.f32 %v497, %v1479
        %v1481 = vpop.f32.mrf.mxu0
        %v1482 = vadd.f32 %v497, %v1481
        %1483 = vmatmul.bf16.gmra.mxu0 %v1447
        %v1484 = vpop.f32.mrf.mxu0
        %v1485 = vadd.f32 %v497, %v1484
        %v1486 = vpop.f32.mrf.mxu0
        %v1487 = vadd.f32 %v497, %v1486
        %1488 = vmatmul.bf16.gmra.mxu0 %v1448
        %v1489 = vpop.f32.mrf.mxu0
        %v1490 = vadd.f32 %v497, %v1489
        %v1491 = vpop.f32.mrf.mxu0
        %v1492 = vadd.f32 %v497, %v1491
        %1493 = vmatmul.bf16.gmra.mxu0 %v1449
        %v1494 = vpop.f32.mrf.mxu0
        %v1495 = vadd.f32 %v497, %v1494
        %v1496 = vpop.f32.mrf.mxu0
        %v1497 = vadd.f32 %v497, %v1496
        %1498 = vdwg.mxu0
        %v1499 = vmul.f32 %v1460, 2.0
        %v1500 = vmul.f32 %v1462, 2.0
        %v1501 = vmul.f32 %v1465, 2.0
        %v1502 = vmul.f32 %v1467, 2.0
        %v1503 = vmul.f32 %v1470, 2.0
        %v1504 = vmul.f32 %v1472, 2.0
        %v1505 = vmul.f32 %v1475, 2.0
        %v1506 = vmul.f32 %v1477, 2.0
        %v1507 = vmul.f32 %v1480, 2.0
        %v1508 = vmul.f32 %v1482, 2.0
        %v1509 = vmul.f32 %v1485, 2.0
        %v1510 = vmul.f32 %v1487, 2.0
        %v1511 = vmul.f32 %v1490, 2.0
        %v1512 = vmul.f32 %v1492, 2.0
        %v1513 = vmul.f32 %v1495, 2.0
        %v1514 = vmul.f32 %v1497, 2.0
        %v1515 = vadd.f32 %v1295, %v1499
        %v1516 = vadd.f32 %v1297, %v1500
        %v1517 = vadd.f32 %v1300, %v1501
        %v1518 = vadd.f32 %v1302, %v1502
        %v1519 = vadd.f32 %v1305, %v1503
        %v1520 = vadd.f32 %v1307, %v1504
        %v1521 = vadd.f32 %v1310, %v1505
        %v1522 = vadd.f32 %v1312, %v1506
        %v1523 = vadd.f32 %v1315, %v1507
        %v1524 = vadd.f32 %v1317, %v1508
        %v1525 = vadd.f32 %v1320, %v1509
        %v1526 = vadd.f32 %v1322, %v1510
        %v1527 = vadd.f32 %v1325, %v1511
        %v1528 = vadd.f32 %v1327, %v1512
        %v1529 = vadd.f32 %v1330, %v1513
        %v1530 = vadd.f32 %v1332, %v1514
        %v1531 = vmul.f32 %v1460, 0.071428575
        %v1532 = vmul.f32 %v1462, 0.071428575
        %v1533 = vmul.f32 %v1465, 0.071428575
        %v1534 = vmul.f32 %v1467, 0.071428575
        %v1535 = vmul.f32 %v1470, 0.071428575
        %v1536 = vmul.f32 %v1472, 0.071428575
        %v1537 = vmul.f32 %v1475, 0.071428575
        %v1538 = vmul.f32 %v1477, 0.071428575
        %v1539 = vmul.f32 %v1480, 0.071428575
        %v1540 = vmul.f32 %v1482, 0.071428575
        %v1541 = vmul.f32 %v1485, 0.071428575
        %v1542 = vmul.f32 %v1487, 0.071428575
        %v1543 = vmul.f32 %v1490, 0.071428575
        %v1544 = vmul.f32 %v1492, 0.071428575
        %v1545 = vmul.f32 %v1495, 0.071428575
        %v1546 = vmul.f32 %v1497, 0.071428575
        %v1547 = vadd.f32 %v1184, %v1531
        %v1548 = vadd.f32 %v1185, %v1532
        %v1549 = vadd.f32 %v1186, %v1533
        %v1550 = vadd.f32 %v1187, %v1534
        %v1551 = vadd.f32 %v1188, %v1535
        %v1552 = vadd.f32 %v1189, %v1536
        %v1553 = vadd.f32 %v1190, %v1537
        %v1554 = vadd.f32 %v1191, %v1538
        %v1555 = vadd.f32 %v1192, %v1539
        %v1556 = vadd.f32 %v1193, %v1540
        %v1557 = vadd.f32 %v1194, %v1541
        %v1558 = vadd.f32 %v1195, %v1542
        %v1559 = vadd.f32 %v1196, %v1543
        %v1560 = vadd.f32 %v1197, %v1544
        %v1561 = vadd.f32 %v1198, %v1545
        %v1562 = vadd.f32 %v1199, %v1546
        %v1563 = vpack.c.bf16 %v1548, %v1547
        %v1564 = vpack.c.bf16 %v1550, %v1549
        %v1565 = vpack.c.bf16 %v1552, %v1551
        %v1566 = vpack.c.bf16 %v1554, %v1553
        %v1567 = vpack.c.bf16 %v1556, %v1555
        %v1568 = vpack.c.bf16 %v1558, %v1557
        %v1569 = vpack.c.bf16 %v1560, %v1559
        %v1570 = vpack.c.bf16 %v1562, %v1561
        %1571 = vmatpush.bf16.msra.mxu0 %v414
        %1572 = vmatpush.bf16.msra.mxu0 %v413
        %1573 = vmatpush.bf16.msra.mxu0 %v412
        %1574 = vmatpush.bf16.msra.mxu0 %v411
        %1575 = vmatpush.bf16.msra.mxu0 %v410
        %1576 = vmatpush.bf16.msra.mxu0 %v409
        %1577 = vmatpush.bf16.msra.mxu0 %v408
        %1578 = vmatpush.bf16.msra.mxu0 %v407
        %1579 = vmatmul.bf16.gmra.mxu0 %v1563
        %v1580 = vpop.f32.mrf.mxu0
        %v1581 = vadd.f32 %v1375, %v1580
        %v1582 = vpop.f32.mrf.mxu0
        %v1583 = vadd.f32 %v1375, %v1582
        %1584 = vmatmul.bf16.gmra.mxu0 %v1564
        %v1585 = vpop.f32.mrf.mxu0
        %v1586 = vadd.f32 %v1375, %v1585
        %v1587 = vpop.f32.mrf.mxu0
        %v1588 = vadd.f32 %v1375, %v1587
        %1589 = vmatmul.bf16.gmra.mxu0 %v1565
        %v1590 = vpop.f32.mrf.mxu0
        %v1591 = vadd.f32 %v1375, %v1590
        %v1592 = vpop.f32.mrf.mxu0
        %v1593 = vadd.f32 %v1375, %v1592
        %1594 = vmatmul.bf16.gmra.mxu0 %v1566
        %v1595 = vpop.f32.mrf.mxu0
        %v1596 = vadd.f32 %v1375, %v1595
        %v1597 = vpop.f32.mrf.mxu0
        %v1598 = vadd.f32 %v1375, %v1597
        %1599 = vmatmul.bf16.gmra.mxu0 %v1567
        %v1600 = vpop.f32.mrf.mxu0
        %v1601 = vadd.f32 %v1375, %v1600
        %v1602 = vpop.f32.mrf.mxu0
        %v1603 = vadd.f32 %v1375, %v1602
        %1604 = vmatmul.bf16.gmra.mxu0 %v1568
        %v1605 = vpop.f32.mrf.mxu0
        %v1606 = vadd.f32 %v1375, %v1605
        %v1607 = vpop.f32.mrf.mxu0
        %v1608 = vadd.f32 %v1375, %v1607
        %1609 = vmatmul.bf16.gmra.mxu0 %v1569
        %v1610 = vpop.f32.mrf.mxu0
        %v1611 = vadd.f32 %v1375, %v1610
        %v1612 = vpop.f32.mrf.mxu0
        %v1613 = vadd.f32 %v1375, %v1612
        %1614 = vmatmul.bf16.gmra.mxu0 %v1570
        %v1615 = vpop.f32.mrf.mxu0
        %v1616 = vadd.f32 %v1375, %v1615
        %v1617 = vpop.f32.mrf.mxu0
        %v1618 = vadd.f32 %v1375, %v1617
        %1619 = vdwg.mxu0
        %v1620 = vtanh.pop %v1581
        %v1621 = vtanh.pop %v1583
        %v1622 = vtanh.pop %v1586
        %v1623 = vtanh.pop %v1588
        %v1624 = vtanh.pop %v1591
        %v1625 = vtanh.pop %v1593
        %v1626 = vtanh.pop %v1596
        %v1627 = vtanh.pop %v1598
        %v1628 = vtanh.pop %v1601
        %v1629 = vtanh.pop %v1603
        %v1630 = vtanh.pop %v1606
        %v1631 = vtanh.pop %v1608
        %v1632 = vtanh.pop %v1611
        %v1633 = vtanh.pop %v1613
        %v1634 = vtanh.pop %v1616
        %v1635 = vtanh.pop %v1618
        %v1636 = vpack.c.bf16 %v1621, %v1620
        %v1637 = vpack.c.bf16 %v1623, %v1622
        %v1638 = vpack.c.bf16 %v1625, %v1624
        %v1639 = vpack.c.bf16 %v1627, %v1626
        %v1640 = vpack.c.bf16 %v1629, %v1628
        %v1641 = vpack.c.bf16 %v1631, %v1630
        %v1642 = vpack.c.bf16 %v1633, %v1632
        %v1643 = vpack.c.bf16 %v1635, %v1634
        %1644 = vmatpush.bf16.msra.mxu0 %v538
        %1645 = vmatpush.bf16.msra.mxu0 %v537
        %1646 = vmatpush.bf16.msra.mxu0 %v536
        %1647 = vmatpush.bf16.msra.mxu0 %v535
        %1648 = vmatpush.bf16.msra.mxu0 %v534
        %1649 = vmatpush.bf16.msra.mxu0 %v533
        %1650 = vmatpush.bf16.msra.mxu0 %v532
        %1651 = vmatpush.bf16.msra.mxu0 %v531
        %1652 = vmatmul.bf16.gmra.mxu0 %v1636
        %v1653 = vpop.f32.mrf.mxu0
        %v1654 = vadd.f32 %v497, %v1653
        %v1655 = vpop.f32.mrf.mxu0
        %v1656 = vadd.f32 %v497, %v1655
        %1657 = vmatmul.bf16.gmra.mxu0 %v1637
        %v1658 = vpop.f32.mrf.mxu0
        %v1659 = vadd.f32 %v497, %v1658
        %v1660 = vpop.f32.mrf.mxu0
        %v1661 = vadd.f32 %v497, %v1660
        %1662 = vmatmul.bf16.gmra.mxu0 %v1638
        %v1663 = vpop.f32.mrf.mxu0
        %v1664 = vadd.f32 %v497, %v1663
        %v1665 = vpop.f32.mrf.mxu0
        %v1666 = vadd.f32 %v497, %v1665
        %1667 = vmatmul.bf16.gmra.mxu0 %v1639
        %v1668 = vpop.f32.mrf.mxu0
        %v1669 = vadd.f32 %v497, %v1668
        %v1670 = vpop.f32.mrf.mxu0
        %v1671 = vadd.f32 %v497, %v1670
        %1672 = vmatmul.bf16.gmra.mxu0 %v1640
        %v1673 = vpop.f32.mrf.mxu0
        %v1674 = vadd.f32 %v497, %v1673
        %v1675 = vpop.f32.mrf.mxu0
        %v1676 = vadd.f32 %v497, %v1675
        %1677 = vmatmul.bf16.gmra.mxu0 %v1641
        %v1678 = vpop.f32.mrf.mxu0
        %v1679 = vadd.f32 %v497, %v1678
        %v1680 = vpop.f32.mrf.mxu0
        %v1681 = vadd.f32 %v497, %v1680
        %1682 = vmatmul.bf16.gmra.mxu0 %v1642
        %v1683 = vpop.f32.mrf.mxu0
        %v1684 = vadd.f32 %v497, %v1683
        %v1685 = vpop.f32.mrf.mxu0
        %v1686 = vadd.f32 %v497, %v1685
        %1687 = vmatmul.bf16.gmra.mxu0 %v1643
        %v1688 = vpop.f32.mrf.mxu0
        %v1689 = vadd.f32 %v497, %v1688
        %v1690 = vpop.f32.mrf.mxu0
        %v1691 = vadd.f32 %v497, %v1690
        %1692 = vdwg.mxu0
        %v1693 = vmul.f32 %v1654, 2.0
        %v1694 = vmul.f32 %v1656, 2.0
        %v1695 = vmul.f32 %v1659, 2.0
        %v1696 = vmul.f32 %v1661, 2.0
        %v1697 = vmul.f32 %v1664, 2.0
        %v1698 = vmul.f32 %v1666, 2.0
        %v1699 = vmul.f32 %v1669, 2.0
        %v1700 = vmul.f32 %v1671, 2.0
        %v1701 = vmul.f32 %v1674, 2.0
        %v1702 = vmul.f32 %v1676, 2.0
        %v1703 = vmul.f32 %v1679, 2.0
        %v1704 = vmul.f32 %v1681, 2.0
        %v1705 = vmul.f32 %v1684, 2.0
        %v1706 = vmul.f32 %v1686, 2.0
        %v1707 = vmul.f32 %v1689, 2.0
        %v1708 = vmul.f32 %v1691, 2.0
        %v1709 = vadd.f32 %v1515, %v1693
        %v1710 = vadd.f32 %v1516, %v1694
        %v1711 = vadd.f32 %v1517, %v1695
        %v1712 = vadd.f32 %v1518, %v1696
        %v1713 = vadd.f32 %v1519, %v1697
        %v1714 = vadd.f32 %v1520, %v1698
        %v1715 = vadd.f32 %v1521, %v1699
        %v1716 = vadd.f32 %v1522, %v1700
        %v1717 = vadd.f32 %v1523, %v1701
        %v1718 = vadd.f32 %v1524, %v1702
        %v1719 = vadd.f32 %v1525, %v1703
        %v1720 = vadd.f32 %v1526, %v1704
        %v1721 = vadd.f32 %v1527, %v1705
        %v1722 = vadd.f32 %v1528, %v1706
        %v1723 = vadd.f32 %v1529, %v1707
        %v1724 = vadd.f32 %v1530, %v1708
        %v1725 = vmul.f32 %v1654, 0.14285715
        %v1726 = vmul.f32 %v1656, 0.14285715
        %v1727 = vmul.f32 %v1659, 0.14285715
        %v1728 = vmul.f32 %v1661, 0.14285715
        %v1729 = vmul.f32 %v1664, 0.14285715
        %v1730 = vmul.f32 %v1666, 0.14285715
        %v1731 = vmul.f32 %v1669, 0.14285715
        %v1732 = vmul.f32 %v1671, 0.14285715
        %v1733 = vmul.f32 %v1674, 0.14285715
        %v1734 = vmul.f32 %v1676, 0.14285715
        %v1735 = vmul.f32 %v1679, 0.14285715
        %v1736 = vmul.f32 %v1681, 0.14285715
        %v1737 = vmul.f32 %v1684, 0.14285715
        %v1738 = vmul.f32 %v1686, 0.14285715
        %v1739 = vmul.f32 %v1689, 0.14285715
        %v1740 = vmul.f32 %v1691, 0.14285715
        %v1741 = vadd.f32 %v1184, %v1725
        %v1742 = vadd.f32 %v1185, %v1726
        %v1743 = vadd.f32 %v1186, %v1727
        %v1744 = vadd.f32 %v1187, %v1728
        %v1745 = vadd.f32 %v1188, %v1729
        %v1746 = vadd.f32 %v1189, %v1730
        %v1747 = vadd.f32 %v1190, %v1731
        %v1748 = vadd.f32 %v1191, %v1732
        %v1749 = vadd.f32 %v1192, %v1733
        %v1750 = vadd.f32 %v1193, %v1734
        %v1751 = vadd.f32 %v1194, %v1735
        %v1752 = vadd.f32 %v1195, %v1736
        %v1753 = vadd.f32 %v1196, %v1737
        %v1754 = vadd.f32 %v1197, %v1738
        %v1755 = vadd.f32 %v1198, %v1739
        %v1756 = vadd.f32 %v1199, %v1740
        %v1757 = vpack.c.bf16 %v1742, %v1741
        %v1758 = vpack.c.bf16 %v1744, %v1743
        %v1759 = vpack.c.bf16 %v1746, %v1745
        %v1760 = vpack.c.bf16 %v1748, %v1747
        %v1761 = vpack.c.bf16 %v1750, %v1749
        %v1762 = vpack.c.bf16 %v1752, %v1751
        %v1763 = vpack.c.bf16 %v1754, %v1753
        %v1764 = vpack.c.bf16 %v1756, %v1755
        %v1766 = vperm.slane %v1203, 0
        %1768 = vmatpush.bf16.msra.mxu0 %v414
        %1769 = vmatpush.bf16.msra.mxu0 %v413
        %1770 = vmatpush.bf16.msra.mxu0 %v412
        %1771 = vmatpush.bf16.msra.mxu0 %v411
        %1772 = vmatpush.bf16.msra.mxu0 %v410
        %1773 = vmatpush.bf16.msra.mxu0 %v409
        %1774 = vmatpush.bf16.msra.mxu0 %v408
        %1775 = vmatpush.bf16.msra.mxu0 %v407
        %1776 = vmatmul.bf16.gmra.mxu0 %v1757
        %v1777 = vpop.f32.mrf.mxu0
        %v1778 = vadd.f32 %v1766, %v1777
        %v1779 = vpop.f32.mrf.mxu0
        %v1780 = vadd.f32 %v1766, %v1779
        %1781 = vmatmul.bf16.gmra.mxu0 %v1758
        %v1782 = vpop.f32.mrf.mxu0
        %v1783 = vadd.f32 %v1766, %v1782
        %v1784 = vpop.f32.mrf.mxu0
        %v1785 = vadd.f32 %v1766, %v1784
        %1786 = vmatmul.bf16.gmra.mxu0 %v1759
        %v1787 = vpop.f32.mrf.mxu0
        %v1788 = vadd.f32 %v1766, %v1787
        %v1789 = vpop.f32.mrf.mxu0
        %v1790 = vadd.f32 %v1766, %v1789
        %1791 = vmatmul.bf16.gmra.mxu0 %v1760
        %v1792 = vpop.f32.mrf.mxu0
        %v1793 = vadd.f32 %v1766, %v1792
        %v1794 = vpop.f32.mrf.mxu0
        %v1795 = vadd.f32 %v1766, %v1794
        %1796 = vmatmul.bf16.gmra.mxu0 %v1761
        %v1797 = vpop.f32.mrf.mxu0
        %v1798 = vadd.f32 %v1766, %v1797
        %v1799 = vpop.f32.mrf.mxu0
        %v1800 = vadd.f32 %v1766, %v1799
        %1801 = vmatmul.bf16.gmra.mxu0 %v1762
        %v1802 = vpop.f32.mrf.mxu0
        %v1803 = vadd.f32 %v1766, %v1802
        %v1804 = vpop.f32.mrf.mxu0
        %v1805 = vadd.f32 %v1766, %v1804
        %1806 = vmatmul.bf16.gmra.mxu0 %v1763
        %v1807 = vpop.f32.mrf.mxu0
        %v1808 = vadd.f32 %v1766, %v1807
        %v1809 = vpop.f32.mrf.mxu0
        %v1810 = vadd.f32 %v1766, %v1809
        %1811 = vmatmul.bf16.gmra.mxu0 %v1764
        %v1812 = vpop.f32.mrf.mxu0
        %v1813 = vadd.f32 %v1766, %v1812
        %v1814 = vpop.f32.mrf.mxu0
        %v1815 = vadd.f32 %v1766, %v1814
        %1816 = vdwg.mxu0
        %v1817 = vtanh.pop %v1778
        %v1818 = vtanh.pop %v1780
        %v1819 = vtanh.pop %v1783
        %v1820 = vtanh.pop %v1785
        %v1821 = vtanh.pop %v1788
        %v1822 = vtanh.pop %v1790
        %v1823 = vtanh.pop %v1793
        %v1824 = vtanh.pop %v1795
        %v1825 = vtanh.pop %v1798
        %v1826 = vtanh.pop %v1800
        %v1827 = vtanh.pop %v1803
        %v1828 = vtanh.pop %v1805
        %v1829 = vtanh.pop %v1808
        %v1830 = vtanh.pop %v1810
        %v1831 = vtanh.pop %v1813
        %v1832 = vtanh.pop %v1815
        %v1833 = vpack.c.bf16 %v1818, %v1817
        %v1834 = vpack.c.bf16 %v1820, %v1819
        %v1835 = vpack.c.bf16 %v1822, %v1821
        %v1836 = vpack.c.bf16 %v1824, %v1823
        %v1837 = vpack.c.bf16 %v1826, %v1825
        %v1838 = vpack.c.bf16 %v1828, %v1827
        %v1839 = vpack.c.bf16 %v1830, %v1829
        %v1840 = vpack.c.bf16 %v1832, %v1831
        %1841 = vmatpush.bf16.msra.mxu0 %v538
        %1842 = vmatpush.bf16.msra.mxu0 %v537
        %1843 = vmatpush.bf16.msra.mxu0 %v536
        %1844 = vmatpush.bf16.msra.mxu0 %v535
        %1845 = vmatpush.bf16.msra.mxu0 %v534
        %1846 = vmatpush.bf16.msra.mxu0 %v533
        %1847 = vmatpush.bf16.msra.mxu0 %v532
        %1848 = vmatpush.bf16.msra.mxu0 %v531
        %1849 = vmatmul.bf16.gmra.mxu0 %v1833
        %v1850 = vpop.f32.mrf.mxu0
        %v1851 = vadd.f32 %v497, %v1850
        %v1852 = vpop.f32.mrf.mxu0
        %v1853 = vadd.f32 %v497, %v1852
        %1854 = vmatmul.bf16.gmra.mxu0 %v1834
        %v1855 = vpop.f32.mrf.mxu0
        %v1856 = vadd.f32 %v497, %v1855
        %v1857 = vpop.f32.mrf.mxu0
        %v1858 = vadd.f32 %v497, %v1857
        %1859 = vmatmul.bf16.gmra.mxu0 %v1835
        %v1860 = vpop.f32.mrf.mxu0
        %v1861 = vadd.f32 %v497, %v1860
        %v1862 = vpop.f32.mrf.mxu0
        %v1863 = vadd.f32 %v497, %v1862
        %1864 = vmatmul.bf16.gmra.mxu0 %v1836
        %v1865 = vpop.f32.mrf.mxu0
        %v1866 = vadd.f32 %v497, %v1865
        %v1867 = vpop.f32.mrf.mxu0
        %v1868 = vadd.f32 %v497, %v1867
        %1869 = vmatmul.bf16.gmra.mxu0 %v1837
        %v1870 = vpop.f32.mrf.mxu0
        %v1871 = vadd.f32 %v497, %v1870
        %v1872 = vpop.f32.mrf.mxu0
        %v1873 = vadd.f32 %v497, %v1872
        %1874 = vmatmul.bf16.gmra.mxu0 %v1838
        %v1875 = vpop.f32.mrf.mxu0
        %v1876 = vadd.f32 %v497, %v1875
        %v1877 = vpop.f32.mrf.mxu0
        %v1878 = vadd.f32 %v497, %v1877
        %1879 = vmatmul.bf16.gmra.mxu0 %v1839
        %v1880 = vpop.f32.mrf.mxu0
        %v1881 = vadd.f32 %v497, %v1880
        %v1882 = vpop.f32.mrf.mxu0
        %v1883 = vadd.f32 %v497, %v1882
        %1884 = vmatmul.bf16.gmra.mxu0 %v1840
        %v1885 = vpop.f32.mrf.mxu0
        %v1886 = vadd.f32 %v497, %v1885
        %v1887 = vpop.f32.mrf.mxu0
        %v1888 = vadd.f32 %v497, %v1887
        %1889 = vdwg.mxu0
        %v1890 = vadd.f32 %v1709, %v1851
        %v1891 = vadd.f32 %v1710, %v1853
        %v1892 = vadd.f32 %v1711, %v1856
        %v1893 = vadd.f32 %v1712, %v1858
        %v1894 = vadd.f32 %v1713, %v1861
        %v1895 = vadd.f32 %v1714, %v1863
        %v1896 = vadd.f32 %v1715, %v1866
        %v1897 = vadd.f32 %v1716, %v1868
        %v1898 = vadd.f32 %v1717, %v1871
        %v1899 = vadd.f32 %v1718, %v1873
        %v1900 = vadd.f32 %v1719, %v1876
        %v1901 = vadd.f32 %v1720, %v1878
        %v1902 = vadd.f32 %v1721, %v1881
        %v1903 = vadd.f32 %v1722, %v1883
        %v1904 = vadd.f32 %v1723, %v1886
        %v1905 = vadd.f32 %v1724, %v1888
        %v1906 = vmul.f32 %v1890, 0.023809524
        %v1907 = vmul.f32 %v1891, 0.023809524
        %v1908 = vmul.f32 %v1892, 0.023809524
        %v1909 = vmul.f32 %v1893, 0.023809524
        %v1910 = vmul.f32 %v1894, 0.023809524
        %v1911 = vmul.f32 %v1895, 0.023809524
        %v1912 = vmul.f32 %v1896, 0.023809524
        %v1913 = vmul.f32 %v1897, 0.023809524
        %v1914 = vmul.f32 %v1898, 0.023809524
        %v1915 = vmul.f32 %v1899, 0.023809524
        %v1916 = vmul.f32 %v1900, 0.023809524
        %v1917 = vmul.f32 %v1901, 0.023809524
        %v1918 = vmul.f32 %v1902, 0.023809524
        %v1919 = vmul.f32 %v1903, 0.023809524
        %v1920 = vmul.f32 %v1904, 0.023809524
        %v1921 = vmul.f32 %v1905, 0.023809524
        %v1922 = vadd.f32 %v1184, %v1906
        %v1923 = vadd.f32 %v1185, %v1907
        %v1924 = vadd.f32 %v1186, %v1908
        %v1925 = vadd.f32 %v1187, %v1909
        %v1926 = vadd.f32 %v1188, %v1910
        %v1927 = vadd.f32 %v1189, %v1911
        %v1928 = vadd.f32 %v1190, %v1912
        %v1929 = vadd.f32 %v1191, %v1913
        %v1930 = vadd.f32 %v1192, %v1914
        %v1931 = vadd.f32 %v1193, %v1915
        %v1932 = vadd.f32 %v1194, %v1916
        %v1933 = vadd.f32 %v1195, %v1917
        %v1934 = vadd.f32 %v1196, %v1918
        %v1935 = vadd.f32 %v1197, %v1919
        %v1936 = vadd.f32 %v1198, %v1920
        %v1937 = vadd.f32 %v1199, %v1921
        %v1938 = vmul.f32 %v340, 0.35714287
        %v1939 = vadd.f32 %v339, %v1938
        %v1940 = vmul.f32 %v340, 0.42857146
        %v1941 = vadd.f32 %v339, %v1940
        %v1942 = vpack.c.bf16 %v1923, %v1922
        %v1943 = vpack.c.bf16 %v1925, %v1924
        %v1944 = vpack.c.bf16 %v1927, %v1926
        %v1945 = vpack.c.bf16 %v1929, %v1928
        %v1946 = vpack.c.bf16 %v1931, %v1930
        %v1947 = vpack.c.bf16 %v1933, %v1932
        %v1948 = vpack.c.bf16 %v1935, %v1934
        %v1949 = vpack.c.bf16 %v1937, %v1936
        %1950 = vmatpush.bf16.msra.mxu0 %v414
        %1951 = vmatpush.bf16.msra.mxu0 %v413
        %1952 = vmatpush.bf16.msra.mxu0 %v412
        %1953 = vmatpush.bf16.msra.mxu0 %v411
        %1954 = vmatpush.bf16.msra.mxu0 %v410
        %1955 = vmatpush.bf16.msra.mxu0 %v409
        %1956 = vmatpush.bf16.msra.mxu0 %v408
        %1957 = vmatpush.bf16.msra.mxu0 %v407
        %1958 = vmatmul.bf16.gmra.mxu0 %v1942
        %v1959 = vpop.f32.mrf.mxu0
        %v1960 = vadd.f32 %v1766, %v1959
        %v1961 = vpop.f32.mrf.mxu0
        %v1962 = vadd.f32 %v1766, %v1961
        %1963 = vmatmul.bf16.gmra.mxu0 %v1943
        %v1964 = vpop.f32.mrf.mxu0
        %v1965 = vadd.f32 %v1766, %v1964
        %v1966 = vpop.f32.mrf.mxu0
        %v1967 = vadd.f32 %v1766, %v1966
        %1968 = vmatmul.bf16.gmra.mxu0 %v1944
        %v1969 = vpop.f32.mrf.mxu0
        %v1970 = vadd.f32 %v1766, %v1969
        %v1971 = vpop.f32.mrf.mxu0
        %v1972 = vadd.f32 %v1766, %v1971
        %1973 = vmatmul.bf16.gmra.mxu0 %v1945
        %v1974 = vpop.f32.mrf.mxu0
        %v1975 = vadd.f32 %v1766, %v1974
        %v1976 = vpop.f32.mrf.mxu0
        %v1977 = vadd.f32 %v1766, %v1976
        %1978 = vmatmul.bf16.gmra.mxu0 %v1946
        %v1979 = vpop.f32.mrf.mxu0
        %v1980 = vadd.f32 %v1766, %v1979
        %v1981 = vpop.f32.mrf.mxu0
        %v1982 = vadd.f32 %v1766, %v1981
        %1983 = vmatmul.bf16.gmra.mxu0 %v1947
        %v1984 = vpop.f32.mrf.mxu0
        %v1985 = vadd.f32 %v1766, %v1984
        %v1986 = vpop.f32.mrf.mxu0
        %v1987 = vadd.f32 %v1766, %v1986
        %1988 = vmatmul.bf16.gmra.mxu0 %v1948
        %v1989 = vpop.f32.mrf.mxu0
        %v1990 = vadd.f32 %v1766, %v1989
        %v1991 = vpop.f32.mrf.mxu0
        %v1992 = vadd.f32 %v1766, %v1991
        %1993 = vmatmul.bf16.gmra.mxu0 %v1949
        %v1994 = vpop.f32.mrf.mxu0
        %v1995 = vadd.f32 %v1766, %v1994
        %v1996 = vpop.f32.mrf.mxu0
        %v1997 = vadd.f32 %v1766, %v1996
        %1998 = vdwg.mxu0
        %v1999 = vtanh.pop %v1960
        %v2000 = vtanh.pop %v1962
        %v2001 = vtanh.pop %v1965
        %v2002 = vtanh.pop %v1967
        %v2003 = vtanh.pop %v1970
        %v2004 = vtanh.pop %v1972
        %v2005 = vtanh.pop %v1975
        %v2006 = vtanh.pop %v1977
        %v2007 = vtanh.pop %v1980
        %v2008 = vtanh.pop %v1982
        %v2009 = vtanh.pop %v1985
        %v2010 = vtanh.pop %v1987
        %v2011 = vtanh.pop %v1990
        %v2012 = vtanh.pop %v1992
        %v2013 = vtanh.pop %v1995
        %v2014 = vtanh.pop %v1997
        %v2015 = vpack.c.bf16 %v2000, %v1999
        %v2016 = vpack.c.bf16 %v2002, %v2001
        %v2017 = vpack.c.bf16 %v2004, %v2003
        %v2018 = vpack.c.bf16 %v2006, %v2005
        %v2019 = vpack.c.bf16 %v2008, %v2007
        %v2020 = vpack.c.bf16 %v2010, %v2009
        %v2021 = vpack.c.bf16 %v2012, %v2011
        %v2022 = vpack.c.bf16 %v2014, %v2013
        %2023 = vmatpush.bf16.msra.mxu0 %v538
        %2024 = vmatpush.bf16.msra.mxu0 %v537
        %2025 = vmatpush.bf16.msra.mxu0 %v536
        %2026 = vmatpush.bf16.msra.mxu0 %v535
        %2027 = vmatpush.bf16.msra.mxu0 %v534
        %2028 = vmatpush.bf16.msra.mxu0 %v533
        %2029 = vmatpush.bf16.msra.mxu0 %v532
        %2030 = vmatpush.bf16.msra.mxu0 %v531
        %2031 = vmatmul.bf16.gmra.mxu0 %v2015
        %v2032 = vpop.f32.mrf.mxu0
        %v2033 = vadd.f32 %v497, %v2032
        %v2034 = vpop.f32.mrf.mxu0
        %v2035 = vadd.f32 %v497, %v2034
        %2036 = vmatmul.bf16.gmra.mxu0 %v2016
        %v2037 = vpop.f32.mrf.mxu0
        %v2038 = vadd.f32 %v497, %v2037
        %v2039 = vpop.f32.mrf.mxu0
        %v2040 = vadd.f32 %v497, %v2039
        %2041 = vmatmul.bf16.gmra.mxu0 %v2017
        %v2042 = vpop.f32.mrf.mxu0
        %v2043 = vadd.f32 %v497, %v2042
        %v2044 = vpop.f32.mrf.mxu0
        %v2045 = vadd.f32 %v497, %v2044
        %2046 = vmatmul.bf16.gmra.mxu0 %v2018
        %v2047 = vpop.f32.mrf.mxu0
        %v2048 = vadd.f32 %v497, %v2047
        %v2049 = vpop.f32.mrf.mxu0
        %v2050 = vadd.f32 %v497, %v2049
        %2051 = vmatmul.bf16.gmra.mxu0 %v2019
        %v2052 = vpop.f32.mrf.mxu0
        %v2053 = vadd.f32 %v497, %v2052
        %v2054 = vpop.f32.mrf.mxu0
        %v2055 = vadd.f32 %v497, %v2054
        %2056 = vmatmul.bf16.gmra.mxu0 %v2020
        %v2057 = vpop.f32.mrf.mxu0
        %v2058 = vadd.f32 %v497, %v2057
        %v2059 = vpop.f32.mrf.mxu0
        %v2060 = vadd.f32 %v497, %v2059
        %2061 = vmatmul.bf16.gmra.mxu0 %v2021
        %v2062 = vpop.f32.mrf.mxu0
        %v2063 = vadd.f32 %v497, %v2062
        %v2064 = vpop.f32.mrf.mxu0
        %v2065 = vadd.f32 %v497, %v2064
        %2066 = vmatmul.bf16.gmra.mxu0 %v2022
        %v2067 = vpop.f32.mrf.mxu0
        %v2068 = vadd.f32 %v497, %v2067
        %v2069 = vpop.f32.mrf.mxu0
        %v2070 = vadd.f32 %v497, %v2069
        %2071 = vdwg.mxu0
        %v2072 = vmul.f32 %v2033, 0.071428575
        %v2073 = vmul.f32 %v2035, 0.071428575
        %v2074 = vmul.f32 %v2038, 0.071428575
        %v2075 = vmul.f32 %v2040, 0.071428575
        %v2076 = vmul.f32 %v2043, 0.071428575
        %v2077 = vmul.f32 %v2045, 0.071428575
        %v2078 = vmul.f32 %v2048, 0.071428575
        %v2079 = vmul.f32 %v2050, 0.071428575
        %v2080 = vmul.f32 %v2053, 0.071428575
        %v2081 = vmul.f32 %v2055, 0.071428575
        %v2082 = vmul.f32 %v2058, 0.071428575
        %v2083 = vmul.f32 %v2060, 0.071428575
        %v2084 = vmul.f32 %v2063, 0.071428575
        %v2085 = vmul.f32 %v2065, 0.071428575
        %v2086 = vmul.f32 %v2068, 0.071428575
        %v2087 = vmul.f32 %v2070, 0.071428575
        %v2088 = vadd.f32 %v1922, %v2072
        %v2089 = vadd.f32 %v1923, %v2073
        %v2090 = vadd.f32 %v1924, %v2074
        %v2091 = vadd.f32 %v1925, %v2075
        %v2092 = vadd.f32 %v1926, %v2076
        %v2093 = vadd.f32 %v1927, %v2077
        %v2094 = vadd.f32 %v1928, %v2078
        %v2095 = vadd.f32 %v1929, %v2079
        %v2096 = vadd.f32 %v1930, %v2080
        %v2097 = vadd.f32 %v1931, %v2081
        %v2098 = vadd.f32 %v1932, %v2082
        %v2099 = vadd.f32 %v1933, %v2083
        %v2100 = vadd.f32 %v1934, %v2084
        %v2101 = vadd.f32 %v1935, %v2085
        %v2102 = vadd.f32 %v1936, %v2086
        %v2103 = vadd.f32 %v1937, %v2087
        %v2104 = vpack.c.bf16 %v2089, %v2088
        %v2105 = vpack.c.bf16 %v2091, %v2090
        %v2106 = vpack.c.bf16 %v2093, %v2092
        %v2107 = vpack.c.bf16 %v2095, %v2094
        %v2108 = vpack.c.bf16 %v2097, %v2096
        %v2109 = vpack.c.bf16 %v2099, %v2098
        %v2110 = vpack.c.bf16 %v2101, %v2100
        %v2111 = vpack.c.bf16 %v2103, %v2102
        %v2113 = vperm.slane %v1939, 0
        %2115 = vmatpush.bf16.msra.mxu0 %v414
        %2116 = vmatpush.bf16.msra.mxu0 %v413
        %2117 = vmatpush.bf16.msra.mxu0 %v412
        %2118 = vmatpush.bf16.msra.mxu0 %v411
        %2119 = vmatpush.bf16.msra.mxu0 %v410
        %2120 = vmatpush.bf16.msra.mxu0 %v409
        %2121 = vmatpush.bf16.msra.mxu0 %v408
        %2122 = vmatpush.bf16.msra.mxu0 %v407
        %2123 = vmatmul.bf16.gmra.mxu0 %v2104
        %v2124 = vpop.f32.mrf.mxu0
        %v2125 = vadd.f32 %v2113, %v2124
        %v2126 = vpop.f32.mrf.mxu0
        %v2127 = vadd.f32 %v2113, %v2126
        %2128 = vmatmul.bf16.gmra.mxu0 %v2105
        %v2129 = vpop.f32.mrf.mxu0
        %v2130 = vadd.f32 %v2113, %v2129
        %v2131 = vpop.f32.mrf.mxu0
        %v2132 = vadd.f32 %v2113, %v2131
        %2133 = vmatmul.bf16.gmra.mxu0 %v2106
        %v2134 = vpop.f32.mrf.mxu0
        %v2135 = vadd.f32 %v2113, %v2134
        %v2136 = vpop.f32.mrf.mxu0
        %v2137 = vadd.f32 %v2113, %v2136
        %2138 = vmatmul.bf16.gmra.mxu0 %v2107
        %v2139 = vpop.f32.mrf.mxu0
        %v2140 = vadd.f32 %v2113, %v2139
        %v2141 = vpop.f32.mrf.mxu0
        %v2142 = vadd.f32 %v2113, %v2141
        %2143 = vmatmul.bf16.gmra.mxu0 %v2108
        %v2144 = vpop.f32.mrf.mxu0
        %v2145 = vadd.f32 %v2113, %v2144
        %v2146 = vpop.f32.mrf.mxu0
        %v2147 = vadd.f32 %v2113, %v2146
        %2148 = vmatmul.bf16.gmra.mxu0 %v2109
        %v2149 = vpop.f32.mrf.mxu0
        %v2150 = vadd.f32 %v2113, %v2149
        %v2151 = vpop.f32.mrf.mxu0
        %v2152 = vadd.f32 %v2113, %v2151
        %2153 = vmatmul.bf16.gmra.mxu0 %v2110
        %v2154 = vpop.f32.mrf.mxu0
        %v2155 = vadd.f32 %v2113, %v2154
        %v2156 = vpop.f32.mrf.mxu0
        %v2157 = vadd.f32 %v2113, %v2156
        %2158 = vmatmul.bf16.gmra.mxu0 %v2111
        %v2159 = vpop.f32.mrf.mxu0
        %v2160 = vadd.f32 %v2113, %v2159
        %v2161 = vpop.f32.mrf.mxu0
        %v2162 = vadd.f32 %v2113, %v2161
        %2163 = vdwg.mxu0
        %v2164 = vtanh.pop %v2125
        %v2165 = vtanh.pop %v2127
        %v2166 = vtanh.pop %v2130
        %v2167 = vtanh.pop %v2132
        %v2168 = vtanh.pop %v2135
        %v2169 = vtanh.pop %v2137
        %v2170 = vtanh.pop %v2140
        %v2171 = vtanh.pop %v2142
        %v2172 = vtanh.pop %v2145
        %v2173 = vtanh.pop %v2147
        %v2174 = vtanh.pop %v2150
        %v2175 = vtanh.pop %v2152
        %v2176 = vtanh.pop %v2155
        %v2177 = vtanh.pop %v2157
        %v2178 = vtanh.pop %v2160
        %v2179 = vtanh.pop %v2162
        %v2180 = vpack.c.bf16 %v2165, %v2164
        %v2181 = vpack.c.bf16 %v2167, %v2166
        %v2182 = vpack.c.bf16 %v2169, %v2168
        %v2183 = vpack.c.bf16 %v2171, %v2170
        %v2184 = vpack.c.bf16 %v2173, %v2172
        %v2185 = vpack.c.bf16 %v2175, %v2174
        %v2186 = vpack.c.bf16 %v2177, %v2176
        %v2187 = vpack.c.bf16 %v2179, %v2178
        %2188 = vmatpush.bf16.msra.mxu0 %v538
        %2189 = vmatpush.bf16.msra.mxu0 %v537
        %2190 = vmatpush.bf16.msra.mxu0 %v536
        %2191 = vmatpush.bf16.msra.mxu0 %v535
        %2192 = vmatpush.bf16.msra.mxu0 %v534
        %2193 = vmatpush.bf16.msra.mxu0 %v533
        %2194 = vmatpush.bf16.msra.mxu0 %v532
        %2195 = vmatpush.bf16.msra.mxu0 %v531
        %2196 = vmatmul.bf16.gmra.mxu0 %v2180
        %v2197 = vpop.f32.mrf.mxu0
        %v2198 = vadd.f32 %v497, %v2197
        %v2199 = vpop.f32.mrf.mxu0
        %v2200 = vadd.f32 %v497, %v2199
        %2201 = vmatmul.bf16.gmra.mxu0 %v2181
        %v2202 = vpop.f32.mrf.mxu0
        %v2203 = vadd.f32 %v497, %v2202
        %v2204 = vpop.f32.mrf.mxu0
        %v2205 = vadd.f32 %v497, %v2204
        %2206 = vmatmul.bf16.gmra.mxu0 %v2182
        %v2207 = vpop.f32.mrf.mxu0
        %v2208 = vadd.f32 %v497, %v2207
        %v2209 = vpop.f32.mrf.mxu0
        %v2210 = vadd.f32 %v497, %v2209
        %2211 = vmatmul.bf16.gmra.mxu0 %v2183
        %v2212 = vpop.f32.mrf.mxu0
        %v2213 = vadd.f32 %v497, %v2212
        %v2214 = vpop.f32.mrf.mxu0
        %v2215 = vadd.f32 %v497, %v2214
        %2216 = vmatmul.bf16.gmra.mxu0 %v2184
        %v2217 = vpop.f32.mrf.mxu0
        %v2218 = vadd.f32 %v497, %v2217
        %v2219 = vpop.f32.mrf.mxu0
        %v2220 = vadd.f32 %v497, %v2219
        %2221 = vmatmul.bf16.gmra.mxu0 %v2185
        %v2222 = vpop.f32.mrf.mxu0
        %v2223 = vadd.f32 %v497, %v2222
        %v2224 = vpop.f32.mrf.mxu0
        %v2225 = vadd.f32 %v497, %v2224
        %2226 = vmatmul.bf16.gmra.mxu0 %v2186
        %v2227 = vpop.f32.mrf.mxu0
        %v2228 = vadd.f32 %v497, %v2227
        %v2229 = vpop.f32.mrf.mxu0
        %v2230 = vadd.f32 %v497, %v2229
        %2231 = vmatmul.bf16.gmra.mxu0 %v2187
        %v2232 = vpop.f32.mrf.mxu0
        %v2233 = vadd.f32 %v497, %v2232
        %v2234 = vpop.f32.mrf.mxu0
        %v2235 = vadd.f32 %v497, %v2234
        %2236 = vdwg.mxu0
        %v2237 = vmul.f32 %v2198, 2.0
        %v2238 = vmul.f32 %v2200, 2.0
        %v2239 = vmul.f32 %v2203, 2.0
        %v2240 = vmul.f32 %v2205, 2.0
        %v2241 = vmul.f32 %v2208, 2.0
        %v2242 = vmul.f32 %v2210, 2.0
        %v2243 = vmul.f32 %v2213, 2.0
        %v2244 = vmul.f32 %v2215, 2.0
        %v2245 = vmul.f32 %v2218, 2.0
        %v2246 = vmul.f32 %v2220, 2.0
        %v2247 = vmul.f32 %v2223, 2.0
        %v2248 = vmul.f32 %v2225, 2.0
        %v2249 = vmul.f32 %v2228, 2.0
        %v2250 = vmul.f32 %v2230, 2.0
        %v2251 = vmul.f32 %v2233, 2.0
        %v2252 = vmul.f32 %v2235, 2.0
        %v2253 = vadd.f32 %v2033, %v2237
        %v2254 = vadd.f32 %v2035, %v2238
        %v2255 = vadd.f32 %v2038, %v2239
        %v2256 = vadd.f32 %v2040, %v2240
        %v2257 = vadd.f32 %v2043, %v2241
        %v2258 = vadd.f32 %v2045, %v2242
        %v2259 = vadd.f32 %v2048, %v2243
        %v2260 = vadd.f32 %v2050, %v2244
        %v2261 = vadd.f32 %v2053, %v2245
        %v2262 = vadd.f32 %v2055, %v2246
        %v2263 = vadd.f32 %v2058, %v2247
        %v2264 = vadd.f32 %v2060, %v2248
        %v2265 = vadd.f32 %v2063, %v2249
        %v2266 = vadd.f32 %v2065, %v2250
        %v2267 = vadd.f32 %v2068, %v2251
        %v2268 = vadd.f32 %v2070, %v2252
        %v2269 = vmul.f32 %v2198, 0.071428575
        %v2270 = vmul.f32 %v2200, 0.071428575
        %v2271 = vmul.f32 %v2203, 0.071428575
        %v2272 = vmul.f32 %v2205, 0.071428575
        %v2273 = vmul.f32 %v2208, 0.071428575
        %v2274 = vmul.f32 %v2210, 0.071428575
        %v2275 = vmul.f32 %v2213, 0.071428575
        %v2276 = vmul.f32 %v2215, 0.071428575
        %v2277 = vmul.f32 %v2218, 0.071428575
        %v2278 = vmul.f32 %v2220, 0.071428575
        %v2279 = vmul.f32 %v2223, 0.071428575
        %v2280 = vmul.f32 %v2225, 0.071428575
        %v2281 = vmul.f32 %v2228, 0.071428575
        %v2282 = vmul.f32 %v2230, 0.071428575
        %v2283 = vmul.f32 %v2233, 0.071428575
        %v2284 = vmul.f32 %v2235, 0.071428575
        %v2285 = vadd.f32 %v1922, %v2269
        %v2286 = vadd.f32 %v1923, %v2270
        %v2287 = vadd.f32 %v1924, %v2271
        %v2288 = vadd.f32 %v1925, %v2272
        %v2289 = vadd.f32 %v1926, %v2273
        %v2290 = vadd.f32 %v1927, %v2274
        %v2291 = vadd.f32 %v1928, %v2275
        %v2292 = vadd.f32 %v1929, %v2276
        %v2293 = vadd.f32 %v1930, %v2277
        %v2294 = vadd.f32 %v1931, %v2278
        %v2295 = vadd.f32 %v1932, %v2279
        %v2296 = vadd.f32 %v1933, %v2280
        %v2297 = vadd.f32 %v1934, %v2281
        %v2298 = vadd.f32 %v1935, %v2282
        %v2299 = vadd.f32 %v1936, %v2283
        %v2300 = vadd.f32 %v1937, %v2284
        %v2301 = vpack.c.bf16 %v2286, %v2285
        %v2302 = vpack.c.bf16 %v2288, %v2287
        %v2303 = vpack.c.bf16 %v2290, %v2289
        %v2304 = vpack.c.bf16 %v2292, %v2291
        %v2305 = vpack.c.bf16 %v2294, %v2293
        %v2306 = vpack.c.bf16 %v2296, %v2295
        %v2307 = vpack.c.bf16 %v2298, %v2297
        %v2308 = vpack.c.bf16 %v2300, %v2299
        %2309 = vmatpush.bf16.msra.mxu0 %v414
        %2310 = vmatpush.bf16.msra.mxu0 %v413
        %2311 = vmatpush.bf16.msra.mxu0 %v412
        %2312 = vmatpush.bf16.msra.mxu0 %v411
        %2313 = vmatpush.bf16.msra.mxu0 %v410
        %2314 = vmatpush.bf16.msra.mxu0 %v409
        %2315 = vmatpush.bf16.msra.mxu0 %v408
        %2316 = vmatpush.bf16.msra.mxu0 %v407
        %2317 = vmatmul.bf16.gmra.mxu0 %v2301
        %v2318 = vpop.f32.mrf.mxu0
        %v2319 = vadd.f32 %v2113, %v2318
        %v2320 = vpop.f32.mrf.mxu0
        %v2321 = vadd.f32 %v2113, %v2320
        %2322 = vmatmul.bf16.gmra.mxu0 %v2302
        %v2323 = vpop.f32.mrf.mxu0
        %v2324 = vadd.f32 %v2113, %v2323
        %v2325 = vpop.f32.mrf.mxu0
        %v2326 = vadd.f32 %v2113, %v2325
        %2327 = vmatmul.bf16.gmra.mxu0 %v2303
        %v2328 = vpop.f32.mrf.mxu0
        %v2329 = vadd.f32 %v2113, %v2328
        %v2330 = vpop.f32.mrf.mxu0
        %v2331 = vadd.f32 %v2113, %v2330
        %2332 = vmatmul.bf16.gmra.mxu0 %v2304
        %v2333 = vpop.f32.mrf.mxu0
        %v2334 = vadd.f32 %v2113, %v2333
        %v2335 = vpop.f32.mrf.mxu0
        %v2336 = vadd.f32 %v2113, %v2335
        %2337 = vmatmul.bf16.gmra.mxu0 %v2305
        %v2338 = vpop.f32.mrf.mxu0
        %v2339 = vadd.f32 %v2113, %v2338
        %v2340 = vpop.f32.mrf.mxu0
        %v2341 = vadd.f32 %v2113, %v2340
        %2342 = vmatmul.bf16.gmra.mxu0 %v2306
        %v2343 = vpop.f32.mrf.mxu0
        %v2344 = vadd.f32 %v2113, %v2343
        %v2345 = vpop.f32.mrf.mxu0
        %v2346 = vadd.f32 %v2113, %v2345
        %2347 = vmatmul.bf16.gmra.mxu0 %v2307
        %v2348 = vpop.f32.mrf.mxu0
        %v2349 = vadd.f32 %v2113, %v2348
        %v2350 = vpop.f32.mrf.mxu0
        %v2351 = vadd.f32 %v2113, %v2350
        %2352 = vmatmul.bf16.gmra.mxu0 %v2308
        %v2353 = vpop.f32.mrf.mxu0
        %v2354 = vadd.f32 %v2113, %v2353
        %v2355 = vpop.f32.mrf.mxu0
        %v2356 = vadd.f32 %v2113, %v2355
        %2357 = vdwg.mxu0
        %v2358 = vtanh.pop %v2319
        %v2359 = vtanh.pop %v2321
        %v2360 = vtanh.pop %v2324
        %v2361 = vtanh.pop %v2326
        %v2362 = vtanh.pop %v2329
        %v2363 = vtanh.pop %v2331
        %v2364 = vtanh.pop %v2334
        %v2365 = vtanh.pop %v2336
        %v2366 = vtanh.pop %v2339
        %v2367 = vtanh.pop %v2341
        %v2368 = vtanh.pop %v2344
        %v2369 = vtanh.pop %v2346
        %v2370 = vtanh.pop %v2349
        %v2371 = vtanh.pop %v2351
        %v2372 = vtanh.pop %v2354
        %v2373 = vtanh.pop %v2356
        %v2374 = vpack.c.bf16 %v2359, %v2358
        %v2375 = vpack.c.bf16 %v2361, %v2360
        %v2376 = vpack.c.bf16 %v2363, %v2362
        %v2377 = vpack.c.bf16 %v2365, %v2364
        %v2378 = vpack.c.bf16 %v2367, %v2366
        %v2379 = vpack.c.bf16 %v2369, %v2368
        %v2380 = vpack.c.bf16 %v2371, %v2370
        %v2381 = vpack.c.bf16 %v2373, %v2372
        %2382 = vmatpush.bf16.msra.mxu0 %v538
        %2383 = vmatpush.bf16.msra.mxu0 %v537
        %2384 = vmatpush.bf16.msra.mxu0 %v536
        %2385 = vmatpush.bf16.msra.mxu0 %v535
        %2386 = vmatpush.bf16.msra.mxu0 %v534
        %2387 = vmatpush.bf16.msra.mxu0 %v533
        %2388 = vmatpush.bf16.msra.mxu0 %v532
        %2389 = vmatpush.bf16.msra.mxu0 %v531
        %2390 = vmatmul.bf16.gmra.mxu0 %v2374
        %v2391 = vpop.f32.mrf.mxu0
        %v2392 = vadd.f32 %v497, %v2391
        %v2393 = vpop.f32.mrf.mxu0
        %v2394 = vadd.f32 %v497, %v2393
        %2395 = vmatmul.bf16.gmra.mxu0 %v2375
        %v2396 = vpop.f32.mrf.mxu0
        %v2397 = vadd.f32 %v497, %v2396
        %v2398 = vpop.f32.mrf.mxu0
        %v2399 = vadd.f32 %v497, %v2398
        %2400 = vmatmul.bf16.gmra.mxu0 %v2376
        %v2401 = vpop.f32.mrf.mxu0
        %v2402 = vadd.f32 %v497, %v2401
        %v2403 = vpop.f32.mrf.mxu0
        %v2404 = vadd.f32 %v497, %v2403
        %2405 = vmatmul.bf16.gmra.mxu0 %v2377
        %v2406 = vpop.f32.mrf.mxu0
        %v2407 = vadd.f32 %v497, %v2406
        %v2408 = vpop.f32.mrf.mxu0
        %v2409 = vadd.f32 %v497, %v2408
        %2410 = vmatmul.bf16.gmra.mxu0 %v2378
        %v2411 = vpop.f32.mrf.mxu0
        %v2412 = vadd.f32 %v497, %v2411
        %v2413 = vpop.f32.mrf.mxu0
        %v2414 = vadd.f32 %v497, %v2413
        %2415 = vmatmul.bf16.gmra.mxu0 %v2379
        %v2416 = vpop.f32.mrf.mxu0
        %v2417 = vadd.f32 %v497, %v2416
        %v2418 = vpop.f32.mrf.mxu0
        %v2419 = vadd.f32 %v497, %v2418
        %2420 = vmatmul.bf16.gmra.mxu0 %v2380
        %v2421 = vpop.f32.mrf.mxu0
        %v2422 = vadd.f32 %v497, %v2421
        %v2423 = vpop.f32.mrf.mxu0
        %v2424 = vadd.f32 %v497, %v2423
        %2425 = vmatmul.bf16.gmra.mxu0 %v2381
        %v2426 = vpop.f32.mrf.mxu0
        %v2427 = vadd.f32 %v497, %v2426
        %v2428 = vpop.f32.mrf.mxu0
        %v2429 = vadd.f32 %v497, %v2428
        %2430 = vdwg.mxu0
        %v2431 = vmul.f32 %v2392, 2.0
        %v2432 = vmul.f32 %v2394, 2.0
        %v2433 = vmul.f32 %v2397, 2.0
        %v2434 = vmul.f32 %v2399, 2.0
        %v2435 = vmul.f32 %v2402, 2.0
        %v2436 = vmul.f32 %v2404, 2.0
        %v2437 = vmul.f32 %v2407, 2.0
        %v2438 = vmul.f32 %v2409, 2.0
        %v2439 = vmul.f32 %v2412, 2.0
        %v2440 = vmul.f32 %v2414, 2.0
        %v2441 = vmul.f32 %v2417, 2.0
        %v2442 = vmul.f32 %v2419, 2.0
        %v2443 = vmul.f32 %v2422, 2.0
        %v2444 = vmul.f32 %v2424, 2.0
        %v2445 = vmul.f32 %v2427, 2.0
        %v2446 = vmul.f32 %v2429, 2.0
        %v2447 = vadd.f32 %v2253, %v2431
        %v2448 = vadd.f32 %v2254, %v2432
        %v2449 = vadd.f32 %v2255, %v2433
        %v2450 = vadd.f32 %v2256, %v2434
        %v2451 = vadd.f32 %v2257, %v2435
        %v2452 = vadd.f32 %v2258, %v2436
        %v2453 = vadd.f32 %v2259, %v2437
        %v2454 = vadd.f32 %v2260, %v2438
        %v2455 = vadd.f32 %v2261, %v2439
        %v2456 = vadd.f32 %v2262, %v2440
        %v2457 = vadd.f32 %v2263, %v2441
        %v2458 = vadd.f32 %v2264, %v2442
        %v2459 = vadd.f32 %v2265, %v2443
        %v2460 = vadd.f32 %v2266, %v2444
        %v2461 = vadd.f32 %v2267, %v2445
        %v2462 = vadd.f32 %v2268, %v2446
        %v2463 = vmul.f32 %v2392, 0.14285715
        %v2464 = vmul.f32 %v2394, 0.14285715
        %v2465 = vmul.f32 %v2397, 0.14285715
        %v2466 = vmul.f32 %v2399, 0.14285715
        %v2467 = vmul.f32 %v2402, 0.14285715
        %v2468 = vmul.f32 %v2404, 0.14285715
        %v2469 = vmul.f32 %v2407, 0.14285715
        %v2470 = vmul.f32 %v2409, 0.14285715
        %v2471 = vmul.f32 %v2412, 0.14285715
        %v2472 = vmul.f32 %v2414, 0.14285715
        %v2473 = vmul.f32 %v2417, 0.14285715
        %v2474 = vmul.f32 %v2419, 0.14285715
        %v2475 = vmul.f32 %v2422, 0.14285715
        %v2476 = vmul.f32 %v2424, 0.14285715
        %v2477 = vmul.f32 %v2427, 0.14285715
        %v2478 = vmul.f32 %v2429, 0.14285715
        %v2479 = vadd.f32 %v1922, %v2463
        %v2480 = vadd.f32 %v1923, %v2464
        %v2481 = vadd.f32 %v1924, %v2465
        %v2482 = vadd.f32 %v1925, %v2466
        %v2483 = vadd.f32 %v1926, %v2467
        %v2484 = vadd.f32 %v1927, %v2468
        %v2485 = vadd.f32 %v1928, %v2469
        %v2486 = vadd.f32 %v1929, %v2470
        %v2487 = vadd.f32 %v1930, %v2471
        %v2488 = vadd.f32 %v1931, %v2472
        %v2489 = vadd.f32 %v1932, %v2473
        %v2490 = vadd.f32 %v1933, %v2474
        %v2491 = vadd.f32 %v1934, %v2475
        %v2492 = vadd.f32 %v1935, %v2476
        %v2493 = vadd.f32 %v1936, %v2477
        %v2494 = vadd.f32 %v1937, %v2478
        %v2495 = vpack.c.bf16 %v2480, %v2479
        %v2496 = vpack.c.bf16 %v2482, %v2481
        %v2497 = vpack.c.bf16 %v2484, %v2483
        %v2498 = vpack.c.bf16 %v2486, %v2485
        %v2499 = vpack.c.bf16 %v2488, %v2487
        %v2500 = vpack.c.bf16 %v2490, %v2489
        %v2501 = vpack.c.bf16 %v2492, %v2491
        %v2502 = vpack.c.bf16 %v2494, %v2493
        %v2504 = vperm.slane %v1941, 0
        %2506 = vmatpush.bf16.msra.mxu0 %v414
        %2507 = vmatpush.bf16.msra.mxu0 %v413
        %2508 = vmatpush.bf16.msra.mxu0 %v412
        %2509 = vmatpush.bf16.msra.mxu0 %v411
        %2510 = vmatpush.bf16.msra.mxu0 %v410
        %2511 = vmatpush.bf16.msra.mxu0 %v409
        %2512 = vmatpush.bf16.msra.mxu0 %v408
        %2513 = vmatpush.bf16.msra.mxu0 %v407
        %2514 = vmatmul.bf16.gmra.mxu0 %v2495
        %v2515 = vpop.f32.mrf.mxu0
        %v2516 = vadd.f32 %v2504, %v2515
        %v2517 = vpop.f32.mrf.mxu0
        %v2518 = vadd.f32 %v2504, %v2517
        %2519 = vmatmul.bf16.gmra.mxu0 %v2496
        %v2520 = vpop.f32.mrf.mxu0
        %v2521 = vadd.f32 %v2504, %v2520
        %v2522 = vpop.f32.mrf.mxu0
        %v2523 = vadd.f32 %v2504, %v2522
        %2524 = vmatmul.bf16.gmra.mxu0 %v2497
        %v2525 = vpop.f32.mrf.mxu0
        %v2526 = vadd.f32 %v2504, %v2525
        %v2527 = vpop.f32.mrf.mxu0
        %v2528 = vadd.f32 %v2504, %v2527
        %2529 = vmatmul.bf16.gmra.mxu0 %v2498
        %v2530 = vpop.f32.mrf.mxu0
        %v2531 = vadd.f32 %v2504, %v2530
        %v2532 = vpop.f32.mrf.mxu0
        %v2533 = vadd.f32 %v2504, %v2532
        %2534 = vmatmul.bf16.gmra.mxu0 %v2499
        %v2535 = vpop.f32.mrf.mxu0
        %v2536 = vadd.f32 %v2504, %v2535
        %v2537 = vpop.f32.mrf.mxu0
        %v2538 = vadd.f32 %v2504, %v2537
        %2539 = vmatmul.bf16.gmra.mxu0 %v2500
        %v2540 = vpop.f32.mrf.mxu0
        %v2541 = vadd.f32 %v2504, %v2540
        %v2542 = vpop.f32.mrf.mxu0
        %v2543 = vadd.f32 %v2504, %v2542
        %2544 = vmatmul.bf16.gmra.mxu0 %v2501
        %v2545 = vpop.f32.mrf.mxu0
        %v2546 = vadd.f32 %v2504, %v2545
        %v2547 = vpop.f32.mrf.mxu0
        %v2548 = vadd.f32 %v2504, %v2547
        %2549 = vmatmul.bf16.gmra.mxu0 %v2502
        %v2550 = vpop.f32.mrf.mxu0
        %v2551 = vadd.f32 %v2504, %v2550
        %v2552 = vpop.f32.mrf.mxu0
        %v2553 = vadd.f32 %v2504, %v2552
        %2554 = vdwg.mxu0
        %v2555 = vtanh.pop %v2516
        %v2556 = vtanh.pop %v2518
        %v2557 = vtanh.pop %v2521
        %v2558 = vtanh.pop %v2523
        %v2559 = vtanh.pop %v2526
        %v2560 = vtanh.pop %v2528
        %v2561 = vtanh.pop %v2531
        %v2562 = vtanh.pop %v2533
        %v2563 = vtanh.pop %v2536
        %v2564 = vtanh.pop %v2538
        %v2565 = vtanh.pop %v2541
        %v2566 = vtanh.pop %v2543
        %v2567 = vtanh.pop %v2546
        %v2568 = vtanh.pop %v2548
        %v2569 = vtanh.pop %v2551
        %v2570 = vtanh.pop %v2553
        %v2571 = vpack.c.bf16 %v2556, %v2555
        %v2572 = vpack.c.bf16 %v2558, %v2557
        %v2573 = vpack.c.bf16 %v2560, %v2559
        %v2574 = vpack.c.bf16 %v2562, %v2561
        %v2575 = vpack.c.bf16 %v2564, %v2563
        %v2576 = vpack.c.bf16 %v2566, %v2565
        %v2577 = vpack.c.bf16 %v2568, %v2567
        %v2578 = vpack.c.bf16 %v2570, %v2569
        %2579 = vmatpush.bf16.msra.mxu0 %v538
        %2580 = vmatpush.bf16.msra.mxu0 %v537
        %2581 = vmatpush.bf16.msra.mxu0 %v536
        %2582 = vmatpush.bf16.msra.mxu0 %v535
        %2583 = vmatpush.bf16.msra.mxu0 %v534
        %2584 = vmatpush.bf16.msra.mxu0 %v533
        %2585 = vmatpush.bf16.msra.mxu0 %v532
        %2586 = vmatpush.bf16.msra.mxu0 %v531
        %2587 = vmatmul.bf16.gmra.mxu0 %v2571
        %v2588 = vpop.f32.mrf.mxu0
        %v2589 = vadd.f32 %v497, %v2588
        %v2590 = vpop.f32.mrf.mxu0
        %v2591 = vadd.f32 %v497, %v2590
        %2592 = vmatmul.bf16.gmra.mxu0 %v2572
        %v2593 = vpop.f32.mrf.mxu0
        %v2594 = vadd.f32 %v497, %v2593
        %v2595 = vpop.f32.mrf.mxu0
        %v2596 = vadd.f32 %v497, %v2595
        %2597 = vmatmul.bf16.gmra.mxu0 %v2573
        %v2598 = vpop.f32.mrf.mxu0
        %v2599 = vadd.f32 %v497, %v2598
        %v2600 = vpop.f32.mrf.mxu0
        %v2601 = vadd.f32 %v497, %v2600
        %2602 = vmatmul.bf16.gmra.mxu0 %v2574
        %v2603 = vpop.f32.mrf.mxu0
        %v2604 = vadd.f32 %v497, %v2603
        %v2605 = vpop.f32.mrf.mxu0
        %v2606 = vadd.f32 %v497, %v2605
        %2607 = vmatmul.bf16.gmra.mxu0 %v2575
        %v2608 = vpop.f32.mrf.mxu0
        %v2609 = vadd.f32 %v497, %v2608
        %v2610 = vpop.f32.mrf.mxu0
        %v2611 = vadd.f32 %v497, %v2610
        %2612 = vmatmul.bf16.gmra.mxu0 %v2576
        %v2613 = vpop.f32.mrf.mxu0
        %v2614 = vadd.f32 %v497, %v2613
        %v2615 = vpop.f32.mrf.mxu0
        %v2616 = vadd.f32 %v497, %v2615
        %2617 = vmatmul.bf16.gmra.mxu0 %v2577
        %v2618 = vpop.f32.mrf.mxu0
        %v2619 = vadd.f32 %v497, %v2618
        %v2620 = vpop.f32.mrf.mxu0
        %v2621 = vadd.f32 %v497, %v2620
        %2622 = vmatmul.bf16.gmra.mxu0 %v2578
        %v2623 = vpop.f32.mrf.mxu0
        %v2624 = vadd.f32 %v497, %v2623
        %v2625 = vpop.f32.mrf.mxu0
        %v2626 = vadd.f32 %v497, %v2625
        %2627 = vdwg.mxu0
        %v2628 = vadd.f32 %v2447, %v2589
        %v2629 = vadd.f32 %v2448, %v2591
        %v2630 = vadd.f32 %v2449, %v2594
        %v2631 = vadd.f32 %v2450, %v2596
        %v2632 = vadd.f32 %v2451, %v2599
        %v2633 = vadd.f32 %v2452, %v2601
        %v2634 = vadd.f32 %v2453, %v2604
        %v2635 = vadd.f32 %v2454, %v2606
        %v2636 = vadd.f32 %v2455, %v2609
        %v2637 = vadd.f32 %v2456, %v2611
        %v2638 = vadd.f32 %v2457, %v2614
        %v2639 = vadd.f32 %v2458, %v2616
        %v2640 = vadd.f32 %v2459, %v2619
        %v2641 = vadd.f32 %v2460, %v2621
        %v2642 = vadd.f32 %v2461, %v2624
        %v2643 = vadd.f32 %v2462, %v2626
        %v2644 = vmul.f32 %v2628, 0.023809524
        %v2645 = vmul.f32 %v2629, 0.023809524
        %v2646 = vmul.f32 %v2630, 0.023809524
        %v2647 = vmul.f32 %v2631, 0.023809524
        %v2648 = vmul.f32 %v2632, 0.023809524
        %v2649 = vmul.f32 %v2633, 0.023809524
        %v2650 = vmul.f32 %v2634, 0.023809524
        %v2651 = vmul.f32 %v2635, 0.023809524
        %v2652 = vmul.f32 %v2636, 0.023809524
        %v2653 = vmul.f32 %v2637, 0.023809524
        %v2654 = vmul.f32 %v2638, 0.023809524
        %v2655 = vmul.f32 %v2639, 0.023809524
        %v2656 = vmul.f32 %v2640, 0.023809524
        %v2657 = vmul.f32 %v2641, 0.023809524
        %v2658 = vmul.f32 %v2642, 0.023809524
        %v2659 = vmul.f32 %v2643, 0.023809524
        %v2660 = vadd.f32 %v1922, %v2644
        %v2661 = vadd.f32 %v1923, %v2645
        %v2662 = vadd.f32 %v1924, %v2646
        %v2663 = vadd.f32 %v1925, %v2647
        %v2664 = vadd.f32 %v1926, %v2648
        %v2665 = vadd.f32 %v1927, %v2649
        %v2666 = vadd.f32 %v1928, %v2650
        %v2667 = vadd.f32 %v1929, %v2651
        %v2668 = vadd.f32 %v1930, %v2652
        %v2669 = vadd.f32 %v1931, %v2653
        %v2670 = vadd.f32 %v1932, %v2654
        %v2671 = vadd.f32 %v1933, %v2655
        %v2672 = vadd.f32 %v1934, %v2656
        %v2673 = vadd.f32 %v1935, %v2657
        %v2674 = vadd.f32 %v1936, %v2658
        %v2675 = vadd.f32 %v1937, %v2659
        %v2676 = vmul.f32 %v340, 0.50000006
        %v2677 = vadd.f32 %v339, %v2676
        %v2678 = vmul.f32 %v340, 0.5714286
        %v2679 = vadd.f32 %v339, %v2678
        %v2680 = vpack.c.bf16 %v2661, %v2660
        %v2681 = vpack.c.bf16 %v2663, %v2662
        %v2682 = vpack.c.bf16 %v2665, %v2664
        %v2683 = vpack.c.bf16 %v2667, %v2666
        %v2684 = vpack.c.bf16 %v2669, %v2668
        %v2685 = vpack.c.bf16 %v2671, %v2670
        %v2686 = vpack.c.bf16 %v2673, %v2672
        %v2687 = vpack.c.bf16 %v2675, %v2674
        %2688 = vmatpush.bf16.msra.mxu0 %v414
        %2689 = vmatpush.bf16.msra.mxu0 %v413
        %2690 = vmatpush.bf16.msra.mxu0 %v412
        %2691 = vmatpush.bf16.msra.mxu0 %v411
        %2692 = vmatpush.bf16.msra.mxu0 %v410
        %2693 = vmatpush.bf16.msra.mxu0 %v409
        %2694 = vmatpush.bf16.msra.mxu0 %v408
        %2695 = vmatpush.bf16.msra.mxu0 %v407
        %2696 = vmatmul.bf16.gmra.mxu0 %v2680
        %v2697 = vpop.f32.mrf.mxu0
        %v2698 = vadd.f32 %v2504, %v2697
        %v2699 = vpop.f32.mrf.mxu0
        %v2700 = vadd.f32 %v2504, %v2699
        %2701 = vmatmul.bf16.gmra.mxu0 %v2681
        %v2702 = vpop.f32.mrf.mxu0
        %v2703 = vadd.f32 %v2504, %v2702
        %v2704 = vpop.f32.mrf.mxu0
        %v2705 = vadd.f32 %v2504, %v2704
        %2706 = vmatmul.bf16.gmra.mxu0 %v2682
        %v2707 = vpop.f32.mrf.mxu0
        %v2708 = vadd.f32 %v2504, %v2707
        %v2709 = vpop.f32.mrf.mxu0
        %v2710 = vadd.f32 %v2504, %v2709
        %2711 = vmatmul.bf16.gmra.mxu0 %v2683
        %v2712 = vpop.f32.mrf.mxu0
        %v2713 = vadd.f32 %v2504, %v2712
        %v2714 = vpop.f32.mrf.mxu0
        %v2715 = vadd.f32 %v2504, %v2714
        %2716 = vmatmul.bf16.gmra.mxu0 %v2684
        %v2717 = vpop.f32.mrf.mxu0
        %v2718 = vadd.f32 %v2504, %v2717
        %v2719 = vpop.f32.mrf.mxu0
        %v2720 = vadd.f32 %v2504, %v2719
        %2721 = vmatmul.bf16.gmra.mxu0 %v2685
        %v2722 = vpop.f32.mrf.mxu0
        %v2723 = vadd.f32 %v2504, %v2722
        %v2724 = vpop.f32.mrf.mxu0
        %v2725 = vadd.f32 %v2504, %v2724
        %2726 = vmatmul.bf16.gmra.mxu0 %v2686
        %v2727 = vpop.f32.mrf.mxu0
        %v2728 = vadd.f32 %v2504, %v2727
        %v2729 = vpop.f32.mrf.mxu0
        %v2730 = vadd.f32 %v2504, %v2729
        %2731 = vmatmul.bf16.gmra.mxu0 %v2687
        %v2732 = vpop.f32.mrf.mxu0
        %v2733 = vadd.f32 %v2504, %v2732
        %v2734 = vpop.f32.mrf.mxu0
        %v2735 = vadd.f32 %v2504, %v2734
        %2736 = vdwg.mxu0
        %v2737 = vtanh.pop %v2698
        %v2738 = vtanh.pop %v2700
        %v2739 = vtanh.pop %v2703
        %v2740 = vtanh.pop %v2705
        %v2741 = vtanh.pop %v2708
        %v2742 = vtanh.pop %v2710
        %v2743 = vtanh.pop %v2713
        %v2744 = vtanh.pop %v2715
        %v2745 = vtanh.pop %v2718
        %v2746 = vtanh.pop %v2720
        %v2747 = vtanh.pop %v2723
        %v2748 = vtanh.pop %v2725
        %v2749 = vtanh.pop %v2728
        %v2750 = vtanh.pop %v2730
        %v2751 = vtanh.pop %v2733
        %v2752 = vtanh.pop %v2735
        %v2753 = vpack.c.bf16 %v2738, %v2737
        %v2754 = vpack.c.bf16 %v2740, %v2739
        %v2755 = vpack.c.bf16 %v2742, %v2741
        %v2756 = vpack.c.bf16 %v2744, %v2743
        %v2757 = vpack.c.bf16 %v2746, %v2745
        %v2758 = vpack.c.bf16 %v2748, %v2747
        %v2759 = vpack.c.bf16 %v2750, %v2749
        %v2760 = vpack.c.bf16 %v2752, %v2751
        %2761 = vmatpush.bf16.msra.mxu0 %v538
        %2762 = vmatpush.bf16.msra.mxu0 %v537
        %2763 = vmatpush.bf16.msra.mxu0 %v536
        %2764 = vmatpush.bf16.msra.mxu0 %v535
        %2765 = vmatpush.bf16.msra.mxu0 %v534
        %2766 = vmatpush.bf16.msra.mxu0 %v533
        %2767 = vmatpush.bf16.msra.mxu0 %v532
        %2768 = vmatpush.bf16.msra.mxu0 %v531
        %2769 = vmatmul.bf16.gmra.mxu0 %v2753
        %v2770 = vpop.f32.mrf.mxu0
        %v2771 = vadd.f32 %v497, %v2770
        %v2772 = vpop.f32.mrf.mxu0
        %v2773 = vadd.f32 %v497, %v2772
        %2774 = vmatmul.bf16.gmra.mxu0 %v2754
        %v2775 = vpop.f32.mrf.mxu0
        %v2776 = vadd.f32 %v497, %v2775
        %v2777 = vpop.f32.mrf.mxu0
        %v2778 = vadd.f32 %v497, %v2777
        %2779 = vmatmul.bf16.gmra.mxu0 %v2755
        %v2780 = vpop.f32.mrf.mxu0
        %v2781 = vadd.f32 %v497, %v2780
        %v2782 = vpop.f32.mrf.mxu0
        %v2783 = vadd.f32 %v497, %v2782
        %2784 = vmatmul.bf16.gmra.mxu0 %v2756
        %v2785 = vpop.f32.mrf.mxu0
        %v2786 = vadd.f32 %v497, %v2785
        %v2787 = vpop.f32.mrf.mxu0
        %v2788 = vadd.f32 %v497, %v2787
        %2789 = vmatmul.bf16.gmra.mxu0 %v2757
        %v2790 = vpop.f32.mrf.mxu0
        %v2791 = vadd.f32 %v497, %v2790
        %v2792 = vpop.f32.mrf.mxu0
        %v2793 = vadd.f32 %v497, %v2792
        %2794 = vmatmul.bf16.gmra.mxu0 %v2758
        %v2795 = vpop.f32.mrf.mxu0
        %v2796 = vadd.f32 %v497, %v2795
        %v2797 = vpop.f32.mrf.mxu0
        %v2798 = vadd.f32 %v497, %v2797
        %2799 = vmatmul.bf16.gmra.mxu0 %v2759
        %v2800 = vpop.f32.mrf.mxu0
        %v2801 = vadd.f32 %v497, %v2800
        %v2802 = vpop.f32.mrf.mxu0
        %v2803 = vadd.f32 %v497, %v2802
        %2804 = vmatmul.bf16.gmra.mxu0 %v2760
        %v2805 = vpop.f32.mrf.mxu0
        %v2806 = vadd.f32 %v497, %v2805
        %v2807 = vpop.f32.mrf.mxu0
        %v2808 = vadd.f32 %v497, %v2807
        %2809 = vdwg.mxu0
        %v2810 = vmul.f32 %v2771, 0.071428575
        %v2811 = vmul.f32 %v2773, 0.071428575
        %v2812 = vmul.f32 %v2776, 0.071428575
        %v2813 = vmul.f32 %v2778, 0.071428575
        %v2814 = vmul.f32 %v2781, 0.071428575
        %v2815 = vmul.f32 %v2783, 0.071428575
        %v2816 = vmul.f32 %v2786, 0.071428575
        %v2817 = vmul.f32 %v2788, 0.071428575
        %v2818 = vmul.f32 %v2791, 0.071428575
        %v2819 = vmul.f32 %v2793, 0.071428575
        %v2820 = vmul.f32 %v2796, 0.071428575
        %v2821 = vmul.f32 %v2798, 0.071428575
        %v2822 = vmul.f32 %v2801, 0.071428575
        %v2823 = vmul.f32 %v2803, 0.071428575
        %v2824 = vmul.f32 %v2806, 0.071428575
        %v2825 = vmul.f32 %v2808, 0.071428575
        %v2826 = vadd.f32 %v2660, %v2810
        %v2827 = vadd.f32 %v2661, %v2811
        %v2828 = vadd.f32 %v2662, %v2812
        %v2829 = vadd.f32 %v2663, %v2813
        %v2830 = vadd.f32 %v2664, %v2814
        %v2831 = vadd.f32 %v2665, %v2815
        %v2832 = vadd.f32 %v2666, %v2816
        %v2833 = vadd.f32 %v2667, %v2817
        %v2834 = vadd.f32 %v2668, %v2818
        %v2835 = vadd.f32 %v2669, %v2819
        %v2836 = vadd.f32 %v2670, %v2820
        %v2837 = vadd.f32 %v2671, %v2821
        %v2838 = vadd.f32 %v2672, %v2822
        %v2839 = vadd.f32 %v2673, %v2823
        %v2840 = vadd.f32 %v2674, %v2824
        %v2841 = vadd.f32 %v2675, %v2825
        %v2842 = vpack.c.bf16 %v2827, %v2826
        %v2843 = vpack.c.bf16 %v2829, %v2828
        %v2844 = vpack.c.bf16 %v2831, %v2830
        %v2845 = vpack.c.bf16 %v2833, %v2832
        %v2846 = vpack.c.bf16 %v2835, %v2834
        %v2847 = vpack.c.bf16 %v2837, %v2836
        %v2848 = vpack.c.bf16 %v2839, %v2838
        %v2849 = vpack.c.bf16 %v2841, %v2840
        %v2851 = vperm.slane %v2677, 0
        %2853 = vmatpush.bf16.msra.mxu0 %v414
        %2854 = vmatpush.bf16.msra.mxu0 %v413
        %2855 = vmatpush.bf16.msra.mxu0 %v412
        %2856 = vmatpush.bf16.msra.mxu0 %v411
        %2857 = vmatpush.bf16.msra.mxu0 %v410
        %2858 = vmatpush.bf16.msra.mxu0 %v409
        %2859 = vmatpush.bf16.msra.mxu0 %v408
        %2860 = vmatpush.bf16.msra.mxu0 %v407
        %2861 = vmatmul.bf16.gmra.mxu0 %v2842
        %v2862 = vpop.f32.mrf.mxu0
        %v2863 = vadd.f32 %v2851, %v2862
        %v2864 = vpop.f32.mrf.mxu0
        %v2865 = vadd.f32 %v2851, %v2864
        %2866 = vmatmul.bf16.gmra.mxu0 %v2843
        %v2867 = vpop.f32.mrf.mxu0
        %v2868 = vadd.f32 %v2851, %v2867
        %v2869 = vpop.f32.mrf.mxu0
        %v2870 = vadd.f32 %v2851, %v2869
        %2871 = vmatmul.bf16.gmra.mxu0 %v2844
        %v2872 = vpop.f32.mrf.mxu0
        %v2873 = vadd.f32 %v2851, %v2872
        %v2874 = vpop.f32.mrf.mxu0
        %v2875 = vadd.f32 %v2851, %v2874
        %2876 = vmatmul.bf16.gmra.mxu0 %v2845
        %v2877 = vpop.f32.mrf.mxu0
        %v2878 = vadd.f32 %v2851, %v2877
        %v2879 = vpop.f32.mrf.mxu0
        %v2880 = vadd.f32 %v2851, %v2879
        %2881 = vmatmul.bf16.gmra.mxu0 %v2846
        %v2882 = vpop.f32.mrf.mxu0
        %v2883 = vadd.f32 %v2851, %v2882
        %v2884 = vpop.f32.mrf.mxu0
        %v2885 = vadd.f32 %v2851, %v2884
        %2886 = vmatmul.bf16.gmra.mxu0 %v2847
        %v2887 = vpop.f32.mrf.mxu0
        %v2888 = vadd.f32 %v2851, %v2887
        %v2889 = vpop.f32.mrf.mxu0
        %v2890 = vadd.f32 %v2851, %v2889
        %2891 = vmatmul.bf16.gmra.mxu0 %v2848
        %v2892 = vpop.f32.mrf.mxu0
        %v2893 = vadd.f32 %v2851, %v2892
        %v2894 = vpop.f32.mrf.mxu0
        %v2895 = vadd.f32 %v2851, %v2894
        %2896 = vmatmul.bf16.gmra.mxu0 %v2849
        %v2897 = vpop.f32.mrf.mxu0
        %v2898 = vadd.f32 %v2851, %v2897
        %v2899 = vpop.f32.mrf.mxu0
        %v2900 = vadd.f32 %v2851, %v2899
        %2901 = vdwg.mxu0
        %v2902 = vtanh.pop %v2863
        %v2903 = vtanh.pop %v2865
        %v2904 = vtanh.pop %v2868
        %v2905 = vtanh.pop %v2870
        %v2906 = vtanh.pop %v2873
        %v2907 = vtanh.pop %v2875
        %v2908 = vtanh.pop %v2878
        %v2909 = vtanh.pop %v2880
        %v2910 = vtanh.pop %v2883
        %v2911 = vtanh.pop %v2885
        %v2912 = vtanh.pop %v2888
        %v2913 = vtanh.pop %v2890
        %v2914 = vtanh.pop %v2893
        %v2915 = vtanh.pop %v2895
        %v2916 = vtanh.pop %v2898
        %v2917 = vtanh.pop %v2900
        %v2918 = vpack.c.bf16 %v2903, %v2902
        %v2919 = vpack.c.bf16 %v2905, %v2904
        %v2920 = vpack.c.bf16 %v2907, %v2906
        %v2921 = vpack.c.bf16 %v2909, %v2908
        %v2922 = vpack.c.bf16 %v2911, %v2910
        %v2923 = vpack.c.bf16 %v2913, %v2912
        %v2924 = vpack.c.bf16 %v2915, %v2914
        %v2925 = vpack.c.bf16 %v2917, %v2916
        %2926 = vmatpush.bf16.msra.mxu0 %v538
        %2927 = vmatpush.bf16.msra.mxu0 %v537
        %2928 = vmatpush.bf16.msra.mxu0 %v536
        %2929 = vmatpush.bf16.msra.mxu0 %v535
        %2930 = vmatpush.bf16.msra.mxu0 %v534
        %2931 = vmatpush.bf16.msra.mxu0 %v533
        %2932 = vmatpush.bf16.msra.mxu0 %v532
        %2933 = vmatpush.bf16.msra.mxu0 %v531
        %2934 = vmatmul.bf16.gmra.mxu0 %v2918
        %v2935 = vpop.f32.mrf.mxu0
        %v2936 = vadd.f32 %v497, %v2935
        %v2937 = vpop.f32.mrf.mxu0
        %v2938 = vadd.f32 %v497, %v2937
        %2939 = vmatmul.bf16.gmra.mxu0 %v2919
        %v2940 = vpop.f32.mrf.mxu0
        %v2941 = vadd.f32 %v497, %v2940
        %v2942 = vpop.f32.mrf.mxu0
        %v2943 = vadd.f32 %v497, %v2942
        %2944 = vmatmul.bf16.gmra.mxu0 %v2920
        %v2945 = vpop.f32.mrf.mxu0
        %v2946 = vadd.f32 %v497, %v2945
        %v2947 = vpop.f32.mrf.mxu0
        %v2948 = vadd.f32 %v497, %v2947
        %2949 = vmatmul.bf16.gmra.mxu0 %v2921
        %v2950 = vpop.f32.mrf.mxu0
        %v2951 = vadd.f32 %v497, %v2950
        %v2952 = vpop.f32.mrf.mxu0
        %v2953 = vadd.f32 %v497, %v2952
        %2954 = vmatmul.bf16.gmra.mxu0 %v2922
        %v2955 = vpop.f32.mrf.mxu0
        %v2956 = vadd.f32 %v497, %v2955
        %v2957 = vpop.f32.mrf.mxu0
        %v2958 = vadd.f32 %v497, %v2957
        %2959 = vmatmul.bf16.gmra.mxu0 %v2923
        %v2960 = vpop.f32.mrf.mxu0
        %v2961 = vadd.f32 %v497, %v2960
        %v2962 = vpop.f32.mrf.mxu0
        %v2963 = vadd.f32 %v497, %v2962
        %2964 = vmatmul.bf16.gmra.mxu0 %v2924
        %v2965 = vpop.f32.mrf.mxu0
        %v2966 = vadd.f32 %v497, %v2965
        %v2967 = vpop.f32.mrf.mxu0
        %v2968 = vadd.f32 %v497, %v2967
        %2969 = vmatmul.bf16.gmra.mxu0 %v2925
        %v2970 = vpop.f32.mrf.mxu0
        %v2971 = vadd.f32 %v497, %v2970
        %v2972 = vpop.f32.mrf.mxu0
        %v2973 = vadd.f32 %v497, %v2972
        %2974 = vdwg.mxu0
        %v2975 = vmul.f32 %v2936, 2.0
        %v2976 = vmul.f32 %v2938, 2.0
        %v2977 = vmul.f32 %v2941, 2.0
        %v2978 = vmul.f32 %v2943, 2.0
        %v2979 = vmul.f32 %v2946, 2.0
        %v2980 = vmul.f32 %v2948, 2.0
        %v2981 = vmul.f32 %v2951, 2.0
        %v2982 = vmul.f32 %v2953, 2.0
        %v2983 = vmul.f32 %v2956, 2.0
        %v2984 = vmul.f32 %v2958, 2.0
        %v2985 = vmul.f32 %v2961, 2.0
        %v2986 = vmul.f32 %v2963, 2.0
        %v2987 = vmul.f32 %v2966, 2.0
        %v2988 = vmul.f32 %v2968, 2.0
        %v2989 = vmul.f32 %v2971, 2.0
        %v2990 = vmul.f32 %v2973, 2.0
        %v2991 = vadd.f32 %v2771, %v2975
        %v2992 = vadd.f32 %v2773, %v2976
        %v2993 = vadd.f32 %v2776, %v2977
        %v2994 = vadd.f32 %v2778, %v2978
        %v2995 = vadd.f32 %v2781, %v2979
        %v2996 = vadd.f32 %v2783, %v2980
        %v2997 = vadd.f32 %v2786, %v2981
        %v2998 = vadd.f32 %v2788, %v2982
        %v2999 = vadd.f32 %v2791, %v2983
        %v3000 = vadd.f32 %v2793, %v2984
        %v3001 = vadd.f32 %v2796, %v2985
        %v3002 = vadd.f32 %v2798, %v2986
        %v3003 = vadd.f32 %v2801, %v2987
        %v3004 = vadd.f32 %v2803, %v2988
        %v3005 = vadd.f32 %v2806, %v2989
        %v3006 = vadd.f32 %v2808, %v2990
        %v3007 = vmul.f32 %v2936, 0.071428575
        %v3008 = vmul.f32 %v2938, 0.071428575
        %v3009 = vmul.f32 %v2941, 0.071428575
        %v3010 = vmul.f32 %v2943, 0.071428575
        %v3011 = vmul.f32 %v2946, 0.071428575
        %v3012 = vmul.f32 %v2948, 0.071428575
        %v3013 = vmul.f32 %v2951, 0.071428575
        %v3014 = vmul.f32 %v2953, 0.071428575
        %v3015 = vmul.f32 %v2956, 0.071428575
        %v3016 = vmul.f32 %v2958, 0.071428575
        %v3017 = vmul.f32 %v2961, 0.071428575
        %v3018 = vmul.f32 %v2963, 0.071428575
        %v3019 = vmul.f32 %v2966, 0.071428575
        %v3020 = vmul.f32 %v2968, 0.071428575
        %v3021 = vmul.f32 %v2971, 0.071428575
        %v3022 = vmul.f32 %v2973, 0.071428575
        %v3023 = vadd.f32 %v2660, %v3007
        %v3024 = vadd.f32 %v2661, %v3008
        %v3025 = vadd.f32 %v2662, %v3009
        %v3026 = vadd.f32 %v2663, %v3010
        %v3027 = vadd.f32 %v2664, %v3011
        %v3028 = vadd.f32 %v2665, %v3012
        %v3029 = vadd.f32 %v2666, %v3013
        %v3030 = vadd.f32 %v2667, %v3014
        %v3031 = vadd.f32 %v2668, %v3015
        %v3032 = vadd.f32 %v2669, %v3016
        %v3033 = vadd.f32 %v2670, %v3017
        %v3034 = vadd.f32 %v2671, %v3018
        %v3035 = vadd.f32 %v2672, %v3019
        %v3036 = vadd.f32 %v2673, %v3020
        %v3037 = vadd.f32 %v2674, %v3021
        %v3038 = vadd.f32 %v2675, %v3022
        %v3039 = vpack.c.bf16 %v3024, %v3023
        %v3040 = vpack.c.bf16 %v3026, %v3025
        %v3041 = vpack.c.bf16 %v3028, %v3027
        %v3042 = vpack.c.bf16 %v3030, %v3029
        %v3043 = vpack.c.bf16 %v3032, %v3031
        %v3044 = vpack.c.bf16 %v3034, %v3033
        %v3045 = vpack.c.bf16 %v3036, %v3035
        %v3046 = vpack.c.bf16 %v3038, %v3037
        %3047 = vmatpush.bf16.msra.mxu0 %v414
        %3048 = vmatpush.bf16.msra.mxu0 %v413
        %3049 = vmatpush.bf16.msra.mxu0 %v412
        %3050 = vmatpush.bf16.msra.mxu0 %v411
        %3051 = vmatpush.bf16.msra.mxu0 %v410
        %3052 = vmatpush.bf16.msra.mxu0 %v409
        %3053 = vmatpush.bf16.msra.mxu0 %v408
        %3054 = vmatpush.bf16.msra.mxu0 %v407
        %3055 = vmatmul.bf16.gmra.mxu0 %v3039
        %v3056 = vpop.f32.mrf.mxu0
        %v3057 = vadd.f32 %v2851, %v3056
        %v3058 = vpop.f32.mrf.mxu0
        %v3059 = vadd.f32 %v2851, %v3058
        %3060 = vmatmul.bf16.gmra.mxu0 %v3040
        %v3061 = vpop.f32.mrf.mxu0
        %v3062 = vadd.f32 %v2851, %v3061
        %v3063 = vpop.f32.mrf.mxu0
        %v3064 = vadd.f32 %v2851, %v3063
        %3065 = vmatmul.bf16.gmra.mxu0 %v3041
        %v3066 = vpop.f32.mrf.mxu0
        %v3067 = vadd.f32 %v2851, %v3066
        %v3068 = vpop.f32.mrf.mxu0
        %v3069 = vadd.f32 %v2851, %v3068
        %3070 = vmatmul.bf16.gmra.mxu0 %v3042
        %v3071 = vpop.f32.mrf.mxu0
        %v3072 = vadd.f32 %v2851, %v3071
        %v3073 = vpop.f32.mrf.mxu0
        %v3074 = vadd.f32 %v2851, %v3073
        %3075 = vmatmul.bf16.gmra.mxu0 %v3043
        %v3076 = vpop.f32.mrf.mxu0
        %v3077 = vadd.f32 %v2851, %v3076
        %v3078 = vpop.f32.mrf.mxu0
        %v3079 = vadd.f32 %v2851, %v3078
        %3080 = vmatmul.bf16.gmra.mxu0 %v3044
        %v3081 = vpop.f32.mrf.mxu0
        %v3082 = vadd.f32 %v2851, %v3081
        %v3083 = vpop.f32.mrf.mxu0
        %v3084 = vadd.f32 %v2851, %v3083
        %3085 = vmatmul.bf16.gmra.mxu0 %v3045
        %v3086 = vpop.f32.mrf.mxu0
        %v3087 = vadd.f32 %v2851, %v3086
        %v3088 = vpop.f32.mrf.mxu0
        %v3089 = vadd.f32 %v2851, %v3088
        %3090 = vmatmul.bf16.gmra.mxu0 %v3046
        %v3091 = vpop.f32.mrf.mxu0
        %v3092 = vadd.f32 %v2851, %v3091
        %v3093 = vpop.f32.mrf.mxu0
        %v3094 = vadd.f32 %v2851, %v3093
        %3095 = vdwg.mxu0
        %v3096 = vtanh.pop %v3057
        %v3097 = vtanh.pop %v3059
        %v3098 = vtanh.pop %v3062
        %v3099 = vtanh.pop %v3064
        %v3100 = vtanh.pop %v3067
        %v3101 = vtanh.pop %v3069
        %v3102 = vtanh.pop %v3072
        %v3103 = vtanh.pop %v3074
        %v3104 = vtanh.pop %v3077
        %v3105 = vtanh.pop %v3079
        %v3106 = vtanh.pop %v3082
        %v3107 = vtanh.pop %v3084
        %v3108 = vtanh.pop %v3087
        %v3109 = vtanh.pop %v3089
        %v3110 = vtanh.pop %v3092
        %v3111 = vtanh.pop %v3094
        %v3112 = vpack.c.bf16 %v3097, %v3096
        %v3113 = vpack.c.bf16 %v3099, %v3098
        %v3114 = vpack.c.bf16 %v3101, %v3100
        %v3115 = vpack.c.bf16 %v3103, %v3102
        %v3116 = vpack.c.bf16 %v3105, %v3104
        %v3117 = vpack.c.bf16 %v3107, %v3106
        %v3118 = vpack.c.bf16 %v3109, %v3108
        %v3119 = vpack.c.bf16 %v3111, %v3110
        %3120 = vmatpush.bf16.msra.mxu0 %v538
        %3121 = vmatpush.bf16.msra.mxu0 %v537
        %3122 = vmatpush.bf16.msra.mxu0 %v536
        %3123 = vmatpush.bf16.msra.mxu0 %v535
        %3124 = vmatpush.bf16.msra.mxu0 %v534
        %3125 = vmatpush.bf16.msra.mxu0 %v533
        %3126 = vmatpush.bf16.msra.mxu0 %v532
        %3127 = vmatpush.bf16.msra.mxu0 %v531
        %3128 = vmatmul.bf16.gmra.mxu0 %v3112
        %v3129 = vpop.f32.mrf.mxu0
        %v3130 = vadd.f32 %v497, %v3129
        %v3131 = vpop.f32.mrf.mxu0
        %v3132 = vadd.f32 %v497, %v3131
        %3133 = vmatmul.bf16.gmra.mxu0 %v3113
        %v3134 = vpop.f32.mrf.mxu0
        %v3135 = vadd.f32 %v497, %v3134
        %v3136 = vpop.f32.mrf.mxu0
        %v3137 = vadd.f32 %v497, %v3136
        %3138 = vmatmul.bf16.gmra.mxu0 %v3114
        %v3139 = vpop.f32.mrf.mxu0
        %v3140 = vadd.f32 %v497, %v3139
        %v3141 = vpop.f32.mrf.mxu0
        %v3142 = vadd.f32 %v497, %v3141
        %3143 = vmatmul.bf16.gmra.mxu0 %v3115
        %v3144 = vpop.f32.mrf.mxu0
        %v3145 = vadd.f32 %v497, %v3144
        %v3146 = vpop.f32.mrf.mxu0
        %v3147 = vadd.f32 %v497, %v3146
        %3148 = vmatmul.bf16.gmra.mxu0 %v3116
        %v3149 = vpop.f32.mrf.mxu0
        %v3150 = vadd.f32 %v497, %v3149
        %v3151 = vpop.f32.mrf.mxu0
        %v3152 = vadd.f32 %v497, %v3151
        %3153 = vmatmul.bf16.gmra.mxu0 %v3117
        %v3154 = vpop.f32.mrf.mxu0
        %v3155 = vadd.f32 %v497, %v3154
        %v3156 = vpop.f32.mrf.mxu0
        %v3157 = vadd.f32 %v497, %v3156
        %3158 = vmatmul.bf16.gmra.mxu0 %v3118
        %v3159 = vpop.f32.mrf.mxu0
        %v3160 = vadd.f32 %v497, %v3159
        %v3161 = vpop.f32.mrf.mxu0
        %v3162 = vadd.f32 %v497, %v3161
        %3163 = vmatmul.bf16.gmra.mxu0 %v3119
        %v3164 = vpop.f32.mrf.mxu0
        %v3165 = vadd.f32 %v497, %v3164
        %v3166 = vpop.f32.mrf.mxu0
        %v3167 = vadd.f32 %v497, %v3166
        %3168 = vdwg.mxu0
        %v3169 = vmul.f32 %v3130, 2.0
        %v3170 = vmul.f32 %v3132, 2.0
        %v3171 = vmul.f32 %v3135, 2.0
        %v3172 = vmul.f32 %v3137, 2.0
        %v3173 = vmul.f32 %v3140, 2.0
        %v3174 = vmul.f32 %v3142, 2.0
        %v3175 = vmul.f32 %v3145, 2.0
        %v3176 = vmul.f32 %v3147, 2.0
        %v3177 = vmul.f32 %v3150, 2.0
        %v3178 = vmul.f32 %v3152, 2.0
        %v3179 = vmul.f32 %v3155, 2.0
        %v3180 = vmul.f32 %v3157, 2.0
        %v3181 = vmul.f32 %v3160, 2.0
        %v3182 = vmul.f32 %v3162, 2.0
        %v3183 = vmul.f32 %v3165, 2.0
        %v3184 = vmul.f32 %v3167, 2.0
        %v3185 = vadd.f32 %v2991, %v3169
        %v3186 = vadd.f32 %v2992, %v3170
        %v3187 = vadd.f32 %v2993, %v3171
        %v3188 = vadd.f32 %v2994, %v3172
        %v3189 = vadd.f32 %v2995, %v3173
        %v3190 = vadd.f32 %v2996, %v3174
        %v3191 = vadd.f32 %v2997, %v3175
        %v3192 = vadd.f32 %v2998, %v3176
        %v3193 = vadd.f32 %v2999, %v3177
        %v3194 = vadd.f32 %v3000, %v3178
        %v3195 = vadd.f32 %v3001, %v3179
        %v3196 = vadd.f32 %v3002, %v3180
        %v3197 = vadd.f32 %v3003, %v3181
        %v3198 = vadd.f32 %v3004, %v3182
        %v3199 = vadd.f32 %v3005, %v3183
        %v3200 = vadd.f32 %v3006, %v3184
        %v3201 = vmul.f32 %v3130, 0.14285715
        %v3202 = vmul.f32 %v3132, 0.14285715
        %v3203 = vmul.f32 %v3135, 0.14285715
        %v3204 = vmul.f32 %v3137, 0.14285715
        %v3205 = vmul.f32 %v3140, 0.14285715
        %v3206 = vmul.f32 %v3142, 0.14285715
        %v3207 = vmul.f32 %v3145, 0.14285715
        %v3208 = vmul.f32 %v3147, 0.14285715
        %v3209 = vmul.f32 %v3150, 0.14285715
        %v3210 = vmul.f32 %v3152, 0.14285715
        %v3211 = vmul.f32 %v3155, 0.14285715
        %v3212 = vmul.f32 %v3157, 0.14285715
        %v3213 = vmul.f32 %v3160, 0.14285715
        %v3214 = vmul.f32 %v3162, 0.14285715
        %v3215 = vmul.f32 %v3165, 0.14285715
        %v3216 = vmul.f32 %v3167, 0.14285715
        %v3217 = vadd.f32 %v2660, %v3201
        %v3218 = vadd.f32 %v2661, %v3202
        %v3219 = vadd.f32 %v2662, %v3203
        %v3220 = vadd.f32 %v2663, %v3204
        %v3221 = vadd.f32 %v2664, %v3205
        %v3222 = vadd.f32 %v2665, %v3206
        %v3223 = vadd.f32 %v2666, %v3207
        %v3224 = vadd.f32 %v2667, %v3208
        %v3225 = vadd.f32 %v2668, %v3209
        %v3226 = vadd.f32 %v2669, %v3210
        %v3227 = vadd.f32 %v2670, %v3211
        %v3228 = vadd.f32 %v2671, %v3212
        %v3229 = vadd.f32 %v2672, %v3213
        %v3230 = vadd.f32 %v2673, %v3214
        %v3231 = vadd.f32 %v2674, %v3215
        %v3232 = vadd.f32 %v2675, %v3216
        %v3233 = vpack.c.bf16 %v3218, %v3217
        %v3234 = vpack.c.bf16 %v3220, %v3219
        %v3235 = vpack.c.bf16 %v3222, %v3221
        %v3236 = vpack.c.bf16 %v3224, %v3223
        %v3237 = vpack.c.bf16 %v3226, %v3225
        %v3238 = vpack.c.bf16 %v3228, %v3227
        %v3239 = vpack.c.bf16 %v3230, %v3229
        %v3240 = vpack.c.bf16 %v3232, %v3231
        %v3242 = vperm.slane %v2679, 0
        %3244 = vmatpush.bf16.msra.mxu0 %v414
        %3245 = vmatpush.bf16.msra.mxu0 %v413
        %3246 = vmatpush.bf16.msra.mxu0 %v412
        %3247 = vmatpush.bf16.msra.mxu0 %v411
        %3248 = vmatpush.bf16.msra.mxu0 %v410
        %3249 = vmatpush.bf16.msra.mxu0 %v409
        %3250 = vmatpush.bf16.msra.mxu0 %v408
        %3251 = vmatpush.bf16.msra.mxu0 %v407
        %3252 = vmatmul.bf16.gmra.mxu0 %v3233
        %v3253 = vpop.f32.mrf.mxu0
        %v3254 = vadd.f32 %v3242, %v3253
        %v3255 = vpop.f32.mrf.mxu0
        %v3256 = vadd.f32 %v3242, %v3255
        %3257 = vmatmul.bf16.gmra.mxu0 %v3234
        %v3258 = vpop.f32.mrf.mxu0
        %v3259 = vadd.f32 %v3242, %v3258
        %v3260 = vpop.f32.mrf.mxu0
        %v3261 = vadd.f32 %v3242, %v3260
        %3262 = vmatmul.bf16.gmra.mxu0 %v3235
        %v3263 = vpop.f32.mrf.mxu0
        %v3264 = vadd.f32 %v3242, %v3263
        %v3265 = vpop.f32.mrf.mxu0
        %v3266 = vadd.f32 %v3242, %v3265
        %3267 = vmatmul.bf16.gmra.mxu0 %v3236
        %v3268 = vpop.f32.mrf.mxu0
        %v3269 = vadd.f32 %v3242, %v3268
        %v3270 = vpop.f32.mrf.mxu0
        %v3271 = vadd.f32 %v3242, %v3270
        %3272 = vmatmul.bf16.gmra.mxu0 %v3237
        %v3273 = vpop.f32.mrf.mxu0
        %v3274 = vadd.f32 %v3242, %v3273
        %v3275 = vpop.f32.mrf.mxu0
        %v3276 = vadd.f32 %v3242, %v3275
        %3277 = vmatmul.bf16.gmra.mxu0 %v3238
        %v3278 = vpop.f32.mrf.mxu0
        %v3279 = vadd.f32 %v3242, %v3278
        %v3280 = vpop.f32.mrf.mxu0
        %v3281 = vadd.f32 %v3242, %v3280
        %3282 = vmatmul.bf16.gmra.mxu0 %v3239
        %v3283 = vpop.f32.mrf.mxu0
        %v3284 = vadd.f32 %v3242, %v3283
        %v3285 = vpop.f32.mrf.mxu0
        %v3286 = vadd.f32 %v3242, %v3285
        %3287 = vmatmul.bf16.gmra.mxu0 %v3240
        %v3288 = vpop.f32.mrf.mxu0
        %v3289 = vadd.f32 %v3242, %v3288
        %v3290 = vpop.f32.mrf.mxu0
        %v3291 = vadd.f32 %v3242, %v3290
        %3292 = vdwg.mxu0
        %v3293 = vtanh.pop %v3254
        %v3294 = vtanh.pop %v3256
        %v3295 = vtanh.pop %v3259
        %v3296 = vtanh.pop %v3261
        %v3297 = vtanh.pop %v3264
        %v3298 = vtanh.pop %v3266
        %v3299 = vtanh.pop %v3269
        %v3300 = vtanh.pop %v3271
        %v3301 = vtanh.pop %v3274
        %v3302 = vtanh.pop %v3276
        %v3303 = vtanh.pop %v3279
        %v3304 = vtanh.pop %v3281
        %v3305 = vtanh.pop %v3284
        %v3306 = vtanh.pop %v3286
        %v3307 = vtanh.pop %v3289
        %v3308 = vtanh.pop %v3291
        %v3309 = vpack.c.bf16 %v3294, %v3293
        %v3310 = vpack.c.bf16 %v3296, %v3295
        %v3311 = vpack.c.bf16 %v3298, %v3297
        %v3312 = vpack.c.bf16 %v3300, %v3299
        %v3313 = vpack.c.bf16 %v3302, %v3301
        %v3314 = vpack.c.bf16 %v3304, %v3303
        %v3315 = vpack.c.bf16 %v3306, %v3305
        %v3316 = vpack.c.bf16 %v3308, %v3307
        %3317 = vmatpush.bf16.msra.mxu0 %v538
        %3318 = vmatpush.bf16.msra.mxu0 %v537
        %3319 = vmatpush.bf16.msra.mxu0 %v536
        %3320 = vmatpush.bf16.msra.mxu0 %v535
        %3321 = vmatpush.bf16.msra.mxu0 %v534
        %3322 = vmatpush.bf16.msra.mxu0 %v533
        %3323 = vmatpush.bf16.msra.mxu0 %v532
        %3324 = vmatpush.bf16.msra.mxu0 %v531
        %3325 = vmatmul.bf16.gmra.mxu0 %v3309
        %v3326 = vpop.f32.mrf.mxu0
        %v3327 = vadd.f32 %v497, %v3326
        %v3328 = vpop.f32.mrf.mxu0
        %v3329 = vadd.f32 %v497, %v3328
        %3330 = vmatmul.bf16.gmra.mxu0 %v3310
        %v3331 = vpop.f32.mrf.mxu0
        %v3332 = vadd.f32 %v497, %v3331
        %v3333 = vpop.f32.mrf.mxu0
        %v3334 = vadd.f32 %v497, %v3333
        %3335 = vmatmul.bf16.gmra.mxu0 %v3311
        %v3336 = vpop.f32.mrf.mxu0
        %v3337 = vadd.f32 %v497, %v3336
        %v3338 = vpop.f32.mrf.mxu0
        %v3339 = vadd.f32 %v497, %v3338
        %3340 = vmatmul.bf16.gmra.mxu0 %v3312
        %v3341 = vpop.f32.mrf.mxu0
        %v3342 = vadd.f32 %v497, %v3341
        %v3343 = vpop.f32.mrf.mxu0
        %v3344 = vadd.f32 %v497, %v3343
        %3345 = vmatmul.bf16.gmra.mxu0 %v3313
        %v3346 = vpop.f32.mrf.mxu0
        %v3347 = vadd.f32 %v497, %v3346
        %v3348 = vpop.f32.mrf.mxu0
        %v3349 = vadd.f32 %v497, %v3348
        %3350 = vmatmul.bf16.gmra.mxu0 %v3314
        %v3351 = vpop.f32.mrf.mxu0
        %v3352 = vadd.f32 %v497, %v3351
        %v3353 = vpop.f32.mrf.mxu0
        %v3354 = vadd.f32 %v497, %v3353
        %3355 = vmatmul.bf16.gmra.mxu0 %v3315
        %v3356 = vpop.f32.mrf.mxu0
        %v3357 = vadd.f32 %v497, %v3356
        %v3358 = vpop.f32.mrf.mxu0
        %v3359 = vadd.f32 %v497, %v3358
        %3360 = vmatmul.bf16.gmra.mxu0 %v3316
        %v3361 = vpop.f32.mrf.mxu0
        %v3362 = vadd.f32 %v497, %v3361
        %v3363 = vpop.f32.mrf.mxu0
        %v3364 = vadd.f32 %v497, %v3363
        %3365 = vdwg.mxu0
        %v3366 = vadd.f32 %v3185, %v3327
        %v3367 = vadd.f32 %v3186, %v3329
        %v3368 = vadd.f32 %v3187, %v3332
        %v3369 = vadd.f32 %v3188, %v3334
        %v3370 = vadd.f32 %v3189, %v3337
        %v3371 = vadd.f32 %v3190, %v3339
        %v3372 = vadd.f32 %v3191, %v3342
        %v3373 = vadd.f32 %v3192, %v3344
        %v3374 = vadd.f32 %v3193, %v3347
        %v3375 = vadd.f32 %v3194, %v3349
        %v3376 = vadd.f32 %v3195, %v3352
        %v3377 = vadd.f32 %v3196, %v3354
        %v3378 = vadd.f32 %v3197, %v3357
        %v3379 = vadd.f32 %v3198, %v3359
        %v3380 = vadd.f32 %v3199, %v3362
        %v3381 = vadd.f32 %v3200, %v3364
        %v3382 = vmul.f32 %v3366, 0.023809524
        %v3383 = vmul.f32 %v3367, 0.023809524
        %v3384 = vmul.f32 %v3368, 0.023809524
        %v3385 = vmul.f32 %v3369, 0.023809524
        %v3386 = vmul.f32 %v3370, 0.023809524
        %v3387 = vmul.f32 %v3371, 0.023809524
        %v3388 = vmul.f32 %v3372, 0.023809524
        %v3389 = vmul.f32 %v3373, 0.023809524
        %v3390 = vmul.f32 %v3374, 0.023809524
        %v3391 = vmul.f32 %v3375, 0.023809524
        %v3392 = vmul.f32 %v3376, 0.023809524
        %v3393 = vmul.f32 %v3377, 0.023809524
        %v3394 = vmul.f32 %v3378, 0.023809524
        %v3395 = vmul.f32 %v3379, 0.023809524
        %v3396 = vmul.f32 %v3380, 0.023809524
        %v3397 = vmul.f32 %v3381, 0.023809524
        %v3398 = vadd.f32 %v2660, %v3382
        %v3399 = vadd.f32 %v2661, %v3383
        %v3400 = vadd.f32 %v2662, %v3384
        %v3401 = vadd.f32 %v2663, %v3385
        %v3402 = vadd.f32 %v2664, %v3386
        %v3403 = vadd.f32 %v2665, %v3387
        %v3404 = vadd.f32 %v2666, %v3388
        %v3405 = vadd.f32 %v2667, %v3389
        %v3406 = vadd.f32 %v2668, %v3390
        %v3407 = vadd.f32 %v2669, %v3391
        %v3408 = vadd.f32 %v2670, %v3392
        %v3409 = vadd.f32 %v2671, %v3393
        %v3410 = vadd.f32 %v2672, %v3394
        %v3411 = vadd.f32 %v2673, %v3395
        %v3412 = vadd.f32 %v2674, %v3396
        %v3413 = vadd.f32 %v2675, %v3397
        %v3414 = vmul.f32 %v340, 0.6428572
        %v3415 = vadd.f32 %v339, %v3414
        %v3416 = vmul.f32 %v340, 0.71428573
        %v3417 = vadd.f32 %v339, %v3416
        %v3418 = vpack.c.bf16 %v3399, %v3398
        %v3419 = vpack.c.bf16 %v3401, %v3400
        %v3420 = vpack.c.bf16 %v3403, %v3402
        %v3421 = vpack.c.bf16 %v3405, %v3404
        %v3422 = vpack.c.bf16 %v3407, %v3406
        %v3423 = vpack.c.bf16 %v3409, %v3408
        %v3424 = vpack.c.bf16 %v3411, %v3410
        %v3425 = vpack.c.bf16 %v3413, %v3412
        %3426 = vmatpush.bf16.msra.mxu0 %v414
        %3427 = vmatpush.bf16.msra.mxu0 %v413
        %3428 = vmatpush.bf16.msra.mxu0 %v412
        %3429 = vmatpush.bf16.msra.mxu0 %v411
        %3430 = vmatpush.bf16.msra.mxu0 %v410
        %3431 = vmatpush.bf16.msra.mxu0 %v409
        %3432 = vmatpush.bf16.msra.mxu0 %v408
        %3433 = vmatpush.bf16.msra.mxu0 %v407
        %3434 = vmatmul.bf16.gmra.mxu0 %v3418
        %v3435 = vpop.f32.mrf.mxu0
        %v3436 = vadd.f32 %v3242, %v3435
        %v3437 = vpop.f32.mrf.mxu0
        %v3438 = vadd.f32 %v3242, %v3437
        %3439 = vmatmul.bf16.gmra.mxu0 %v3419
        %v3440 = vpop.f32.mrf.mxu0
        %v3441 = vadd.f32 %v3242, %v3440
        %v3442 = vpop.f32.mrf.mxu0
        %v3443 = vadd.f32 %v3242, %v3442
        %3444 = vmatmul.bf16.gmra.mxu0 %v3420
        %v3445 = vpop.f32.mrf.mxu0
        %v3446 = vadd.f32 %v3242, %v3445
        %v3447 = vpop.f32.mrf.mxu0
        %v3448 = vadd.f32 %v3242, %v3447
        %3449 = vmatmul.bf16.gmra.mxu0 %v3421
        %v3450 = vpop.f32.mrf.mxu0
        %v3451 = vadd.f32 %v3242, %v3450
        %v3452 = vpop.f32.mrf.mxu0
        %v3453 = vadd.f32 %v3242, %v3452
        %3454 = vmatmul.bf16.gmra.mxu0 %v3422
        %v3455 = vpop.f32.mrf.mxu0
        %v3456 = vadd.f32 %v3242, %v3455
        %v3457 = vpop.f32.mrf.mxu0
        %v3458 = vadd.f32 %v3242, %v3457
        %3459 = vmatmul.bf16.gmra.mxu0 %v3423
        %v3460 = vpop.f32.mrf.mxu0
        %v3461 = vadd.f32 %v3242, %v3460
        %v3462 = vpop.f32.mrf.mxu0
        %v3463 = vadd.f32 %v3242, %v3462
        %3464 = vmatmul.bf16.gmra.mxu0 %v3424
        %v3465 = vpop.f32.mrf.mxu0
        %v3466 = vadd.f32 %v3242, %v3465
        %v3467 = vpop.f32.mrf.mxu0
        %v3468 = vadd.f32 %v3242, %v3467
        %3469 = vmatmul.bf16.gmra.mxu0 %v3425
        %v3470 = vpop.f32.mrf.mxu0
        %v3471 = vadd.f32 %v3242, %v3470
        %v3472 = vpop.f32.mrf.mxu0
        %v3473 = vadd.f32 %v3242, %v3472
        %3474 = vdwg.mxu0
        %v3475 = vtanh.pop %v3436
        %v3476 = vtanh.pop %v3438
        %v3477 = vtanh.pop %v3441
        %v3478 = vtanh.pop %v3443
        %v3479 = vtanh.pop %v3446
        %v3480 = vtanh.pop %v3448
        %v3481 = vtanh.pop %v3451
        %v3482 = vtanh.pop %v3453
        %v3483 = vtanh.pop %v3456
        %v3484 = vtanh.pop %v3458
        %v3485 = vtanh.pop %v3461
        %v3486 = vtanh.pop %v3463
        %v3487 = vtanh.pop %v3466
        %v3488 = vtanh.pop %v3468
        %v3489 = vtanh.pop %v3471
        %v3490 = vtanh.pop %v3473
        %v3491 = vpack.c.bf16 %v3476, %v3475
        %v3492 = vpack.c.bf16 %v3478, %v3477
        %v3493 = vpack.c.bf16 %v3480, %v3479
        %v3494 = vpack.c.bf16 %v3482, %v3481
        %v3495 = vpack.c.bf16 %v3484, %v3483
        %v3496 = vpack.c.bf16 %v3486, %v3485
        %v3497 = vpack.c.bf16 %v3488, %v3487
        %v3498 = vpack.c.bf16 %v3490, %v3489
        %3499 = vmatpush.bf16.msra.mxu0 %v538
        %3500 = vmatpush.bf16.msra.mxu0 %v537
        %3501 = vmatpush.bf16.msra.mxu0 %v536
        %3502 = vmatpush.bf16.msra.mxu0 %v535
        %3503 = vmatpush.bf16.msra.mxu0 %v534
        %3504 = vmatpush.bf16.msra.mxu0 %v533
        %3505 = vmatpush.bf16.msra.mxu0 %v532
        %3506 = vmatpush.bf16.msra.mxu0 %v531
        %3507 = vmatmul.bf16.gmra.mxu0 %v3491
        %v3508 = vpop.f32.mrf.mxu0
        %v3509 = vadd.f32 %v497, %v3508
        %v3510 = vpop.f32.mrf.mxu0
        %v3511 = vadd.f32 %v497, %v3510
        %3512 = vmatmul.bf16.gmra.mxu0 %v3492
        %v3513 = vpop.f32.mrf.mxu0
        %v3514 = vadd.f32 %v497, %v3513
        %v3515 = vpop.f32.mrf.mxu0
        %v3516 = vadd.f32 %v497, %v3515
        %3517 = vmatmul.bf16.gmra.mxu0 %v3493
        %v3518 = vpop.f32.mrf.mxu0
        %v3519 = vadd.f32 %v497, %v3518
        %v3520 = vpop.f32.mrf.mxu0
        %v3521 = vadd.f32 %v497, %v3520
        %3522 = vmatmul.bf16.gmra.mxu0 %v3494
        %v3523 = vpop.f32.mrf.mxu0
        %v3524 = vadd.f32 %v497, %v3523
        %v3525 = vpop.f32.mrf.mxu0
        %v3526 = vadd.f32 %v497, %v3525
        %3527 = vmatmul.bf16.gmra.mxu0 %v3495
        %v3528 = vpop.f32.mrf.mxu0
        %v3529 = vadd.f32 %v497, %v3528
        %v3530 = vpop.f32.mrf.mxu0
        %v3531 = vadd.f32 %v497, %v3530
        %3532 = vmatmul.bf16.gmra.mxu0 %v3496
        %v3533 = vpop.f32.mrf.mxu0
        %v3534 = vadd.f32 %v497, %v3533
        %v3535 = vpop.f32.mrf.mxu0
        %v3536 = vadd.f32 %v497, %v3535
        %3537 = vmatmul.bf16.gmra.mxu0 %v3497
        %v3538 = vpop.f32.mrf.mxu0
        %v3539 = vadd.f32 %v497, %v3538
        %v3540 = vpop.f32.mrf.mxu0
        %v3541 = vadd.f32 %v497, %v3540
        %3542 = vmatmul.bf16.gmra.mxu0 %v3498
        %v3543 = vpop.f32.mrf.mxu0
        %v3544 = vadd.f32 %v497, %v3543
        %v3545 = vpop.f32.mrf.mxu0
        %v3546 = vadd.f32 %v497, %v3545
        %3547 = vdwg.mxu0
        %v3548 = vmul.f32 %v3509, 0.071428575
        %v3549 = vmul.f32 %v3511, 0.071428575
        %v3550 = vmul.f32 %v3514, 0.071428575
        %v3551 = vmul.f32 %v3516, 0.071428575
        %v3552 = vmul.f32 %v3519, 0.071428575
        %v3553 = vmul.f32 %v3521, 0.071428575
        %v3554 = vmul.f32 %v3524, 0.071428575
        %v3555 = vmul.f32 %v3526, 0.071428575
        %v3556 = vmul.f32 %v3529, 0.071428575
        %v3557 = vmul.f32 %v3531, 0.071428575
        %v3558 = vmul.f32 %v3534, 0.071428575
        %v3559 = vmul.f32 %v3536, 0.071428575
        %v3560 = vmul.f32 %v3539, 0.071428575
        %v3561 = vmul.f32 %v3541, 0.071428575
        %v3562 = vmul.f32 %v3544, 0.071428575
        %v3563 = vmul.f32 %v3546, 0.071428575
        %v3564 = vadd.f32 %v3398, %v3548
        %v3565 = vadd.f32 %v3399, %v3549
        %v3566 = vadd.f32 %v3400, %v3550
        %v3567 = vadd.f32 %v3401, %v3551
        %v3568 = vadd.f32 %v3402, %v3552
        %v3569 = vadd.f32 %v3403, %v3553
        %v3570 = vadd.f32 %v3404, %v3554
        %v3571 = vadd.f32 %v3405, %v3555
        %v3572 = vadd.f32 %v3406, %v3556
        %v3573 = vadd.f32 %v3407, %v3557
        %v3574 = vadd.f32 %v3408, %v3558
        %v3575 = vadd.f32 %v3409, %v3559
        %v3576 = vadd.f32 %v3410, %v3560
        %v3577 = vadd.f32 %v3411, %v3561
        %v3578 = vadd.f32 %v3412, %v3562
        %v3579 = vadd.f32 %v3413, %v3563
        %v3580 = vpack.c.bf16 %v3565, %v3564
        %v3581 = vpack.c.bf16 %v3567, %v3566
        %v3582 = vpack.c.bf16 %v3569, %v3568
        %v3583 = vpack.c.bf16 %v3571, %v3570
        %v3584 = vpack.c.bf16 %v3573, %v3572
        %v3585 = vpack.c.bf16 %v3575, %v3574
        %v3586 = vpack.c.bf16 %v3577, %v3576
        %v3587 = vpack.c.bf16 %v3579, %v3578
        %v3589 = vperm.slane %v3415, 0
        %3591 = vmatpush.bf16.msra.mxu0 %v414
        %3592 = vmatpush.bf16.msra.mxu0 %v413
        %3593 = vmatpush.bf16.msra.mxu0 %v412
        %3594 = vmatpush.bf16.msra.mxu0 %v411
        %3595 = vmatpush.bf16.msra.mxu0 %v410
        %3596 = vmatpush.bf16.msra.mxu0 %v409
        %3597 = vmatpush.bf16.msra.mxu0 %v408
        %3598 = vmatpush.bf16.msra.mxu0 %v407
        %3599 = vmatmul.bf16.gmra.mxu0 %v3580
        %v3600 = vpop.f32.mrf.mxu0
        %v3601 = vadd.f32 %v3589, %v3600
        %v3602 = vpop.f32.mrf.mxu0
        %v3603 = vadd.f32 %v3589, %v3602
        %3604 = vmatmul.bf16.gmra.mxu0 %v3581
        %v3605 = vpop.f32.mrf.mxu0
        %v3606 = vadd.f32 %v3589, %v3605
        %v3607 = vpop.f32.mrf.mxu0
        %v3608 = vadd.f32 %v3589, %v3607
        %3609 = vmatmul.bf16.gmra.mxu0 %v3582
        %v3610 = vpop.f32.mrf.mxu0
        %v3611 = vadd.f32 %v3589, %v3610
        %v3612 = vpop.f32.mrf.mxu0
        %v3613 = vadd.f32 %v3589, %v3612
        %3614 = vmatmul.bf16.gmra.mxu0 %v3583
        %v3615 = vpop.f32.mrf.mxu0
        %v3616 = vadd.f32 %v3589, %v3615
        %v3617 = vpop.f32.mrf.mxu0
        %v3618 = vadd.f32 %v3589, %v3617
        %3619 = vmatmul.bf16.gmra.mxu0 %v3584
        %v3620 = vpop.f32.mrf.mxu0
        %v3621 = vadd.f32 %v3589, %v3620
        %v3622 = vpop.f32.mrf.mxu0
        %v3623 = vadd.f32 %v3589, %v3622
        %3624 = vmatmul.bf16.gmra.mxu0 %v3585
        %v3625 = vpop.f32.mrf.mxu0
        %v3626 = vadd.f32 %v3589, %v3625
        %v3627 = vpop.f32.mrf.mxu0
        %v3628 = vadd.f32 %v3589, %v3627
        %3629 = vmatmul.bf16.gmra.mxu0 %v3586
        %v3630 = vpop.f32.mrf.mxu0
        %v3631 = vadd.f32 %v3589, %v3630
        %v3632 = vpop.f32.mrf.mxu0
        %v3633 = vadd.f32 %v3589, %v3632
        %3634 = vmatmul.bf16.gmra.mxu0 %v3587
        %v3635 = vpop.f32.mrf.mxu0
        %v3636 = vadd.f32 %v3589, %v3635
        %v3637 = vpop.f32.mrf.mxu0
        %v3638 = vadd.f32 %v3589, %v3637
        %3639 = vdwg.mxu0
        %v3640 = vtanh.pop %v3601
        %v3641 = vtanh.pop %v3603
        %v3642 = vtanh.pop %v3606
        %v3643 = vtanh.pop %v3608
        %v3644 = vtanh.pop %v3611
        %v3645 = vtanh.pop %v3613
        %v3646 = vtanh.pop %v3616
        %v3647 = vtanh.pop %v3618
        %v3648 = vtanh.pop %v3621
        %v3649 = vtanh.pop %v3623
        %v3650 = vtanh.pop %v3626
        %v3651 = vtanh.pop %v3628
        %v3652 = vtanh.pop %v3631
        %v3653 = vtanh.pop %v3633
        %v3654 = vtanh.pop %v3636
        %v3655 = vtanh.pop %v3638
        %v3656 = vpack.c.bf16 %v3641, %v3640
        %v3657 = vpack.c.bf16 %v3643, %v3642
        %v3658 = vpack.c.bf16 %v3645, %v3644
        %v3659 = vpack.c.bf16 %v3647, %v3646
        %v3660 = vpack.c.bf16 %v3649, %v3648
        %v3661 = vpack.c.bf16 %v3651, %v3650
        %v3662 = vpack.c.bf16 %v3653, %v3652
        %v3663 = vpack.c.bf16 %v3655, %v3654
        %3664 = vmatpush.bf16.msra.mxu0 %v538
        %3665 = vmatpush.bf16.msra.mxu0 %v537
        %3666 = vmatpush.bf16.msra.mxu0 %v536
        %3667 = vmatpush.bf16.msra.mxu0 %v535
        %3668 = vmatpush.bf16.msra.mxu0 %v534
        %3669 = vmatpush.bf16.msra.mxu0 %v533
        %3670 = vmatpush.bf16.msra.mxu0 %v532
        %3671 = vmatpush.bf16.msra.mxu0 %v531
        %3672 = vmatmul.bf16.gmra.mxu0 %v3656
        %v3673 = vpop.f32.mrf.mxu0
        %v3674 = vadd.f32 %v497, %v3673
        %v3675 = vpop.f32.mrf.mxu0
        %v3676 = vadd.f32 %v497, %v3675
        %3677 = vmatmul.bf16.gmra.mxu0 %v3657
        %v3678 = vpop.f32.mrf.mxu0
        %v3679 = vadd.f32 %v497, %v3678
        %v3680 = vpop.f32.mrf.mxu0
        %v3681 = vadd.f32 %v497, %v3680
        %3682 = vmatmul.bf16.gmra.mxu0 %v3658
        %v3683 = vpop.f32.mrf.mxu0
        %v3684 = vadd.f32 %v497, %v3683
        %v3685 = vpop.f32.mrf.mxu0
        %v3686 = vadd.f32 %v497, %v3685
        %3687 = vmatmul.bf16.gmra.mxu0 %v3659
        %v3688 = vpop.f32.mrf.mxu0
        %v3689 = vadd.f32 %v497, %v3688
        %v3690 = vpop.f32.mrf.mxu0
        %v3691 = vadd.f32 %v497, %v3690
        %3692 = vmatmul.bf16.gmra.mxu0 %v3660
        %v3693 = vpop.f32.mrf.mxu0
        %v3694 = vadd.f32 %v497, %v3693
        %v3695 = vpop.f32.mrf.mxu0
        %v3696 = vadd.f32 %v497, %v3695
        %3697 = vmatmul.bf16.gmra.mxu0 %v3661
        %v3698 = vpop.f32.mrf.mxu0
        %v3699 = vadd.f32 %v497, %v3698
        %v3700 = vpop.f32.mrf.mxu0
        %v3701 = vadd.f32 %v497, %v3700
        %3702 = vmatmul.bf16.gmra.mxu0 %v3662
        %v3703 = vpop.f32.mrf.mxu0
        %v3704 = vadd.f32 %v497, %v3703
        %v3705 = vpop.f32.mrf.mxu0
        %v3706 = vadd.f32 %v497, %v3705
        %3707 = vmatmul.bf16.gmra.mxu0 %v3663
        %v3708 = vpop.f32.mrf.mxu0
        %v3709 = vadd.f32 %v497, %v3708
        %v3710 = vpop.f32.mrf.mxu0
        %v3711 = vadd.f32 %v497, %v3710
        %3712 = vdwg.mxu0
        %v3713 = vmul.f32 %v3674, 2.0
        %v3714 = vmul.f32 %v3676, 2.0
        %v3715 = vmul.f32 %v3679, 2.0
        %v3716 = vmul.f32 %v3681, 2.0
        %v3717 = vmul.f32 %v3684, 2.0
        %v3718 = vmul.f32 %v3686, 2.0
        %v3719 = vmul.f32 %v3689, 2.0
        %v3720 = vmul.f32 %v3691, 2.0
        %v3721 = vmul.f32 %v3694, 2.0
        %v3722 = vmul.f32 %v3696, 2.0
        %v3723 = vmul.f32 %v3699, 2.0
        %v3724 = vmul.f32 %v3701, 2.0
        %v3725 = vmul.f32 %v3704, 2.0
        %v3726 = vmul.f32 %v3706, 2.0
        %v3727 = vmul.f32 %v3709, 2.0
        %v3728 = vmul.f32 %v3711, 2.0
        %v3729 = vadd.f32 %v3509, %v3713
        %v3730 = vadd.f32 %v3511, %v3714
        %v3731 = vadd.f32 %v3514, %v3715
        %v3732 = vadd.f32 %v3516, %v3716
        %v3733 = vadd.f32 %v3519, %v3717
        %v3734 = vadd.f32 %v3521, %v3718
        %v3735 = vadd.f32 %v3524, %v3719
        %v3736 = vadd.f32 %v3526, %v3720
        %v3737 = vadd.f32 %v3529, %v3721
        %v3738 = vadd.f32 %v3531, %v3722
        %v3739 = vadd.f32 %v3534, %v3723
        %v3740 = vadd.f32 %v3536, %v3724
        %v3741 = vadd.f32 %v3539, %v3725
        %v3742 = vadd.f32 %v3541, %v3726
        %v3743 = vadd.f32 %v3544, %v3727
        %v3744 = vadd.f32 %v3546, %v3728
        %v3745 = vmul.f32 %v3674, 0.071428575
        %v3746 = vmul.f32 %v3676, 0.071428575
        %v3747 = vmul.f32 %v3679, 0.071428575
        %v3748 = vmul.f32 %v3681, 0.071428575
        %v3749 = vmul.f32 %v3684, 0.071428575
        %v3750 = vmul.f32 %v3686, 0.071428575
        %v3751 = vmul.f32 %v3689, 0.071428575
        %v3752 = vmul.f32 %v3691, 0.071428575
        %v3753 = vmul.f32 %v3694, 0.071428575
        %v3754 = vmul.f32 %v3696, 0.071428575
        %v3755 = vmul.f32 %v3699, 0.071428575
        %v3756 = vmul.f32 %v3701, 0.071428575
        %v3757 = vmul.f32 %v3704, 0.071428575
        %v3758 = vmul.f32 %v3706, 0.071428575
        %v3759 = vmul.f32 %v3709, 0.071428575
        %v3760 = vmul.f32 %v3711, 0.071428575
        %v3761 = vadd.f32 %v3398, %v3745
        %v3762 = vadd.f32 %v3399, %v3746
        %v3763 = vadd.f32 %v3400, %v3747
        %v3764 = vadd.f32 %v3401, %v3748
        %v3765 = vadd.f32 %v3402, %v3749
        %v3766 = vadd.f32 %v3403, %v3750
        %v3767 = vadd.f32 %v3404, %v3751
        %v3768 = vadd.f32 %v3405, %v3752
        %v3769 = vadd.f32 %v3406, %v3753
        %v3770 = vadd.f32 %v3407, %v3754
        %v3771 = vadd.f32 %v3408, %v3755
        %v3772 = vadd.f32 %v3409, %v3756
        %v3773 = vadd.f32 %v3410, %v3757
        %v3774 = vadd.f32 %v3411, %v3758
        %v3775 = vadd.f32 %v3412, %v3759
        %v3776 = vadd.f32 %v3413, %v3760
        %v3777 = vpack.c.bf16 %v3762, %v3761
        %v3778 = vpack.c.bf16 %v3764, %v3763
        %v3779 = vpack.c.bf16 %v3766, %v3765
        %v3780 = vpack.c.bf16 %v3768, %v3767
        %v3781 = vpack.c.bf16 %v3770, %v3769
        %v3782 = vpack.c.bf16 %v3772, %v3771
        %v3783 = vpack.c.bf16 %v3774, %v3773
        %v3784 = vpack.c.bf16 %v3776, %v3775
        %3785 = vmatpush.bf16.msra.mxu0 %v414
        %3786 = vmatpush.bf16.msra.mxu0 %v413
        %3787 = vmatpush.bf16.msra.mxu0 %v412
        %3788 = vmatpush.bf16.msra.mxu0 %v411
        %3789 = vmatpush.bf16.msra.mxu0 %v410
        %3790 = vmatpush.bf16.msra.mxu0 %v409
        %3791 = vmatpush.bf16.msra.mxu0 %v408
        %3792 = vmatpush.bf16.msra.mxu0 %v407
        %3793 = vmatmul.bf16.gmra.mxu0 %v3777
        %v3794 = vpop.f32.mrf.mxu0
        %v3795 = vadd.f32 %v3589, %v3794
        %v3796 = vpop.f32.mrf.mxu0
        %v3797 = vadd.f32 %v3589, %v3796
        %3798 = vmatmul.bf16.gmra.mxu0 %v3778
        %v3799 = vpop.f32.mrf.mxu0
        %v3800 = vadd.f32 %v3589, %v3799
        %v3801 = vpop.f32.mrf.mxu0
        %v3802 = vadd.f32 %v3589, %v3801
        %3803 = vmatmul.bf16.gmra.mxu0 %v3779
        %v3804 = vpop.f32.mrf.mxu0
        %v3805 = vadd.f32 %v3589, %v3804
        %v3806 = vpop.f32.mrf.mxu0
        %v3807 = vadd.f32 %v3589, %v3806
        %3808 = vmatmul.bf16.gmra.mxu0 %v3780
        %v3809 = vpop.f32.mrf.mxu0
        %v3810 = vadd.f32 %v3589, %v3809
        %v3811 = vpop.f32.mrf.mxu0
        %v3812 = vadd.f32 %v3589, %v3811
        %3813 = vmatmul.bf16.gmra.mxu0 %v3781
        %v3814 = vpop.f32.mrf.mxu0
        %v3815 = vadd.f32 %v3589, %v3814
        %v3816 = vpop.f32.mrf.mxu0
        %v3817 = vadd.f32 %v3589, %v3816
        %3818 = vmatmul.bf16.gmra.mxu0 %v3782
        %v3819 = vpop.f32.mrf.mxu0
        %v3820 = vadd.f32 %v3589, %v3819
        %v3821 = vpop.f32.mrf.mxu0
        %v3822 = vadd.f32 %v3589, %v3821
        %3823 = vmatmul.bf16.gmra.mxu0 %v3783
        %v3824 = vpop.f32.mrf.mxu0
        %v3825 = vadd.f32 %v3589, %v3824
        %v3826 = vpop.f32.mrf.mxu0
        %v3827 = vadd.f32 %v3589, %v3826
        %3828 = vmatmul.bf16.gmra.mxu0 %v3784
        %v3829 = vpop.f32.mrf.mxu0
        %v3830 = vadd.f32 %v3589, %v3829
        %v3831 = vpop.f32.mrf.mxu0
        %v3832 = vadd.f32 %v3589, %v3831
        %3833 = vdwg.mxu0
        %v3834 = vtanh.pop %v3795
        %v3835 = vtanh.pop %v3797
        %v3836 = vtanh.pop %v3800
        %v3837 = vtanh.pop %v3802
        %v3838 = vtanh.pop %v3805
        %v3839 = vtanh.pop %v3807
        %v3840 = vtanh.pop %v3810
        %v3841 = vtanh.pop %v3812
        %v3842 = vtanh.pop %v3815
        %v3843 = vtanh.pop %v3817
        %v3844 = vtanh.pop %v3820
        %v3845 = vtanh.pop %v3822
        %v3846 = vtanh.pop %v3825
        %v3847 = vtanh.pop %v3827
        %v3848 = vtanh.pop %v3830
        %v3849 = vtanh.pop %v3832
        %v3850 = vpack.c.bf16 %v3835, %v3834
        %v3851 = vpack.c.bf16 %v3837, %v3836
        %v3852 = vpack.c.bf16 %v3839, %v3838
        %v3853 = vpack.c.bf16 %v3841, %v3840
        %v3854 = vpack.c.bf16 %v3843, %v3842
        %v3855 = vpack.c.bf16 %v3845, %v3844
        %v3856 = vpack.c.bf16 %v3847, %v3846
        %v3857 = vpack.c.bf16 %v3849, %v3848
        %3858 = vmatpush.bf16.msra.mxu0 %v538
        %3859 = vmatpush.bf16.msra.mxu0 %v537
        %3860 = vmatpush.bf16.msra.mxu0 %v536
        %3861 = vmatpush.bf16.msra.mxu0 %v535
        %3862 = vmatpush.bf16.msra.mxu0 %v534
        %3863 = vmatpush.bf16.msra.mxu0 %v533
        %3864 = vmatpush.bf16.msra.mxu0 %v532
        %3865 = vmatpush.bf16.msra.mxu0 %v531
        %3866 = vmatmul.bf16.gmra.mxu0 %v3850
        %v3867 = vpop.f32.mrf.mxu0
        %v3868 = vadd.f32 %v497, %v3867
        %v3869 = vpop.f32.mrf.mxu0
        %v3870 = vadd.f32 %v497, %v3869
        %3871 = vmatmul.bf16.gmra.mxu0 %v3851
        %v3872 = vpop.f32.mrf.mxu0
        %v3873 = vadd.f32 %v497, %v3872
        %v3874 = vpop.f32.mrf.mxu0
        %v3875 = vadd.f32 %v497, %v3874
        %3876 = vmatmul.bf16.gmra.mxu0 %v3852
        %v3877 = vpop.f32.mrf.mxu0
        %v3878 = vadd.f32 %v497, %v3877
        %v3879 = vpop.f32.mrf.mxu0
        %v3880 = vadd.f32 %v497, %v3879
        %3881 = vmatmul.bf16.gmra.mxu0 %v3853
        %v3882 = vpop.f32.mrf.mxu0
        %v3883 = vadd.f32 %v497, %v3882
        %v3884 = vpop.f32.mrf.mxu0
        %v3885 = vadd.f32 %v497, %v3884
        %3886 = vmatmul.bf16.gmra.mxu0 %v3854
        %v3887 = vpop.f32.mrf.mxu0
        %v3888 = vadd.f32 %v497, %v3887
        %v3889 = vpop.f32.mrf.mxu0
        %v3890 = vadd.f32 %v497, %v3889
        %3891 = vmatmul.bf16.gmra.mxu0 %v3855
        %v3892 = vpop.f32.mrf.mxu0
        %v3893 = vadd.f32 %v497, %v3892
        %v3894 = vpop.f32.mrf.mxu0
        %v3895 = vadd.f32 %v497, %v3894
        %3896 = vmatmul.bf16.gmra.mxu0 %v3856
        %v3897 = vpop.f32.mrf.mxu0
        %v3898 = vadd.f32 %v497, %v3897
        %v3899 = vpop.f32.mrf.mxu0
        %v3900 = vadd.f32 %v497, %v3899
        %3901 = vmatmul.bf16.gmra.mxu0 %v3857
        %v3902 = vpop.f32.mrf.mxu0
        %v3903 = vadd.f32 %v497, %v3902
        %v3904 = vpop.f32.mrf.mxu0
        %v3905 = vadd.f32 %v497, %v3904
        %3906 = vdwg.mxu0
        %v3907 = vmul.f32 %v3868, 2.0
        %v3908 = vmul.f32 %v3870, 2.0
        %v3909 = vmul.f32 %v3873, 2.0
        %v3910 = vmul.f32 %v3875, 2.0
        %v3911 = vmul.f32 %v3878, 2.0
        %v3912 = vmul.f32 %v3880, 2.0
        %v3913 = vmul.f32 %v3883, 2.0
        %v3914 = vmul.f32 %v3885, 2.0
        %v3915 = vmul.f32 %v3888, 2.0
        %v3916 = vmul.f32 %v3890, 2.0
        %v3917 = vmul.f32 %v3893, 2.0
        %v3918 = vmul.f32 %v3895, 2.0
        %v3919 = vmul.f32 %v3898, 2.0
        %v3920 = vmul.f32 %v3900, 2.0
        %v3921 = vmul.f32 %v3903, 2.0
        %v3922 = vmul.f32 %v3905, 2.0
        %v3923 = vadd.f32 %v3729, %v3907
        %v3924 = vadd.f32 %v3730, %v3908
        %v3925 = vadd.f32 %v3731, %v3909
        %v3926 = vadd.f32 %v3732, %v3910
        %v3927 = vadd.f32 %v3733, %v3911
        %v3928 = vadd.f32 %v3734, %v3912
        %v3929 = vadd.f32 %v3735, %v3913
        %v3930 = vadd.f32 %v3736, %v3914
        %v3931 = vadd.f32 %v3737, %v3915
        %v3932 = vadd.f32 %v3738, %v3916
        %v3933 = vadd.f32 %v3739, %v3917
        %v3934 = vadd.f32 %v3740, %v3918
        %v3935 = vadd.f32 %v3741, %v3919
        %v3936 = vadd.f32 %v3742, %v3920
        %v3937 = vadd.f32 %v3743, %v3921
        %v3938 = vadd.f32 %v3744, %v3922
        %v3939 = vmul.f32 %v3868, 0.14285715
        %v3940 = vmul.f32 %v3870, 0.14285715
        %v3941 = vmul.f32 %v3873, 0.14285715
        %v3942 = vmul.f32 %v3875, 0.14285715
        %v3943 = vmul.f32 %v3878, 0.14285715
        %v3944 = vmul.f32 %v3880, 0.14285715
        %v3945 = vmul.f32 %v3883, 0.14285715
        %v3946 = vmul.f32 %v3885, 0.14285715
        %v3947 = vmul.f32 %v3888, 0.14285715
        %v3948 = vmul.f32 %v3890, 0.14285715
        %v3949 = vmul.f32 %v3893, 0.14285715
        %v3950 = vmul.f32 %v3895, 0.14285715
        %v3951 = vmul.f32 %v3898, 0.14285715
        %v3952 = vmul.f32 %v3900, 0.14285715
        %v3953 = vmul.f32 %v3903, 0.14285715
        %v3954 = vmul.f32 %v3905, 0.14285715
        %v3955 = vadd.f32 %v3398, %v3939
        %v3956 = vadd.f32 %v3399, %v3940
        %v3957 = vadd.f32 %v3400, %v3941
        %v3958 = vadd.f32 %v3401, %v3942
        %v3959 = vadd.f32 %v3402, %v3943
        %v3960 = vadd.f32 %v3403, %v3944
        %v3961 = vadd.f32 %v3404, %v3945
        %v3962 = vadd.f32 %v3405, %v3946
        %v3963 = vadd.f32 %v3406, %v3947
        %v3964 = vadd.f32 %v3407, %v3948
        %v3965 = vadd.f32 %v3408, %v3949
        %v3966 = vadd.f32 %v3409, %v3950
        %v3967 = vadd.f32 %v3410, %v3951
        %v3968 = vadd.f32 %v3411, %v3952
        %v3969 = vadd.f32 %v3412, %v3953
        %v3970 = vadd.f32 %v3413, %v3954
        %v3971 = vpack.c.bf16 %v3956, %v3955
        %v3972 = vpack.c.bf16 %v3958, %v3957
        %v3973 = vpack.c.bf16 %v3960, %v3959
        %v3974 = vpack.c.bf16 %v3962, %v3961
        %v3975 = vpack.c.bf16 %v3964, %v3963
        %v3976 = vpack.c.bf16 %v3966, %v3965
        %v3977 = vpack.c.bf16 %v3968, %v3967
        %v3978 = vpack.c.bf16 %v3970, %v3969
        %v3980 = vperm.slane %v3417, 0
        %3982 = vmatpush.bf16.msra.mxu0 %v414
        %3983 = vmatpush.bf16.msra.mxu0 %v413
        %3984 = vmatpush.bf16.msra.mxu0 %v412
        %3985 = vmatpush.bf16.msra.mxu0 %v411
        %3986 = vmatpush.bf16.msra.mxu0 %v410
        %3987 = vmatpush.bf16.msra.mxu0 %v409
        %3988 = vmatpush.bf16.msra.mxu0 %v408
        %3989 = vmatpush.bf16.msra.mxu0 %v407
        %3990 = vmatmul.bf16.gmra.mxu0 %v3971
        %v3991 = vpop.f32.mrf.mxu0
        %v3992 = vadd.f32 %v3980, %v3991
        %v3993 = vpop.f32.mrf.mxu0
        %v3994 = vadd.f32 %v3980, %v3993
        %3995 = vmatmul.bf16.gmra.mxu0 %v3972
        %v3996 = vpop.f32.mrf.mxu0
        %v3997 = vadd.f32 %v3980, %v3996
        %v3998 = vpop.f32.mrf.mxu0
        %v3999 = vadd.f32 %v3980, %v3998
        %4000 = vmatmul.bf16.gmra.mxu0 %v3973
        %v4001 = vpop.f32.mrf.mxu0
        %v4002 = vadd.f32 %v3980, %v4001
        %v4003 = vpop.f32.mrf.mxu0
        %v4004 = vadd.f32 %v3980, %v4003
        %4005 = vmatmul.bf16.gmra.mxu0 %v3974
        %v4006 = vpop.f32.mrf.mxu0
        %v4007 = vadd.f32 %v3980, %v4006
        %v4008 = vpop.f32.mrf.mxu0
        %v4009 = vadd.f32 %v3980, %v4008
        %4010 = vmatmul.bf16.gmra.mxu0 %v3975
        %v4011 = vpop.f32.mrf.mxu0
        %v4012 = vadd.f32 %v3980, %v4011
        %v4013 = vpop.f32.mrf.mxu0
        %v4014 = vadd.f32 %v3980, %v4013
        %4015 = vmatmul.bf16.gmra.mxu0 %v3976
        %v4016 = vpop.f32.mrf.mxu0
        %v4017 = vadd.f32 %v3980, %v4016
        %v4018 = vpop.f32.mrf.mxu0
        %v4019 = vadd.f32 %v3980, %v4018
        %4020 = vmatmul.bf16.gmra.mxu0 %v3977
        %v4021 = vpop.f32.mrf.mxu0
        %v4022 = vadd.f32 %v3980, %v4021
        %v4023 = vpop.f32.mrf.mxu0
        %v4024 = vadd.f32 %v3980, %v4023
        %4025 = vmatmul.bf16.gmra.mxu0 %v3978
        %v4026 = vpop.f32.mrf.mxu0
        %v4027 = vadd.f32 %v3980, %v4026
        %v4028 = vpop.f32.mrf.mxu0
        %v4029 = vadd.f32 %v3980, %v4028
        %4030 = vdwg.mxu0
        %v4031 = vtanh.pop %v3992
        %v4032 = vtanh.pop %v3994
        %v4033 = vtanh.pop %v3997
        %v4034 = vtanh.pop %v3999
        %v4035 = vtanh.pop %v4002
        %v4036 = vtanh.pop %v4004
        %v4037 = vtanh.pop %v4007
        %v4038 = vtanh.pop %v4009
        %v4039 = vtanh.pop %v4012
        %v4040 = vtanh.pop %v4014
        %v4041 = vtanh.pop %v4017
        %v4042 = vtanh.pop %v4019
        %v4043 = vtanh.pop %v4022
        %v4044 = vtanh.pop %v4024
        %v4045 = vtanh.pop %v4027
        %v4046 = vtanh.pop %v4029
        %v4047 = vpack.c.bf16 %v4032, %v4031
        %v4048 = vpack.c.bf16 %v4034, %v4033
        %v4049 = vpack.c.bf16 %v4036, %v4035
        %v4050 = vpack.c.bf16 %v4038, %v4037
        %v4051 = vpack.c.bf16 %v4040, %v4039
        %v4052 = vpack.c.bf16 %v4042, %v4041
        %v4053 = vpack.c.bf16 %v4044, %v4043
        %v4054 = vpack.c.bf16 %v4046, %v4045
        %4055 = vmatpush.bf16.msra.mxu0 %v538
        %4056 = vmatpush.bf16.msra.mxu0 %v537
        %4057 = vmatpush.bf16.msra.mxu0 %v536
        %4058 = vmatpush.bf16.msra.mxu0 %v535
        %4059 = vmatpush.bf16.msra.mxu0 %v534
        %4060 = vmatpush.bf16.msra.mxu0 %v533
        %4061 = vmatpush.bf16.msra.mxu0 %v532
        %4062 = vmatpush.bf16.msra.mxu0 %v531
        %4063 = vmatmul.bf16.gmra.mxu0 %v4047
        %v4064 = vpop.f32.mrf.mxu0
        %v4065 = vadd.f32 %v497, %v4064
        %v4066 = vpop.f32.mrf.mxu0
        %v4067 = vadd.f32 %v497, %v4066
        %4068 = vmatmul.bf16.gmra.mxu0 %v4048
        %v4069 = vpop.f32.mrf.mxu0
        %v4070 = vadd.f32 %v497, %v4069
        %v4071 = vpop.f32.mrf.mxu0
        %v4072 = vadd.f32 %v497, %v4071
        %4073 = vmatmul.bf16.gmra.mxu0 %v4049
        %v4074 = vpop.f32.mrf.mxu0
        %v4075 = vadd.f32 %v497, %v4074
        %v4076 = vpop.f32.mrf.mxu0
        %v4077 = vadd.f32 %v497, %v4076
        %4078 = vmatmul.bf16.gmra.mxu0 %v4050
        %v4079 = vpop.f32.mrf.mxu0
        %v4080 = vadd.f32 %v497, %v4079
        %v4081 = vpop.f32.mrf.mxu0
        %v4082 = vadd.f32 %v497, %v4081
        %4083 = vmatmul.bf16.gmra.mxu0 %v4051
        %v4084 = vpop.f32.mrf.mxu0
        %v4085 = vadd.f32 %v497, %v4084
        %v4086 = vpop.f32.mrf.mxu0
        %v4087 = vadd.f32 %v497, %v4086
        %4088 = vmatmul.bf16.gmra.mxu0 %v4052
        %v4089 = vpop.f32.mrf.mxu0
        %v4090 = vadd.f32 %v497, %v4089
        %v4091 = vpop.f32.mrf.mxu0
        %v4092 = vadd.f32 %v497, %v4091
        %4093 = vmatmul.bf16.gmra.mxu0 %v4053
        %v4094 = vpop.f32.mrf.mxu0
        %v4095 = vadd.f32 %v497, %v4094
        %v4096 = vpop.f32.mrf.mxu0
        %v4097 = vadd.f32 %v497, %v4096
        %4098 = vmatmul.bf16.gmra.mxu0 %v4054
        %v4099 = vpop.f32.mrf.mxu0
        %v4100 = vadd.f32 %v497, %v4099
        %v4101 = vpop.f32.mrf.mxu0
        %v4102 = vadd.f32 %v497, %v4101
        %4103 = vdwg.mxu0
        %v4104 = vadd.f32 %v3923, %v4065
        %v4105 = vadd.f32 %v3924, %v4067
        %v4106 = vadd.f32 %v3925, %v4070
        %v4107 = vadd.f32 %v3926, %v4072
        %v4108 = vadd.f32 %v3927, %v4075
        %v4109 = vadd.f32 %v3928, %v4077
        %v4110 = vadd.f32 %v3929, %v4080
        %v4111 = vadd.f32 %v3930, %v4082
        %v4112 = vadd.f32 %v3931, %v4085
        %v4113 = vadd.f32 %v3932, %v4087
        %v4114 = vadd.f32 %v3933, %v4090
        %v4115 = vadd.f32 %v3934, %v4092
        %v4116 = vadd.f32 %v3935, %v4095
        %v4117 = vadd.f32 %v3936, %v4097
        %v4118 = vadd.f32 %v3937, %v4100
        %v4119 = vadd.f32 %v3938, %v4102
        %v4120 = vmul.f32 %v4104, 0.023809524
        %v4121 = vmul.f32 %v4105, 0.023809524
        %v4122 = vmul.f32 %v4106, 0.023809524
        %v4123 = vmul.f32 %v4107, 0.023809524
        %v4124 = vmul.f32 %v4108, 0.023809524
        %v4125 = vmul.f32 %v4109, 0.023809524
        %v4126 = vmul.f32 %v4110, 0.023809524
        %v4127 = vmul.f32 %v4111, 0.023809524
        %v4128 = vmul.f32 %v4112, 0.023809524
        %v4129 = vmul.f32 %v4113, 0.023809524
        %v4130 = vmul.f32 %v4114, 0.023809524
        %v4131 = vmul.f32 %v4115, 0.023809524
        %v4132 = vmul.f32 %v4116, 0.023809524
        %v4133 = vmul.f32 %v4117, 0.023809524
        %v4134 = vmul.f32 %v4118, 0.023809524
        %v4135 = vmul.f32 %v4119, 0.023809524
        %v4136 = vadd.f32 %v3398, %v4120
        %v4137 = vadd.f32 %v3399, %v4121
        %v4138 = vadd.f32 %v3400, %v4122
        %v4139 = vadd.f32 %v3401, %v4123
        %v4140 = vadd.f32 %v3402, %v4124
        %v4141 = vadd.f32 %v3403, %v4125
        %v4142 = vadd.f32 %v3404, %v4126
        %v4143 = vadd.f32 %v3405, %v4127
        %v4144 = vadd.f32 %v3406, %v4128
        %v4145 = vadd.f32 %v3407, %v4129
        %v4146 = vadd.f32 %v3408, %v4130
        %v4147 = vadd.f32 %v3409, %v4131
        %v4148 = vadd.f32 %v3410, %v4132
        %v4149 = vadd.f32 %v3411, %v4133
        %v4150 = vadd.f32 %v3412, %v4134
        %v4151 = vadd.f32 %v3413, %v4135
        %v4152 = vmul.f32 %v340, 0.7857143
        %v4153 = vadd.f32 %v339, %v4152
        %v4154 = vmul.f32 %v340, 0.85714287
        %v4155 = vadd.f32 %v339, %v4154
        %v4156 = vpack.c.bf16 %v4137, %v4136
        %v4157 = vpack.c.bf16 %v4139, %v4138
        %v4158 = vpack.c.bf16 %v4141, %v4140
        %v4159 = vpack.c.bf16 %v4143, %v4142
        %v4160 = vpack.c.bf16 %v4145, %v4144
        %v4161 = vpack.c.bf16 %v4147, %v4146
        %v4162 = vpack.c.bf16 %v4149, %v4148
        %v4163 = vpack.c.bf16 %v4151, %v4150
        %4164 = vmatpush.bf16.msra.mxu0 %v414
        %4165 = vmatpush.bf16.msra.mxu0 %v413
        %4166 = vmatpush.bf16.msra.mxu0 %v412
        %4167 = vmatpush.bf16.msra.mxu0 %v411
        %4168 = vmatpush.bf16.msra.mxu0 %v410
        %4169 = vmatpush.bf16.msra.mxu0 %v409
        %4170 = vmatpush.bf16.msra.mxu0 %v408
        %4171 = vmatpush.bf16.msra.mxu0 %v407
        %4172 = vmatmul.bf16.gmra.mxu0 %v4156
        %v4173 = vpop.f32.mrf.mxu0
        %v4174 = vadd.f32 %v3980, %v4173
        %v4175 = vpop.f32.mrf.mxu0
        %v4176 = vadd.f32 %v3980, %v4175
        %4177 = vmatmul.bf16.gmra.mxu0 %v4157
        %v4178 = vpop.f32.mrf.mxu0
        %v4179 = vadd.f32 %v3980, %v4178
        %v4180 = vpop.f32.mrf.mxu0
        %v4181 = vadd.f32 %v3980, %v4180
        %4182 = vmatmul.bf16.gmra.mxu0 %v4158
        %v4183 = vpop.f32.mrf.mxu0
        %v4184 = vadd.f32 %v3980, %v4183
        %v4185 = vpop.f32.mrf.mxu0
        %v4186 = vadd.f32 %v3980, %v4185
        %4187 = vmatmul.bf16.gmra.mxu0 %v4159
        %v4188 = vpop.f32.mrf.mxu0
        %v4189 = vadd.f32 %v3980, %v4188
        %v4190 = vpop.f32.mrf.mxu0
        %v4191 = vadd.f32 %v3980, %v4190
        %4192 = vmatmul.bf16.gmra.mxu0 %v4160
        %v4193 = vpop.f32.mrf.mxu0
        %v4194 = vadd.f32 %v3980, %v4193
        %v4195 = vpop.f32.mrf.mxu0
        %v4196 = vadd.f32 %v3980, %v4195
        %4197 = vmatmul.bf16.gmra.mxu0 %v4161
        %v4198 = vpop.f32.mrf.mxu0
        %v4199 = vadd.f32 %v3980, %v4198
        %v4200 = vpop.f32.mrf.mxu0
        %v4201 = vadd.f32 %v3980, %v4200
        %4202 = vmatmul.bf16.gmra.mxu0 %v4162
        %v4203 = vpop.f32.mrf.mxu0
        %v4204 = vadd.f32 %v3980, %v4203
        %v4205 = vpop.f32.mrf.mxu0
        %v4206 = vadd.f32 %v3980, %v4205
        %4207 = vmatmul.bf16.gmra.mxu0 %v4163
        %v4208 = vpop.f32.mrf.mxu0
        %v4209 = vadd.f32 %v3980, %v4208
        %v4210 = vpop.f32.mrf.mxu0
        %v4211 = vadd.f32 %v3980, %v4210
        %4212 = vdwg.mxu0
        %v4213 = vtanh.pop %v4174
        %v4214 = vtanh.pop %v4176
        %v4215 = vtanh.pop %v4179
        %v4216 = vtanh.pop %v4181
        %v4217 = vtanh.pop %v4184
        %v4218 = vtanh.pop %v4186
        %v4219 = vtanh.pop %v4189
        %v4220 = vtanh.pop %v4191
        %v4221 = vtanh.pop %v4194
        %v4222 = vtanh.pop %v4196
        %v4223 = vtanh.pop %v4199
        %v4224 = vtanh.pop %v4201
        %v4225 = vtanh.pop %v4204
        %v4226 = vtanh.pop %v4206
        %v4227 = vtanh.pop %v4209
        %v4228 = vtanh.pop %v4211
        %v4229 = vpack.c.bf16 %v4214, %v4213
        %v4230 = vpack.c.bf16 %v4216, %v4215
        %v4231 = vpack.c.bf16 %v4218, %v4217
        %v4232 = vpack.c.bf16 %v4220, %v4219
        %v4233 = vpack.c.bf16 %v4222, %v4221
        %v4234 = vpack.c.bf16 %v4224, %v4223
        %v4235 = vpack.c.bf16 %v4226, %v4225
        %v4236 = vpack.c.bf16 %v4228, %v4227
        %4237 = vmatpush.bf16.msra.mxu0 %v538
        %4238 = vmatpush.bf16.msra.mxu0 %v537
        %4239 = vmatpush.bf16.msra.mxu0 %v536
        %4240 = vmatpush.bf16.msra.mxu0 %v535
        %4241 = vmatpush.bf16.msra.mxu0 %v534
        %4242 = vmatpush.bf16.msra.mxu0 %v533
        %4243 = vmatpush.bf16.msra.mxu0 %v532
        %4244 = vmatpush.bf16.msra.mxu0 %v531
        %4245 = vmatmul.bf16.gmra.mxu0 %v4229
        %v4246 = vpop.f32.mrf.mxu0
        %v4247 = vadd.f32 %v497, %v4246
        %v4248 = vpop.f32.mrf.mxu0
        %v4249 = vadd.f32 %v497, %v4248
        %4250 = vmatmul.bf16.gmra.mxu0 %v4230
        %v4251 = vpop.f32.mrf.mxu0
        %v4252 = vadd.f32 %v497, %v4251
        %v4253 = vpop.f32.mrf.mxu0
        %v4254 = vadd.f32 %v497, %v4253
        %4255 = vmatmul.bf16.gmra.mxu0 %v4231
        %v4256 = vpop.f32.mrf.mxu0
        %v4257 = vadd.f32 %v497, %v4256
        %v4258 = vpop.f32.mrf.mxu0
        %v4259 = vadd.f32 %v497, %v4258
        %4260 = vmatmul.bf16.gmra.mxu0 %v4232
        %v4261 = vpop.f32.mrf.mxu0
        %v4262 = vadd.f32 %v497, %v4261
        %v4263 = vpop.f32.mrf.mxu0
        %v4264 = vadd.f32 %v497, %v4263
        %4265 = vmatmul.bf16.gmra.mxu0 %v4233
        %v4266 = vpop.f32.mrf.mxu0
        %v4267 = vadd.f32 %v497, %v4266
        %v4268 = vpop.f32.mrf.mxu0
        %v4269 = vadd.f32 %v497, %v4268
        %4270 = vmatmul.bf16.gmra.mxu0 %v4234
        %v4271 = vpop.f32.mrf.mxu0
        %v4272 = vadd.f32 %v497, %v4271
        %v4273 = vpop.f32.mrf.mxu0
        %v4274 = vadd.f32 %v497, %v4273
        %4275 = vmatmul.bf16.gmra.mxu0 %v4235
        %v4276 = vpop.f32.mrf.mxu0
        %v4277 = vadd.f32 %v497, %v4276
        %v4278 = vpop.f32.mrf.mxu0
        %v4279 = vadd.f32 %v497, %v4278
        %4280 = vmatmul.bf16.gmra.mxu0 %v4236
        %v4281 = vpop.f32.mrf.mxu0
        %v4282 = vadd.f32 %v497, %v4281
        %v4283 = vpop.f32.mrf.mxu0
        %v4284 = vadd.f32 %v497, %v4283
        %4285 = vdwg.mxu0
        %v4286 = vmul.f32 %v4247, 0.071428575
        %v4287 = vmul.f32 %v4249, 0.071428575
        %v4288 = vmul.f32 %v4252, 0.071428575
        %v4289 = vmul.f32 %v4254, 0.071428575
        %v4290 = vmul.f32 %v4257, 0.071428575
        %v4291 = vmul.f32 %v4259, 0.071428575
        %v4292 = vmul.f32 %v4262, 0.071428575
        %v4293 = vmul.f32 %v4264, 0.071428575
        %v4294 = vmul.f32 %v4267, 0.071428575
        %v4295 = vmul.f32 %v4269, 0.071428575
        %v4296 = vmul.f32 %v4272, 0.071428575
        %v4297 = vmul.f32 %v4274, 0.071428575
        %v4298 = vmul.f32 %v4277, 0.071428575
        %v4299 = vmul.f32 %v4279, 0.071428575
        %v4300 = vmul.f32 %v4282, 0.071428575
        %v4301 = vmul.f32 %v4284, 0.071428575
        %v4302 = vadd.f32 %v4136, %v4286
        %v4303 = vadd.f32 %v4137, %v4287
        %v4304 = vadd.f32 %v4138, %v4288
        %v4305 = vadd.f32 %v4139, %v4289
        %v4306 = vadd.f32 %v4140, %v4290
        %v4307 = vadd.f32 %v4141, %v4291
        %v4308 = vadd.f32 %v4142, %v4292
        %v4309 = vadd.f32 %v4143, %v4293
        %v4310 = vadd.f32 %v4144, %v4294
        %v4311 = vadd.f32 %v4145, %v4295
        %v4312 = vadd.f32 %v4146, %v4296
        %v4313 = vadd.f32 %v4147, %v4297
        %v4314 = vadd.f32 %v4148, %v4298
        %v4315 = vadd.f32 %v4149, %v4299
        %v4316 = vadd.f32 %v4150, %v4300
        %v4317 = vadd.f32 %v4151, %v4301
        %v4318 = vpack.c.bf16 %v4303, %v4302
        %v4319 = vpack.c.bf16 %v4305, %v4304
        %v4320 = vpack.c.bf16 %v4307, %v4306
        %v4321 = vpack.c.bf16 %v4309, %v4308
        %v4322 = vpack.c.bf16 %v4311, %v4310
        %v4323 = vpack.c.bf16 %v4313, %v4312
        %v4324 = vpack.c.bf16 %v4315, %v4314
        %v4325 = vpack.c.bf16 %v4317, %v4316
        %v4327 = vperm.slane %v4153, 0
        %4329 = vmatpush.bf16.msra.mxu0 %v414
        %4330 = vmatpush.bf16.msra.mxu0 %v413
        %4331 = vmatpush.bf16.msra.mxu0 %v412
        %4332 = vmatpush.bf16.msra.mxu0 %v411
        %4333 = vmatpush.bf16.msra.mxu0 %v410
        %4334 = vmatpush.bf16.msra.mxu0 %v409
        %4335 = vmatpush.bf16.msra.mxu0 %v408
        %4336 = vmatpush.bf16.msra.mxu0 %v407
        %4337 = vmatmul.bf16.gmra.mxu0 %v4318
        %v4338 = vpop.f32.mrf.mxu0
        %v4339 = vadd.f32 %v4327, %v4338
        %v4340 = vpop.f32.mrf.mxu0
        %v4341 = vadd.f32 %v4327, %v4340
        %4342 = vmatmul.bf16.gmra.mxu0 %v4319
        %v4343 = vpop.f32.mrf.mxu0
        %v4344 = vadd.f32 %v4327, %v4343
        %v4345 = vpop.f32.mrf.mxu0
        %v4346 = vadd.f32 %v4327, %v4345
        %4347 = vmatmul.bf16.gmra.mxu0 %v4320
        %v4348 = vpop.f32.mrf.mxu0
        %v4349 = vadd.f32 %v4327, %v4348
        %v4350 = vpop.f32.mrf.mxu0
        %v4351 = vadd.f32 %v4327, %v4350
        %4352 = vmatmul.bf16.gmra.mxu0 %v4321
        %v4353 = vpop.f32.mrf.mxu0
        %v4354 = vadd.f32 %v4327, %v4353
        %v4355 = vpop.f32.mrf.mxu0
        %v4356 = vadd.f32 %v4327, %v4355
        %4357 = vmatmul.bf16.gmra.mxu0 %v4322
        %v4358 = vpop.f32.mrf.mxu0
        %v4359 = vadd.f32 %v4327, %v4358
        %v4360 = vpop.f32.mrf.mxu0
        %v4361 = vadd.f32 %v4327, %v4360
        %4362 = vmatmul.bf16.gmra.mxu0 %v4323
        %v4363 = vpop.f32.mrf.mxu0
        %v4364 = vadd.f32 %v4327, %v4363
        %v4365 = vpop.f32.mrf.mxu0
        %v4366 = vadd.f32 %v4327, %v4365
        %4367 = vmatmul.bf16.gmra.mxu0 %v4324
        %v4368 = vpop.f32.mrf.mxu0
        %v4369 = vadd.f32 %v4327, %v4368
        %v4370 = vpop.f32.mrf.mxu0
        %v4371 = vadd.f32 %v4327, %v4370
        %4372 = vmatmul.bf16.gmra.mxu0 %v4325
        %v4373 = vpop.f32.mrf.mxu0
        %v4374 = vadd.f32 %v4327, %v4373
        %v4375 = vpop.f32.mrf.mxu0
        %v4376 = vadd.f32 %v4327, %v4375
        %4377 = vdwg.mxu0
        %v4378 = vtanh.pop %v4339
        %v4379 = vtanh.pop %v4341
        %v4380 = vtanh.pop %v4344
        %v4381 = vtanh.pop %v4346
        %v4382 = vtanh.pop %v4349
        %v4383 = vtanh.pop %v4351
        %v4384 = vtanh.pop %v4354
        %v4385 = vtanh.pop %v4356
        %v4386 = vtanh.pop %v4359
        %v4387 = vtanh.pop %v4361
        %v4388 = vtanh.pop %v4364
        %v4389 = vtanh.pop %v4366
        %v4390 = vtanh.pop %v4369
        %v4391 = vtanh.pop %v4371
        %v4392 = vtanh.pop %v4374
        %v4393 = vtanh.pop %v4376
        %v4394 = vpack.c.bf16 %v4379, %v4378
        %v4395 = vpack.c.bf16 %v4381, %v4380
        %v4396 = vpack.c.bf16 %v4383, %v4382
        %v4397 = vpack.c.bf16 %v4385, %v4384
        %v4398 = vpack.c.bf16 %v4387, %v4386
        %v4399 = vpack.c.bf16 %v4389, %v4388
        %v4400 = vpack.c.bf16 %v4391, %v4390
        %v4401 = vpack.c.bf16 %v4393, %v4392
        %4402 = vmatpush.bf16.msra.mxu0 %v538
        %4403 = vmatpush.bf16.msra.mxu0 %v537
        %4404 = vmatpush.bf16.msra.mxu0 %v536
        %4405 = vmatpush.bf16.msra.mxu0 %v535
        %4406 = vmatpush.bf16.msra.mxu0 %v534
        %4407 = vmatpush.bf16.msra.mxu0 %v533
        %4408 = vmatpush.bf16.msra.mxu0 %v532
        %4409 = vmatpush.bf16.msra.mxu0 %v531
        %4410 = vmatmul.bf16.gmra.mxu0 %v4394
        %v4411 = vpop.f32.mrf.mxu0
        %v4412 = vadd.f32 %v497, %v4411
        %v4413 = vpop.f32.mrf.mxu0
        %v4414 = vadd.f32 %v497, %v4413
        %4415 = vmatmul.bf16.gmra.mxu0 %v4395
        %v4416 = vpop.f32.mrf.mxu0
        %v4417 = vadd.f32 %v497, %v4416
        %v4418 = vpop.f32.mrf.mxu0
        %v4419 = vadd.f32 %v497, %v4418
        %4420 = vmatmul.bf16.gmra.mxu0 %v4396
        %v4421 = vpop.f32.mrf.mxu0
        %v4422 = vadd.f32 %v497, %v4421
        %v4423 = vpop.f32.mrf.mxu0
        %v4424 = vadd.f32 %v497, %v4423
        %4425 = vmatmul.bf16.gmra.mxu0 %v4397
        %v4426 = vpop.f32.mrf.mxu0
        %v4427 = vadd.f32 %v497, %v4426
        %v4428 = vpop.f32.mrf.mxu0
        %v4429 = vadd.f32 %v497, %v4428
        %4430 = vmatmul.bf16.gmra.mxu0 %v4398
        %v4431 = vpop.f32.mrf.mxu0
        %v4432 = vadd.f32 %v497, %v4431
        %v4433 = vpop.f32.mrf.mxu0
        %v4434 = vadd.f32 %v497, %v4433
        %4435 = vmatmul.bf16.gmra.mxu0 %v4399
        %v4436 = vpop.f32.mrf.mxu0
        %v4437 = vadd.f32 %v497, %v4436
        %v4438 = vpop.f32.mrf.mxu0
        %v4439 = vadd.f32 %v497, %v4438
        %4440 = vmatmul.bf16.gmra.mxu0 %v4400
        %v4441 = vpop.f32.mrf.mxu0
        %v4442 = vadd.f32 %v497, %v4441
        %v4443 = vpop.f32.mrf.mxu0
        %v4444 = vadd.f32 %v497, %v4443
        %4445 = vmatmul.bf16.gmra.mxu0 %v4401
        %v4446 = vpop.f32.mrf.mxu0
        %v4447 = vadd.f32 %v497, %v4446
        %v4448 = vpop.f32.mrf.mxu0
        %v4449 = vadd.f32 %v497, %v4448
        %4450 = vdwg.mxu0
        %v4451 = vmul.f32 %v4412, 2.0
        %v4452 = vmul.f32 %v4414, 2.0
        %v4453 = vmul.f32 %v4417, 2.0
        %v4454 = vmul.f32 %v4419, 2.0
        %v4455 = vmul.f32 %v4422, 2.0
        %v4456 = vmul.f32 %v4424, 2.0
        %v4457 = vmul.f32 %v4427, 2.0
        %v4458 = vmul.f32 %v4429, 2.0
        %v4459 = vmul.f32 %v4432, 2.0
        %v4460 = vmul.f32 %v4434, 2.0
        %v4461 = vmul.f32 %v4437, 2.0
        %v4462 = vmul.f32 %v4439, 2.0
        %v4463 = vmul.f32 %v4442, 2.0
        %v4464 = vmul.f32 %v4444, 2.0
        %v4465 = vmul.f32 %v4447, 2.0
        %v4466 = vmul.f32 %v4449, 2.0
        %v4467 = vadd.f32 %v4247, %v4451
        %v4468 = vadd.f32 %v4249, %v4452
        %v4469 = vadd.f32 %v4252, %v4453
        %v4470 = vadd.f32 %v4254, %v4454
        %v4471 = vadd.f32 %v4257, %v4455
        %v4472 = vadd.f32 %v4259, %v4456
        %v4473 = vadd.f32 %v4262, %v4457
        %v4474 = vadd.f32 %v4264, %v4458
        %v4475 = vadd.f32 %v4267, %v4459
        %v4476 = vadd.f32 %v4269, %v4460
        %v4477 = vadd.f32 %v4272, %v4461
        %v4478 = vadd.f32 %v4274, %v4462
        %v4479 = vadd.f32 %v4277, %v4463
        %v4480 = vadd.f32 %v4279, %v4464
        %v4481 = vadd.f32 %v4282, %v4465
        %v4482 = vadd.f32 %v4284, %v4466
        %v4483 = vmul.f32 %v4412, 0.071428575
        %v4484 = vmul.f32 %v4414, 0.071428575
        %v4485 = vmul.f32 %v4417, 0.071428575
        %v4486 = vmul.f32 %v4419, 0.071428575
        %v4487 = vmul.f32 %v4422, 0.071428575
        %v4488 = vmul.f32 %v4424, 0.071428575
        %v4489 = vmul.f32 %v4427, 0.071428575
        %v4490 = vmul.f32 %v4429, 0.071428575
        %v4491 = vmul.f32 %v4432, 0.071428575
        %v4492 = vmul.f32 %v4434, 0.071428575
        %v4493 = vmul.f32 %v4437, 0.071428575
        %v4494 = vmul.f32 %v4439, 0.071428575
        %v4495 = vmul.f32 %v4442, 0.071428575
        %v4496 = vmul.f32 %v4444, 0.071428575
        %v4497 = vmul.f32 %v4447, 0.071428575
        %v4498 = vmul.f32 %v4449, 0.071428575
        %v4499 = vadd.f32 %v4136, %v4483
        %v4500 = vadd.f32 %v4137, %v4484
        %v4501 = vadd.f32 %v4138, %v4485
        %v4502 = vadd.f32 %v4139, %v4486
        %v4503 = vadd.f32 %v4140, %v4487
        %v4504 = vadd.f32 %v4141, %v4488
        %v4505 = vadd.f32 %v4142, %v4489
        %v4506 = vadd.f32 %v4143, %v4490
        %v4507 = vadd.f32 %v4144, %v4491
        %v4508 = vadd.f32 %v4145, %v4492
        %v4509 = vadd.f32 %v4146, %v4493
        %v4510 = vadd.f32 %v4147, %v4494
        %v4511 = vadd.f32 %v4148, %v4495
        %v4512 = vadd.f32 %v4149, %v4496
        %v4513 = vadd.f32 %v4150, %v4497
        %v4514 = vadd.f32 %v4151, %v4498
        %v4515 = vpack.c.bf16 %v4500, %v4499
        %v4516 = vpack.c.bf16 %v4502, %v4501
        %v4517 = vpack.c.bf16 %v4504, %v4503
        %v4518 = vpack.c.bf16 %v4506, %v4505
        %v4519 = vpack.c.bf16 %v4508, %v4507
        %v4520 = vpack.c.bf16 %v4510, %v4509
        %v4521 = vpack.c.bf16 %v4512, %v4511
        %v4522 = vpack.c.bf16 %v4514, %v4513
        %4523 = vmatpush.bf16.msra.mxu0 %v414
        %4524 = vmatpush.bf16.msra.mxu0 %v413
        %4525 = vmatpush.bf16.msra.mxu0 %v412
        %4526 = vmatpush.bf16.msra.mxu0 %v411
        %4527 = vmatpush.bf16.msra.mxu0 %v410
        %4528 = vmatpush.bf16.msra.mxu0 %v409
        %4529 = vmatpush.bf16.msra.mxu0 %v408
        %4530 = vmatpush.bf16.msra.mxu0 %v407
        %4531 = vmatmul.bf16.gmra.mxu0 %v4515
        %v4532 = vpop.f32.mrf.mxu0
        %v4533 = vadd.f32 %v4327, %v4532
        %v4534 = vpop.f32.mrf.mxu0
        %v4535 = vadd.f32 %v4327, %v4534
        %4536 = vmatmul.bf16.gmra.mxu0 %v4516
        %v4537 = vpop.f32.mrf.mxu0
        %v4538 = vadd.f32 %v4327, %v4537
        %v4539 = vpop.f32.mrf.mxu0
        %v4540 = vadd.f32 %v4327, %v4539
        %4541 = vmatmul.bf16.gmra.mxu0 %v4517
        %v4542 = vpop.f32.mrf.mxu0
        %v4543 = vadd.f32 %v4327, %v4542
        %v4544 = vpop.f32.mrf.mxu0
        %v4545 = vadd.f32 %v4327, %v4544
        %4546 = vmatmul.bf16.gmra.mxu0 %v4518
        %v4547 = vpop.f32.mrf.mxu0
        %v4548 = vadd.f32 %v4327, %v4547
        %v4549 = vpop.f32.mrf.mxu0
        %v4550 = vadd.f32 %v4327, %v4549
        %4551 = vmatmul.bf16.gmra.mxu0 %v4519
        %v4552 = vpop.f32.mrf.mxu0
        %v4553 = vadd.f32 %v4327, %v4552
        %v4554 = vpop.f32.mrf.mxu0
        %v4555 = vadd.f32 %v4327, %v4554
        %4556 = vmatmul.bf16.gmra.mxu0 %v4520
        %v4557 = vpop.f32.mrf.mxu0
        %v4558 = vadd.f32 %v4327, %v4557
        %v4559 = vpop.f32.mrf.mxu0
        %v4560 = vadd.f32 %v4327, %v4559
        %4561 = vmatmul.bf16.gmra.mxu0 %v4521
        %v4562 = vpop.f32.mrf.mxu0
        %v4563 = vadd.f32 %v4327, %v4562
        %v4564 = vpop.f32.mrf.mxu0
        %v4565 = vadd.f32 %v4327, %v4564
        %4566 = vmatmul.bf16.gmra.mxu0 %v4522
        %v4567 = vpop.f32.mrf.mxu0
        %v4568 = vadd.f32 %v4327, %v4567
        %v4569 = vpop.f32.mrf.mxu0
        %v4570 = vadd.f32 %v4327, %v4569
        %4571 = vdwg.mxu0
        %v4572 = vtanh.pop %v4533
        %v4573 = vtanh.pop %v4535
        %v4574 = vtanh.pop %v4538
        %v4575 = vtanh.pop %v4540
        %v4576 = vtanh.pop %v4543
        %v4577 = vtanh.pop %v4545
        %v4578 = vtanh.pop %v4548
        %v4579 = vtanh.pop %v4550
        %v4580 = vtanh.pop %v4553
        %v4581 = vtanh.pop %v4555
        %v4582 = vtanh.pop %v4558
        %v4583 = vtanh.pop %v4560
        %v4584 = vtanh.pop %v4563
        %v4585 = vtanh.pop %v4565
        %v4586 = vtanh.pop %v4568
        %v4587 = vtanh.pop %v4570
        %v4588 = vpack.c.bf16 %v4573, %v4572
        %v4589 = vpack.c.bf16 %v4575, %v4574
        %v4590 = vpack.c.bf16 %v4577, %v4576
        %v4591 = vpack.c.bf16 %v4579, %v4578
        %v4592 = vpack.c.bf16 %v4581, %v4580
        %v4593 = vpack.c.bf16 %v4583, %v4582
        %v4594 = vpack.c.bf16 %v4585, %v4584
        %v4595 = vpack.c.bf16 %v4587, %v4586
        %4596 = vmatpush.bf16.msra.mxu0 %v538
        %4597 = vmatpush.bf16.msra.mxu0 %v537
        %4598 = vmatpush.bf16.msra.mxu0 %v536
        %4599 = vmatpush.bf16.msra.mxu0 %v535
        %4600 = vmatpush.bf16.msra.mxu0 %v534
        %4601 = vmatpush.bf16.msra.mxu0 %v533
        %4602 = vmatpush.bf16.msra.mxu0 %v532
        %4603 = vmatpush.bf16.msra.mxu0 %v531
        %4604 = vmatmul.bf16.gmra.mxu0 %v4588
        %v4605 = vpop.f32.mrf.mxu0
        %v4606 = vadd.f32 %v497, %v4605
        %v4607 = vpop.f32.mrf.mxu0
        %v4608 = vadd.f32 %v497, %v4607
        %4609 = vmatmul.bf16.gmra.mxu0 %v4589
        %v4610 = vpop.f32.mrf.mxu0
        %v4611 = vadd.f32 %v497, %v4610
        %v4612 = vpop.f32.mrf.mxu0
        %v4613 = vadd.f32 %v497, %v4612
        %4614 = vmatmul.bf16.gmra.mxu0 %v4590
        %v4615 = vpop.f32.mrf.mxu0
        %v4616 = vadd.f32 %v497, %v4615
        %v4617 = vpop.f32.mrf.mxu0
        %v4618 = vadd.f32 %v497, %v4617
        %4619 = vmatmul.bf16.gmra.mxu0 %v4591
        %v4620 = vpop.f32.mrf.mxu0
        %v4621 = vadd.f32 %v497, %v4620
        %v4622 = vpop.f32.mrf.mxu0
        %v4623 = vadd.f32 %v497, %v4622
        %4624 = vmatmul.bf16.gmra.mxu0 %v4592
        %v4625 = vpop.f32.mrf.mxu0
        %v4626 = vadd.f32 %v497, %v4625
        %v4627 = vpop.f32.mrf.mxu0
        %v4628 = vadd.f32 %v497, %v4627
        %4629 = vmatmul.bf16.gmra.mxu0 %v4593
        %v4630 = vpop.f32.mrf.mxu0
        %v4631 = vadd.f32 %v497, %v4630
        %v4632 = vpop.f32.mrf.mxu0
        %v4633 = vadd.f32 %v497, %v4632
        %4634 = vmatmul.bf16.gmra.mxu0 %v4594
        %v4635 = vpop.f32.mrf.mxu0
        %v4636 = vadd.f32 %v497, %v4635
        %v4637 = vpop.f32.mrf.mxu0
        %v4638 = vadd.f32 %v497, %v4637
        %4639 = vmatmul.bf16.gmra.mxu0 %v4595
        %v4640 = vpop.f32.mrf.mxu0
        %v4641 = vadd.f32 %v497, %v4640
        %v4642 = vpop.f32.mrf.mxu0
        %v4643 = vadd.f32 %v497, %v4642
        %4644 = vdwg.mxu0
        %v4645 = vmul.f32 %v4606, 2.0
        %v4646 = vmul.f32 %v4608, 2.0
        %v4647 = vmul.f32 %v4611, 2.0
        %v4648 = vmul.f32 %v4613, 2.0
        %v4649 = vmul.f32 %v4616, 2.0
        %v4650 = vmul.f32 %v4618, 2.0
        %v4651 = vmul.f32 %v4621, 2.0
        %v4652 = vmul.f32 %v4623, 2.0
        %v4653 = vmul.f32 %v4626, 2.0
        %v4654 = vmul.f32 %v4628, 2.0
        %v4655 = vmul.f32 %v4631, 2.0
        %v4656 = vmul.f32 %v4633, 2.0
        %v4657 = vmul.f32 %v4636, 2.0
        %v4658 = vmul.f32 %v4638, 2.0
        %v4659 = vmul.f32 %v4641, 2.0
        %v4660 = vmul.f32 %v4643, 2.0
        %v4661 = vadd.f32 %v4467, %v4645
        %v4662 = vadd.f32 %v4468, %v4646
        %v4663 = vadd.f32 %v4469, %v4647
        %v4664 = vadd.f32 %v4470, %v4648
        %v4665 = vadd.f32 %v4471, %v4649
        %v4666 = vadd.f32 %v4472, %v4650
        %v4667 = vadd.f32 %v4473, %v4651
        %v4668 = vadd.f32 %v4474, %v4652
        %v4669 = vadd.f32 %v4475, %v4653
        %v4670 = vadd.f32 %v4476, %v4654
        %v4671 = vadd.f32 %v4477, %v4655
        %v4672 = vadd.f32 %v4478, %v4656
        %v4673 = vadd.f32 %v4479, %v4657
        %v4674 = vadd.f32 %v4480, %v4658
        %v4675 = vadd.f32 %v4481, %v4659
        %v4676 = vadd.f32 %v4482, %v4660
        %v4677 = vmul.f32 %v4606, 0.14285715
        %v4678 = vmul.f32 %v4608, 0.14285715
        %v4679 = vmul.f32 %v4611, 0.14285715
        %v4680 = vmul.f32 %v4613, 0.14285715
        %v4681 = vmul.f32 %v4616, 0.14285715
        %v4682 = vmul.f32 %v4618, 0.14285715
        %v4683 = vmul.f32 %v4621, 0.14285715
        %v4684 = vmul.f32 %v4623, 0.14285715
        %v4685 = vmul.f32 %v4626, 0.14285715
        %v4686 = vmul.f32 %v4628, 0.14285715
        %v4687 = vmul.f32 %v4631, 0.14285715
        %v4688 = vmul.f32 %v4633, 0.14285715
        %v4689 = vmul.f32 %v4636, 0.14285715
        %v4690 = vmul.f32 %v4638, 0.14285715
        %v4691 = vmul.f32 %v4641, 0.14285715
        %v4692 = vmul.f32 %v4643, 0.14285715
        %v4693 = vadd.f32 %v4136, %v4677
        %v4694 = vadd.f32 %v4137, %v4678
        %v4695 = vadd.f32 %v4138, %v4679
        %v4696 = vadd.f32 %v4139, %v4680
        %v4697 = vadd.f32 %v4140, %v4681
        %v4698 = vadd.f32 %v4141, %v4682
        %v4699 = vadd.f32 %v4142, %v4683
        %v4700 = vadd.f32 %v4143, %v4684
        %v4701 = vadd.f32 %v4144, %v4685
        %v4702 = vadd.f32 %v4145, %v4686
        %v4703 = vadd.f32 %v4146, %v4687
        %v4704 = vadd.f32 %v4147, %v4688
        %v4705 = vadd.f32 %v4148, %v4689
        %v4706 = vadd.f32 %v4149, %v4690
        %v4707 = vadd.f32 %v4150, %v4691
        %v4708 = vadd.f32 %v4151, %v4692
        %v4709 = vpack.c.bf16 %v4694, %v4693
        %v4710 = vpack.c.bf16 %v4696, %v4695
        %v4711 = vpack.c.bf16 %v4698, %v4697
        %v4712 = vpack.c.bf16 %v4700, %v4699
        %v4713 = vpack.c.bf16 %v4702, %v4701
        %v4714 = vpack.c.bf16 %v4704, %v4703
        %v4715 = vpack.c.bf16 %v4706, %v4705
        %v4716 = vpack.c.bf16 %v4708, %v4707
        %v4718 = vperm.slane %v4155, 0
        %4720 = vmatpush.bf16.msra.mxu0 %v414
        %4721 = vmatpush.bf16.msra.mxu0 %v413
        %4722 = vmatpush.bf16.msra.mxu0 %v412
        %4723 = vmatpush.bf16.msra.mxu0 %v411
        %4724 = vmatpush.bf16.msra.mxu0 %v410
        %4725 = vmatpush.bf16.msra.mxu0 %v409
        %4726 = vmatpush.bf16.msra.mxu0 %v408
        %4727 = vmatpush.bf16.msra.mxu0 %v407
        %4728 = vmatmul.bf16.gmra.mxu0 %v4709
        %v4729 = vpop.f32.mrf.mxu0
        %v4730 = vadd.f32 %v4718, %v4729
        %v4731 = vpop.f32.mrf.mxu0
        %v4732 = vadd.f32 %v4718, %v4731
        %4733 = vmatmul.bf16.gmra.mxu0 %v4710
        %v4734 = vpop.f32.mrf.mxu0
        %v4735 = vadd.f32 %v4718, %v4734
        %v4736 = vpop.f32.mrf.mxu0
        %v4737 = vadd.f32 %v4718, %v4736
        %4738 = vmatmul.bf16.gmra.mxu0 %v4711
        %v4739 = vpop.f32.mrf.mxu0
        %v4740 = vadd.f32 %v4718, %v4739
        %v4741 = vpop.f32.mrf.mxu0
        %v4742 = vadd.f32 %v4718, %v4741
        %4743 = vmatmul.bf16.gmra.mxu0 %v4712
        %v4744 = vpop.f32.mrf.mxu0
        %v4745 = vadd.f32 %v4718, %v4744
        %v4746 = vpop.f32.mrf.mxu0
        %v4747 = vadd.f32 %v4718, %v4746
        %4748 = vmatmul.bf16.gmra.mxu0 %v4713
        %v4749 = vpop.f32.mrf.mxu0
        %v4750 = vadd.f32 %v4718, %v4749
        %v4751 = vpop.f32.mrf.mxu0
        %v4752 = vadd.f32 %v4718, %v4751
        %4753 = vmatmul.bf16.gmra.mxu0 %v4714
        %v4754 = vpop.f32.mrf.mxu0
        %v4755 = vadd.f32 %v4718, %v4754
        %v4756 = vpop.f32.mrf.mxu0
        %v4757 = vadd.f32 %v4718, %v4756
        %4758 = vmatmul.bf16.gmra.mxu0 %v4715
        %v4759 = vpop.f32.mrf.mxu0
        %v4760 = vadd.f32 %v4718, %v4759
        %v4761 = vpop.f32.mrf.mxu0
        %v4762 = vadd.f32 %v4718, %v4761
        %4763 = vmatmul.bf16.gmra.mxu0 %v4716
        %v4764 = vpop.f32.mrf.mxu0
        %v4765 = vadd.f32 %v4718, %v4764
        %v4766 = vpop.f32.mrf.mxu0
        %v4767 = vadd.f32 %v4718, %v4766
        %4768 = vdwg.mxu0
        %v4769 = vtanh.pop %v4730
        %v4770 = vtanh.pop %v4732
        %v4771 = vtanh.pop %v4735
        %v4772 = vtanh.pop %v4737
        %v4773 = vtanh.pop %v4740
        %v4774 = vtanh.pop %v4742
        %v4775 = vtanh.pop %v4745
        %v4776 = vtanh.pop %v4747
        %v4777 = vtanh.pop %v4750
        %v4778 = vtanh.pop %v4752
        %v4779 = vtanh.pop %v4755
        %v4780 = vtanh.pop %v4757
        %v4781 = vtanh.pop %v4760
        %v4782 = vtanh.pop %v4762
        %v4783 = vtanh.pop %v4765
        %v4784 = vtanh.pop %v4767
        %v4785 = vpack.c.bf16 %v4770, %v4769
        %v4786 = vpack.c.bf16 %v4772, %v4771
        %v4787 = vpack.c.bf16 %v4774, %v4773
        %v4788 = vpack.c.bf16 %v4776, %v4775
        %v4789 = vpack.c.bf16 %v4778, %v4777
        %v4790 = vpack.c.bf16 %v4780, %v4779
        %v4791 = vpack.c.bf16 %v4782, %v4781
        %v4792 = vpack.c.bf16 %v4784, %v4783
        %4793 = vmatpush.bf16.msra.mxu0 %v538
        %4794 = vmatpush.bf16.msra.mxu0 %v537
        %4795 = vmatpush.bf16.msra.mxu0 %v536
        %4796 = vmatpush.bf16.msra.mxu0 %v535
        %4797 = vmatpush.bf16.msra.mxu0 %v534
        %4798 = vmatpush.bf16.msra.mxu0 %v533
        %4799 = vmatpush.bf16.msra.mxu0 %v532
        %4800 = vmatpush.bf16.msra.mxu0 %v531
        %4801 = vmatmul.bf16.gmra.mxu0 %v4785
        %v4802 = vpop.f32.mrf.mxu0
        %v4803 = vadd.f32 %v497, %v4802
        %v4804 = vpop.f32.mrf.mxu0
        %v4805 = vadd.f32 %v497, %v4804
        %4806 = vmatmul.bf16.gmra.mxu0 %v4786
        %v4807 = vpop.f32.mrf.mxu0
        %v4808 = vadd.f32 %v497, %v4807
        %v4809 = vpop.f32.mrf.mxu0
        %v4810 = vadd.f32 %v497, %v4809
        %4811 = vmatmul.bf16.gmra.mxu0 %v4787
        %v4812 = vpop.f32.mrf.mxu0
        %v4813 = vadd.f32 %v497, %v4812
        %v4814 = vpop.f32.mrf.mxu0
        %v4815 = vadd.f32 %v497, %v4814
        %4816 = vmatmul.bf16.gmra.mxu0 %v4788
        %v4817 = vpop.f32.mrf.mxu0
        %v4818 = vadd.f32 %v497, %v4817
        %v4819 = vpop.f32.mrf.mxu0
        %v4820 = vadd.f32 %v497, %v4819
        %4821 = vmatmul.bf16.gmra.mxu0 %v4789
        %v4822 = vpop.f32.mrf.mxu0
        %v4823 = vadd.f32 %v497, %v4822
        %v4824 = vpop.f32.mrf.mxu0
        %v4825 = vadd.f32 %v497, %v4824
        %4826 = vmatmul.bf16.gmra.mxu0 %v4790
        %v4827 = vpop.f32.mrf.mxu0
        %v4828 = vadd.f32 %v497, %v4827
        %v4829 = vpop.f32.mrf.mxu0
        %v4830 = vadd.f32 %v497, %v4829
        %4831 = vmatmul.bf16.gmra.mxu0 %v4791
        %v4832 = vpop.f32.mrf.mxu0
        %v4833 = vadd.f32 %v497, %v4832
        %v4834 = vpop.f32.mrf.mxu0
        %v4835 = vadd.f32 %v497, %v4834
        %4836 = vmatmul.bf16.gmra.mxu0 %v4792
        %v4837 = vpop.f32.mrf.mxu0
        %v4838 = vadd.f32 %v497, %v4837
        %v4839 = vpop.f32.mrf.mxu0
        %v4840 = vadd.f32 %v497, %v4839
        %4841 = vdwg.mxu0
        %v4842 = vadd.f32 %v4661, %v4803
        %v4843 = vadd.f32 %v4662, %v4805
        %v4844 = vadd.f32 %v4663, %v4808
        %v4845 = vadd.f32 %v4664, %v4810
        %v4846 = vadd.f32 %v4665, %v4813
        %v4847 = vadd.f32 %v4666, %v4815
        %v4848 = vadd.f32 %v4667, %v4818
        %v4849 = vadd.f32 %v4668, %v4820
        %v4850 = vadd.f32 %v4669, %v4823
        %v4851 = vadd.f32 %v4670, %v4825
        %v4852 = vadd.f32 %v4671, %v4828
        %v4853 = vadd.f32 %v4672, %v4830
        %v4854 = vadd.f32 %v4673, %v4833
        %v4855 = vadd.f32 %v4674, %v4835
        %v4856 = vadd.f32 %v4675, %v4838
        %v4857 = vadd.f32 %v4676, %v4840
        %v4858 = vmul.f32 %v4842, 0.023809524
        %v4859 = vmul.f32 %v4843, 0.023809524
        %v4860 = vmul.f32 %v4844, 0.023809524
        %v4861 = vmul.f32 %v4845, 0.023809524
        %v4862 = vmul.f32 %v4846, 0.023809524
        %v4863 = vmul.f32 %v4847, 0.023809524
        %v4864 = vmul.f32 %v4848, 0.023809524
        %v4865 = vmul.f32 %v4849, 0.023809524
        %v4866 = vmul.f32 %v4850, 0.023809524
        %v4867 = vmul.f32 %v4851, 0.023809524
        %v4868 = vmul.f32 %v4852, 0.023809524
        %v4869 = vmul.f32 %v4853, 0.023809524
        %v4870 = vmul.f32 %v4854, 0.023809524
        %v4871 = vmul.f32 %v4855, 0.023809524
        %v4872 = vmul.f32 %v4856, 0.023809524
        %v4873 = vmul.f32 %v4857, 0.023809524
        %v4874 = vadd.f32 %v4136, %v4858
        %v4875 = vadd.f32 %v4137, %v4859
        %v4876 = vadd.f32 %v4138, %v4860
        %v4877 = vadd.f32 %v4139, %v4861
        %v4878 = vadd.f32 %v4140, %v4862
        %v4879 = vadd.f32 %v4141, %v4863
        %v4880 = vadd.f32 %v4142, %v4864
        %v4881 = vadd.f32 %v4143, %v4865
        %v4882 = vadd.f32 %v4144, %v4866
        %v4883 = vadd.f32 %v4145, %v4867
        %v4884 = vadd.f32 %v4146, %v4868
        %v4885 = vadd.f32 %v4147, %v4869
        %v4886 = vadd.f32 %v4148, %v4870
        %v4887 = vadd.f32 %v4149, %v4871
        %v4888 = vadd.f32 %v4150, %v4872
        %v4889 = vadd.f32 %v4151, %v4873
        %v4890 = vmul.f32 %v340, 0.8571429
        %v4891 = vadd.f32 %v339, %v4890
        %v4892 = vmul.f32 %v340, 0.9285715
        %v4893 = vadd.f32 %v339, %v4892
        %v4894 = vmul.f32 %v340, 1.0000001
        %v4895 = vadd.f32 %v339, %v4894
        %v4896 = vpack.c.bf16 %v4875, %v4874
        %v4897 = vpack.c.bf16 %v4877, %v4876
        %v4898 = vpack.c.bf16 %v4879, %v4878
        %v4899 = vpack.c.bf16 %v4881, %v4880
        %v4900 = vpack.c.bf16 %v4883, %v4882
        %v4901 = vpack.c.bf16 %v4885, %v4884
        %v4902 = vpack.c.bf16 %v4887, %v4886
        %v4903 = vpack.c.bf16 %v4889, %v4888
        %v4905 = vperm.slane %v4891, 0
        %4907 = vmatpush.bf16.msra.mxu0 %v414
        %4908 = vmatpush.bf16.msra.mxu0 %v413
        %4909 = vmatpush.bf16.msra.mxu0 %v412
        %4910 = vmatpush.bf16.msra.mxu0 %v411
        %4911 = vmatpush.bf16.msra.mxu0 %v410
        %4912 = vmatpush.bf16.msra.mxu0 %v409
        %4913 = vmatpush.bf16.msra.mxu0 %v408
        %4914 = vmatpush.bf16.msra.mxu0 %v407
        %4915 = vmatmul.bf16.gmra.mxu0 %v4896
        %v4916 = vpop.f32.mrf.mxu0
        %v4917 = vadd.f32 %v4905, %v4916
        %v4918 = vpop.f32.mrf.mxu0
        %v4919 = vadd.f32 %v4905, %v4918
        %4920 = vmatmul.bf16.gmra.mxu0 %v4897
        %v4921 = vpop.f32.mrf.mxu0
        %v4922 = vadd.f32 %v4905, %v4921
        %v4923 = vpop.f32.mrf.mxu0
        %v4924 = vadd.f32 %v4905, %v4923
        %4925 = vmatmul.bf16.gmra.mxu0 %v4898
        %v4926 = vpop.f32.mrf.mxu0
        %v4927 = vadd.f32 %v4905, %v4926
        %v4928 = vpop.f32.mrf.mxu0
        %v4929 = vadd.f32 %v4905, %v4928
        %4930 = vmatmul.bf16.gmra.mxu0 %v4899
        %v4931 = vpop.f32.mrf.mxu0
        %v4932 = vadd.f32 %v4905, %v4931
        %v4933 = vpop.f32.mrf.mxu0
        %v4934 = vadd.f32 %v4905, %v4933
        %4935 = vmatmul.bf16.gmra.mxu0 %v4900
        %v4936 = vpop.f32.mrf.mxu0
        %v4937 = vadd.f32 %v4905, %v4936
        %v4938 = vpop.f32.mrf.mxu0
        %v4939 = vadd.f32 %v4905, %v4938
        %4940 = vmatmul.bf16.gmra.mxu0 %v4901
        %v4941 = vpop.f32.mrf.mxu0
        %v4942 = vadd.f32 %v4905, %v4941
        %v4943 = vpop.f32.mrf.mxu0
        %v4944 = vadd.f32 %v4905, %v4943
        %4945 = vmatmul.bf16.gmra.mxu0 %v4902
        %v4946 = vpop.f32.mrf.mxu0
        %v4947 = vadd.f32 %v4905, %v4946
        %v4948 = vpop.f32.mrf.mxu0
        %v4949 = vadd.f32 %v4905, %v4948
        %4950 = vmatmul.bf16.gmra.mxu0 %v4903
        %v4951 = vpop.f32.mrf.mxu0
        %v4952 = vadd.f32 %v4905, %v4951
        %v4953 = vpop.f32.mrf.mxu0
        %v4954 = vadd.f32 %v4905, %v4953
        %4955 = vdwg.mxu0
        %v4956 = vtanh.pop %v4917
        %v4957 = vtanh.pop %v4919
        %v4958 = vtanh.pop %v4922
        %v4959 = vtanh.pop %v4924
        %v4960 = vtanh.pop %v4927
        %v4961 = vtanh.pop %v4929
        %v4962 = vtanh.pop %v4932
        %v4963 = vtanh.pop %v4934
        %v4964 = vtanh.pop %v4937
        %v4965 = vtanh.pop %v4939
        %v4966 = vtanh.pop %v4942
        %v4967 = vtanh.pop %v4944
        %v4968 = vtanh.pop %v4947
        %v4969 = vtanh.pop %v4949
        %v4970 = vtanh.pop %v4952
        %v4971 = vtanh.pop %v4954
        %v4972 = vpack.c.bf16 %v4957, %v4956
        %v4973 = vpack.c.bf16 %v4959, %v4958
        %v4974 = vpack.c.bf16 %v4961, %v4960
        %v4975 = vpack.c.bf16 %v4963, %v4962
        %v4976 = vpack.c.bf16 %v4965, %v4964
        %v4977 = vpack.c.bf16 %v4967, %v4966
        %v4978 = vpack.c.bf16 %v4969, %v4968
        %v4979 = vpack.c.bf16 %v4971, %v4970
        %4980 = vmatpush.bf16.msra.mxu0 %v538
        %4981 = vmatpush.bf16.msra.mxu0 %v537
        %4982 = vmatpush.bf16.msra.mxu0 %v536
        %4983 = vmatpush.bf16.msra.mxu0 %v535
        %4984 = vmatpush.bf16.msra.mxu0 %v534
        %4985 = vmatpush.bf16.msra.mxu0 %v533
        %4986 = vmatpush.bf16.msra.mxu0 %v532
        %4987 = vmatpush.bf16.msra.mxu0 %v531
        %4988 = vmatmul.bf16.gmra.mxu0 %v4972
        %v4989 = vpop.f32.mrf.mxu0
        %v4990 = vadd.f32 %v497, %v4989
        %v4991 = vpop.f32.mrf.mxu0
        %v4992 = vadd.f32 %v497, %v4991
        %4993 = vmatmul.bf16.gmra.mxu0 %v4973
        %v4994 = vpop.f32.mrf.mxu0
        %v4995 = vadd.f32 %v497, %v4994
        %v4996 = vpop.f32.mrf.mxu0
        %v4997 = vadd.f32 %v497, %v4996
        %4998 = vmatmul.bf16.gmra.mxu0 %v4974
        %v4999 = vpop.f32.mrf.mxu0
        %v5000 = vadd.f32 %v497, %v4999
        %v5001 = vpop.f32.mrf.mxu0
        %v5002 = vadd.f32 %v497, %v5001
        %5003 = vmatmul.bf16.gmra.mxu0 %v4975
        %v5004 = vpop.f32.mrf.mxu0
        %v5005 = vadd.f32 %v497, %v5004
        %v5006 = vpop.f32.mrf.mxu0
        %v5007 = vadd.f32 %v497, %v5006
        %5008 = vmatmul.bf16.gmra.mxu0 %v4976
        %v5009 = vpop.f32.mrf.mxu0
        %v5010 = vadd.f32 %v497, %v5009
        %v5011 = vpop.f32.mrf.mxu0
        %v5012 = vadd.f32 %v497, %v5011
        %5013 = vmatmul.bf16.gmra.mxu0 %v4977
        %v5014 = vpop.f32.mrf.mxu0
        %v5015 = vadd.f32 %v497, %v5014
        %v5016 = vpop.f32.mrf.mxu0
        %v5017 = vadd.f32 %v497, %v5016
        %5018 = vmatmul.bf16.gmra.mxu0 %v4978
        %v5019 = vpop.f32.mrf.mxu0
        %v5020 = vadd.f32 %v497, %v5019
        %v5021 = vpop.f32.mrf.mxu0
        %v5022 = vadd.f32 %v497, %v5021
        %5023 = vmatmul.bf16.gmra.mxu0 %v4979
        %v5024 = vpop.f32.mrf.mxu0
        %v5025 = vadd.f32 %v497, %v5024
        %v5026 = vpop.f32.mrf.mxu0
        %v5027 = vadd.f32 %v497, %v5026
        %5028 = vdwg.mxu0
        %v5029 = vmul.f32 %v4990, 0.071428575
        %v5030 = vmul.f32 %v4992, 0.071428575
        %v5031 = vmul.f32 %v4995, 0.071428575
        %v5032 = vmul.f32 %v4997, 0.071428575
        %v5033 = vmul.f32 %v5000, 0.071428575
        %v5034 = vmul.f32 %v5002, 0.071428575
        %v5035 = vmul.f32 %v5005, 0.071428575
        %v5036 = vmul.f32 %v5007, 0.071428575
        %v5037 = vmul.f32 %v5010, 0.071428575
        %v5038 = vmul.f32 %v5012, 0.071428575
        %v5039 = vmul.f32 %v5015, 0.071428575
        %v5040 = vmul.f32 %v5017, 0.071428575
        %v5041 = vmul.f32 %v5020, 0.071428575
        %v5042 = vmul.f32 %v5022, 0.071428575
        %v5043 = vmul.f32 %v5025, 0.071428575
        %v5044 = vmul.f32 %v5027, 0.071428575
        %v5045 = vadd.f32 %v4874, %v5029
        %v5046 = vadd.f32 %v4875, %v5030
        %v5047 = vadd.f32 %v4876, %v5031
        %v5048 = vadd.f32 %v4877, %v5032
        %v5049 = vadd.f32 %v4878, %v5033
        %v5050 = vadd.f32 %v4879, %v5034
        %v5051 = vadd.f32 %v4880, %v5035
        %v5052 = vadd.f32 %v4881, %v5036
        %v5053 = vadd.f32 %v4882, %v5037
        %v5054 = vadd.f32 %v4883, %v5038
        %v5055 = vadd.f32 %v4884, %v5039
        %v5056 = vadd.f32 %v4885, %v5040
        %v5057 = vadd.f32 %v4886, %v5041
        %v5058 = vadd.f32 %v4887, %v5042
        %v5059 = vadd.f32 %v4888, %v5043
        %v5060 = vadd.f32 %v4889, %v5044
        %v5061 = vpack.c.bf16 %v5046, %v5045
        %v5062 = vpack.c.bf16 %v5048, %v5047
        %v5063 = vpack.c.bf16 %v5050, %v5049
        %v5064 = vpack.c.bf16 %v5052, %v5051
        %v5065 = vpack.c.bf16 %v5054, %v5053
        %v5066 = vpack.c.bf16 %v5056, %v5055
        %v5067 = vpack.c.bf16 %v5058, %v5057
        %v5068 = vpack.c.bf16 %v5060, %v5059
        %v5070 = vperm.slane %v4893, 0
        %5072 = vmatpush.bf16.msra.mxu0 %v414
        %5073 = vmatpush.bf16.msra.mxu0 %v413
        %5074 = vmatpush.bf16.msra.mxu0 %v412
        %5075 = vmatpush.bf16.msra.mxu0 %v411
        %5076 = vmatpush.bf16.msra.mxu0 %v410
        %5077 = vmatpush.bf16.msra.mxu0 %v409
        %5078 = vmatpush.bf16.msra.mxu0 %v408
        %5079 = vmatpush.bf16.msra.mxu0 %v407
        %5080 = vmatmul.bf16.gmra.mxu0 %v5061
        %v5081 = vpop.f32.mrf.mxu0
        %v5082 = vadd.f32 %v5070, %v5081
        %v5083 = vpop.f32.mrf.mxu0
        %v5084 = vadd.f32 %v5070, %v5083
        %5085 = vmatmul.bf16.gmra.mxu0 %v5062
        %v5086 = vpop.f32.mrf.mxu0
        %v5087 = vadd.f32 %v5070, %v5086
        %v5088 = vpop.f32.mrf.mxu0
        %v5089 = vadd.f32 %v5070, %v5088
        %5090 = vmatmul.bf16.gmra.mxu0 %v5063
        %v5091 = vpop.f32.mrf.mxu0
        %v5092 = vadd.f32 %v5070, %v5091
        %v5093 = vpop.f32.mrf.mxu0
        %v5094 = vadd.f32 %v5070, %v5093
        %5095 = vmatmul.bf16.gmra.mxu0 %v5064
        %v5096 = vpop.f32.mrf.mxu0
        %v5097 = vadd.f32 %v5070, %v5096
        %v5098 = vpop.f32.mrf.mxu0
        %v5099 = vadd.f32 %v5070, %v5098
        %5100 = vmatmul.bf16.gmra.mxu0 %v5065
        %v5101 = vpop.f32.mrf.mxu0
        %v5102 = vadd.f32 %v5070, %v5101
        %v5103 = vpop.f32.mrf.mxu0
        %v5104 = vadd.f32 %v5070, %v5103
        %5105 = vmatmul.bf16.gmra.mxu0 %v5066
        %v5106 = vpop.f32.mrf.mxu0
        %v5107 = vadd.f32 %v5070, %v5106
        %v5108 = vpop.f32.mrf.mxu0
        %v5109 = vadd.f32 %v5070, %v5108
        %5110 = vmatmul.bf16.gmra.mxu0 %v5067
        %v5111 = vpop.f32.mrf.mxu0
        %v5112 = vadd.f32 %v5070, %v5111
        %v5113 = vpop.f32.mrf.mxu0
        %v5114 = vadd.f32 %v5070, %v5113
        %5115 = vmatmul.bf16.gmra.mxu0 %v5068
        %v5116 = vpop.f32.mrf.mxu0
        %v5117 = vadd.f32 %v5070, %v5116
        %v5118 = vpop.f32.mrf.mxu0
        %v5119 = vadd.f32 %v5070, %v5118
        %5120 = vdwg.mxu0
        %v5121 = vtanh.pop %v5082
        %v5122 = vtanh.pop %v5084
        %v5123 = vtanh.pop %v5087
        %v5124 = vtanh.pop %v5089
        %v5125 = vtanh.pop %v5092
        %v5126 = vtanh.pop %v5094
        %v5127 = vtanh.pop %v5097
        %v5128 = vtanh.pop %v5099
        %v5129 = vtanh.pop %v5102
        %v5130 = vtanh.pop %v5104
        %v5131 = vtanh.pop %v5107
        %v5132 = vtanh.pop %v5109
        %v5133 = vtanh.pop %v5112
        %v5134 = vtanh.pop %v5114
        %v5135 = vtanh.pop %v5117
        %v5136 = vtanh.pop %v5119
        %v5137 = vpack.c.bf16 %v5122, %v5121
        %v5138 = vpack.c.bf16 %v5124, %v5123
        %v5139 = vpack.c.bf16 %v5126, %v5125
        %v5140 = vpack.c.bf16 %v5128, %v5127
        %v5141 = vpack.c.bf16 %v5130, %v5129
        %v5142 = vpack.c.bf16 %v5132, %v5131
        %v5143 = vpack.c.bf16 %v5134, %v5133
        %v5144 = vpack.c.bf16 %v5136, %v5135
        %5145 = vmatpush.bf16.msra.mxu0 %v538
        %5146 = vmatpush.bf16.msra.mxu0 %v537
        %5147 = vmatpush.bf16.msra.mxu0 %v536
        %5148 = vmatpush.bf16.msra.mxu0 %v535
        %5149 = vmatpush.bf16.msra.mxu0 %v534
        %5150 = vmatpush.bf16.msra.mxu0 %v533
        %5151 = vmatpush.bf16.msra.mxu0 %v532
        %5152 = vmatpush.bf16.msra.mxu0 %v531
        %5153 = vmatmul.bf16.gmra.mxu0 %v5137
        %v5154 = vpop.f32.mrf.mxu0
        %v5155 = vadd.f32 %v497, %v5154
        %v5156 = vpop.f32.mrf.mxu0
        %v5157 = vadd.f32 %v497, %v5156
        %5158 = vmatmul.bf16.gmra.mxu0 %v5138
        %v5159 = vpop.f32.mrf.mxu0
        %v5160 = vadd.f32 %v497, %v5159
        %v5161 = vpop.f32.mrf.mxu0
        %v5162 = vadd.f32 %v497, %v5161
        %5163 = vmatmul.bf16.gmra.mxu0 %v5139
        %v5164 = vpop.f32.mrf.mxu0
        %v5165 = vadd.f32 %v497, %v5164
        %v5166 = vpop.f32.mrf.mxu0
        %v5167 = vadd.f32 %v497, %v5166
        %5168 = vmatmul.bf16.gmra.mxu0 %v5140
        %v5169 = vpop.f32.mrf.mxu0
        %v5170 = vadd.f32 %v497, %v5169
        %v5171 = vpop.f32.mrf.mxu0
        %v5172 = vadd.f32 %v497, %v5171
        %5173 = vmatmul.bf16.gmra.mxu0 %v5141
        %v5174 = vpop.f32.mrf.mxu0
        %v5175 = vadd.f32 %v497, %v5174
        %v5176 = vpop.f32.mrf.mxu0
        %v5177 = vadd.f32 %v497, %v5176
        %5178 = vmatmul.bf16.gmra.mxu0 %v5142
        %v5179 = vpop.f32.mrf.mxu0
        %v5180 = vadd.f32 %v497, %v5179
        %v5181 = vpop.f32.mrf.mxu0
        %v5182 = vadd.f32 %v497, %v5181
        %5183 = vmatmul.bf16.gmra.mxu0 %v5143
        %v5184 = vpop.f32.mrf.mxu0
        %v5185 = vadd.f32 %v497, %v5184
        %v5186 = vpop.f32.mrf.mxu0
        %v5187 = vadd.f32 %v497, %v5186
        %5188 = vmatmul.bf16.gmra.mxu0 %v5144
        %v5189 = vpop.f32.mrf.mxu0
        %v5190 = vadd.f32 %v497, %v5189
        %v5191 = vpop.f32.mrf.mxu0
        %v5192 = vadd.f32 %v497, %v5191
        %5193 = vdwg.mxu0
        %v5194 = vmul.f32 %v5155, 2.0
        %v5195 = vmul.f32 %v5157, 2.0
        %v5196 = vmul.f32 %v5160, 2.0
        %v5197 = vmul.f32 %v5162, 2.0
        %v5198 = vmul.f32 %v5165, 2.0
        %v5199 = vmul.f32 %v5167, 2.0
        %v5200 = vmul.f32 %v5170, 2.0
        %v5201 = vmul.f32 %v5172, 2.0
        %v5202 = vmul.f32 %v5175, 2.0
        %v5203 = vmul.f32 %v5177, 2.0
        %v5204 = vmul.f32 %v5180, 2.0
        %v5205 = vmul.f32 %v5182, 2.0
        %v5206 = vmul.f32 %v5185, 2.0
        %v5207 = vmul.f32 %v5187, 2.0
        %v5208 = vmul.f32 %v5190, 2.0
        %v5209 = vmul.f32 %v5192, 2.0
        %v5210 = vadd.f32 %v4990, %v5194
        %v5211 = vadd.f32 %v4992, %v5195
        %v5212 = vadd.f32 %v4995, %v5196
        %v5213 = vadd.f32 %v4997, %v5197
        %v5214 = vadd.f32 %v5000, %v5198
        %v5215 = vadd.f32 %v5002, %v5199
        %v5216 = vadd.f32 %v5005, %v5200
        %v5217 = vadd.f32 %v5007, %v5201
        %v5218 = vadd.f32 %v5010, %v5202
        %v5219 = vadd.f32 %v5012, %v5203
        %v5220 = vadd.f32 %v5015, %v5204
        %v5221 = vadd.f32 %v5017, %v5205
        %v5222 = vadd.f32 %v5020, %v5206
        %v5223 = vadd.f32 %v5022, %v5207
        %v5224 = vadd.f32 %v5025, %v5208
        %v5225 = vadd.f32 %v5027, %v5209
        %v5226 = vmul.f32 %v5155, 0.071428575
        %v5227 = vmul.f32 %v5157, 0.071428575
        %v5228 = vmul.f32 %v5160, 0.071428575
        %v5229 = vmul.f32 %v5162, 0.071428575
        %v5230 = vmul.f32 %v5165, 0.071428575
        %v5231 = vmul.f32 %v5167, 0.071428575
        %v5232 = vmul.f32 %v5170, 0.071428575
        %v5233 = vmul.f32 %v5172, 0.071428575
        %v5234 = vmul.f32 %v5175, 0.071428575
        %v5235 = vmul.f32 %v5177, 0.071428575
        %v5236 = vmul.f32 %v5180, 0.071428575
        %v5237 = vmul.f32 %v5182, 0.071428575
        %v5238 = vmul.f32 %v5185, 0.071428575
        %v5239 = vmul.f32 %v5187, 0.071428575
        %v5240 = vmul.f32 %v5190, 0.071428575
        %v5241 = vmul.f32 %v5192, 0.071428575
        %v5242 = vadd.f32 %v4874, %v5226
        %v5243 = vadd.f32 %v4875, %v5227
        %v5244 = vadd.f32 %v4876, %v5228
        %v5245 = vadd.f32 %v4877, %v5229
        %v5246 = vadd.f32 %v4878, %v5230
        %v5247 = vadd.f32 %v4879, %v5231
        %v5248 = vadd.f32 %v4880, %v5232
        %v5249 = vadd.f32 %v4881, %v5233
        %v5250 = vadd.f32 %v4882, %v5234
        %v5251 = vadd.f32 %v4883, %v5235
        %v5252 = vadd.f32 %v4884, %v5236
        %v5253 = vadd.f32 %v4885, %v5237
        %v5254 = vadd.f32 %v4886, %v5238
        %v5255 = vadd.f32 %v4887, %v5239
        %v5256 = vadd.f32 %v4888, %v5240
        %v5257 = vadd.f32 %v4889, %v5241
        %v5258 = vpack.c.bf16 %v5243, %v5242
        %v5259 = vpack.c.bf16 %v5245, %v5244
        %v5260 = vpack.c.bf16 %v5247, %v5246
        %v5261 = vpack.c.bf16 %v5249, %v5248
        %v5262 = vpack.c.bf16 %v5251, %v5250
        %v5263 = vpack.c.bf16 %v5253, %v5252
        %v5264 = vpack.c.bf16 %v5255, %v5254
        %v5265 = vpack.c.bf16 %v5257, %v5256
        %5266 = vmatpush.bf16.msra.mxu0 %v414
        %5267 = vmatpush.bf16.msra.mxu0 %v413
        %5268 = vmatpush.bf16.msra.mxu0 %v412
        %5269 = vmatpush.bf16.msra.mxu0 %v411
        %5270 = vmatpush.bf16.msra.mxu0 %v410
        %5271 = vmatpush.bf16.msra.mxu0 %v409
        %5272 = vmatpush.bf16.msra.mxu0 %v408
        %5273 = vmatpush.bf16.msra.mxu0 %v407
        %5274 = vmatmul.bf16.gmra.mxu0 %v5258
        %v5275 = vpop.f32.mrf.mxu0
        %v5276 = vadd.f32 %v5070, %v5275
        %v5277 = vpop.f32.mrf.mxu0
        %v5278 = vadd.f32 %v5070, %v5277
        %5279 = vmatmul.bf16.gmra.mxu0 %v5259
        %v5280 = vpop.f32.mrf.mxu0
        %v5281 = vadd.f32 %v5070, %v5280
        %v5282 = vpop.f32.mrf.mxu0
        %v5283 = vadd.f32 %v5070, %v5282
        %5284 = vmatmul.bf16.gmra.mxu0 %v5260
        %v5285 = vpop.f32.mrf.mxu0
        %v5286 = vadd.f32 %v5070, %v5285
        %v5287 = vpop.f32.mrf.mxu0
        %v5288 = vadd.f32 %v5070, %v5287
        %5289 = vmatmul.bf16.gmra.mxu0 %v5261
        %v5290 = vpop.f32.mrf.mxu0
        %v5291 = vadd.f32 %v5070, %v5290
        %v5292 = vpop.f32.mrf.mxu0
        %v5293 = vadd.f32 %v5070, %v5292
        %5294 = vmatmul.bf16.gmra.mxu0 %v5262
        %v5295 = vpop.f32.mrf.mxu0
        %v5296 = vadd.f32 %v5070, %v5295
        %v5297 = vpop.f32.mrf.mxu0
        %v5298 = vadd.f32 %v5070, %v5297
        %5299 = vmatmul.bf16.gmra.mxu0 %v5263
        %v5300 = vpop.f32.mrf.mxu0
        %v5301 = vadd.f32 %v5070, %v5300
        %v5302 = vpop.f32.mrf.mxu0
        %v5303 = vadd.f32 %v5070, %v5302
        %5304 = vmatmul.bf16.gmra.mxu0 %v5264
        %v5305 = vpop.f32.mrf.mxu0
        %v5306 = vadd.f32 %v5070, %v5305
        %v5307 = vpop.f32.mrf.mxu0
        %v5308 = vadd.f32 %v5070, %v5307
        %5309 = vmatmul.bf16.gmra.mxu0 %v5265
        %v5310 = vpop.f32.mrf.mxu0
        %v5311 = vadd.f32 %v5070, %v5310
        %v5312 = vpop.f32.mrf.mxu0
        %v5313 = vadd.f32 %v5070, %v5312
        %5314 = vdwg.mxu0
        %v5315 = vtanh.pop %v5276
        %v5316 = vtanh.pop %v5278
        %v5317 = vtanh.pop %v5281
        %v5318 = vtanh.pop %v5283
        %v5319 = vtanh.pop %v5286
        %v5320 = vtanh.pop %v5288
        %v5321 = vtanh.pop %v5291
        %v5322 = vtanh.pop %v5293
        %v5323 = vtanh.pop %v5296
        %v5324 = vtanh.pop %v5298
        %v5325 = vtanh.pop %v5301
        %v5326 = vtanh.pop %v5303
        %v5327 = vtanh.pop %v5306
        %v5328 = vtanh.pop %v5308
        %v5329 = vtanh.pop %v5311
        %v5330 = vtanh.pop %v5313
        %v5331 = vpack.c.bf16 %v5316, %v5315
        %v5332 = vpack.c.bf16 %v5318, %v5317
        %v5333 = vpack.c.bf16 %v5320, %v5319
        %v5334 = vpack.c.bf16 %v5322, %v5321
        %v5335 = vpack.c.bf16 %v5324, %v5323
        %v5336 = vpack.c.bf16 %v5326, %v5325
        %v5337 = vpack.c.bf16 %v5328, %v5327
        %v5338 = vpack.c.bf16 %v5330, %v5329
        %5339 = vmatpush.bf16.msra.mxu0 %v538
        %5340 = vmatpush.bf16.msra.mxu0 %v537
        %5341 = vmatpush.bf16.msra.mxu0 %v536
        %5342 = vmatpush.bf16.msra.mxu0 %v535
        %5343 = vmatpush.bf16.msra.mxu0 %v534
        %5344 = vmatpush.bf16.msra.mxu0 %v533
        %5345 = vmatpush.bf16.msra.mxu0 %v532
        %5346 = vmatpush.bf16.msra.mxu0 %v531
        %5347 = vmatmul.bf16.gmra.mxu0 %v5331
        %v5348 = vpop.f32.mrf.mxu0
        %v5349 = vadd.f32 %v497, %v5348
        %v5350 = vpop.f32.mrf.mxu0
        %v5351 = vadd.f32 %v497, %v5350
        %5352 = vmatmul.bf16.gmra.mxu0 %v5332
        %v5353 = vpop.f32.mrf.mxu0
        %v5354 = vadd.f32 %v497, %v5353
        %v5355 = vpop.f32.mrf.mxu0
        %v5356 = vadd.f32 %v497, %v5355
        %5357 = vmatmul.bf16.gmra.mxu0 %v5333
        %v5358 = vpop.f32.mrf.mxu0
        %v5359 = vadd.f32 %v497, %v5358
        %v5360 = vpop.f32.mrf.mxu0
        %v5361 = vadd.f32 %v497, %v5360
        %5362 = vmatmul.bf16.gmra.mxu0 %v5334
        %v5363 = vpop.f32.mrf.mxu0
        %v5364 = vadd.f32 %v497, %v5363
        %v5365 = vpop.f32.mrf.mxu0
        %v5366 = vadd.f32 %v497, %v5365
        %5367 = vmatmul.bf16.gmra.mxu0 %v5335
        %v5368 = vpop.f32.mrf.mxu0
        %v5369 = vadd.f32 %v497, %v5368
        %v5370 = vpop.f32.mrf.mxu0
        %v5371 = vadd.f32 %v497, %v5370
        %5372 = vmatmul.bf16.gmra.mxu0 %v5336
        %v5373 = vpop.f32.mrf.mxu0
        %v5374 = vadd.f32 %v497, %v5373
        %v5375 = vpop.f32.mrf.mxu0
        %v5376 = vadd.f32 %v497, %v5375
        %5377 = vmatmul.bf16.gmra.mxu0 %v5337
        %v5378 = vpop.f32.mrf.mxu0
        %v5379 = vadd.f32 %v497, %v5378
        %v5380 = vpop.f32.mrf.mxu0
        %v5381 = vadd.f32 %v497, %v5380
        %5382 = vmatmul.bf16.gmra.mxu0 %v5338
        %v5383 = vpop.f32.mrf.mxu0
        %v5384 = vadd.f32 %v497, %v5383
        %v5385 = vpop.f32.mrf.mxu0
        %v5386 = vadd.f32 %v497, %v5385
        %5387 = vdwg.mxu0
        %v5388 = vmul.f32 %v5349, 2.0
        %v5389 = vmul.f32 %v5351, 2.0
        %v5390 = vmul.f32 %v5354, 2.0
        %v5391 = vmul.f32 %v5356, 2.0
        %v5392 = vmul.f32 %v5359, 2.0
        %v5393 = vmul.f32 %v5361, 2.0
        %v5394 = vmul.f32 %v5364, 2.0
        %v5395 = vmul.f32 %v5366, 2.0
        %v5396 = vmul.f32 %v5369, 2.0
        %v5397 = vmul.f32 %v5371, 2.0
        %v5398 = vmul.f32 %v5374, 2.0
        %v5399 = vmul.f32 %v5376, 2.0
        %v5400 = vmul.f32 %v5379, 2.0
        %v5401 = vmul.f32 %v5381, 2.0
        %v5402 = vmul.f32 %v5384, 2.0
        %v5403 = vmul.f32 %v5386, 2.0
        %v5404 = vadd.f32 %v5210, %v5388
        %v5405 = vadd.f32 %v5211, %v5389
        %v5406 = vadd.f32 %v5212, %v5390
        %v5407 = vadd.f32 %v5213, %v5391
        %v5408 = vadd.f32 %v5214, %v5392
        %v5409 = vadd.f32 %v5215, %v5393
        %v5410 = vadd.f32 %v5216, %v5394
        %v5411 = vadd.f32 %v5217, %v5395
        %v5412 = vadd.f32 %v5218, %v5396
        %v5413 = vadd.f32 %v5219, %v5397
        %v5414 = vadd.f32 %v5220, %v5398
        %v5415 = vadd.f32 %v5221, %v5399
        %v5416 = vadd.f32 %v5222, %v5400
        %v5417 = vadd.f32 %v5223, %v5401
        %v5418 = vadd.f32 %v5224, %v5402
        %v5419 = vadd.f32 %v5225, %v5403
        %v5420 = vmul.f32 %v5349, 0.14285715
        %v5421 = vmul.f32 %v5351, 0.14285715
        %v5422 = vmul.f32 %v5354, 0.14285715
        %v5423 = vmul.f32 %v5356, 0.14285715
        %v5424 = vmul.f32 %v5359, 0.14285715
        %v5425 = vmul.f32 %v5361, 0.14285715
        %v5426 = vmul.f32 %v5364, 0.14285715
        %v5427 = vmul.f32 %v5366, 0.14285715
        %v5428 = vmul.f32 %v5369, 0.14285715
        %v5429 = vmul.f32 %v5371, 0.14285715
        %v5430 = vmul.f32 %v5374, 0.14285715
        %v5431 = vmul.f32 %v5376, 0.14285715
        %v5432 = vmul.f32 %v5379, 0.14285715
        %v5433 = vmul.f32 %v5381, 0.14285715
        %v5434 = vmul.f32 %v5384, 0.14285715
        %v5435 = vmul.f32 %v5386, 0.14285715
        %v5436 = vadd.f32 %v4874, %v5420
        %v5437 = vadd.f32 %v4875, %v5421
        %v5438 = vadd.f32 %v4876, %v5422
        %v5439 = vadd.f32 %v4877, %v5423
        %v5440 = vadd.f32 %v4878, %v5424
        %v5441 = vadd.f32 %v4879, %v5425
        %v5442 = vadd.f32 %v4880, %v5426
        %v5443 = vadd.f32 %v4881, %v5427
        %v5444 = vadd.f32 %v4882, %v5428
        %v5445 = vadd.f32 %v4883, %v5429
        %v5446 = vadd.f32 %v4884, %v5430
        %v5447 = vadd.f32 %v4885, %v5431
        %v5448 = vadd.f32 %v4886, %v5432
        %v5449 = vadd.f32 %v4887, %v5433
        %v5450 = vadd.f32 %v4888, %v5434
        %v5451 = vadd.f32 %v4889, %v5435
        %v5452 = vpack.c.bf16 %v5437, %v5436
        %v5453 = vpack.c.bf16 %v5439, %v5438
        %v5454 = vpack.c.bf16 %v5441, %v5440
        %v5455 = vpack.c.bf16 %v5443, %v5442
        %v5456 = vpack.c.bf16 %v5445, %v5444
        %v5457 = vpack.c.bf16 %v5447, %v5446
        %v5458 = vpack.c.bf16 %v5449, %v5448
        %v5459 = vpack.c.bf16 %v5451, %v5450
        %v5461 = vperm.slane %v4895, 0
        %5463 = vmatpush.bf16.msra.mxu0 %v414
        %5464 = vmatpush.bf16.msra.mxu0 %v413
        %5465 = vmatpush.bf16.msra.mxu0 %v412
        %5466 = vmatpush.bf16.msra.mxu0 %v411
        %5467 = vmatpush.bf16.msra.mxu0 %v410
        %5468 = vmatpush.bf16.msra.mxu0 %v409
        %5469 = vmatpush.bf16.msra.mxu0 %v408
        %5470 = vmatpush.bf16.msra.mxu0 %v407
        %5471 = vmatmul.bf16.gmra.mxu0 %v5452
        %v5472 = vpop.f32.mrf.mxu0
        %v5473 = vadd.f32 %v5461, %v5472
        %v5474 = vpop.f32.mrf.mxu0
        %v5475 = vadd.f32 %v5461, %v5474
        %5476 = vmatmul.bf16.gmra.mxu0 %v5453
        %v5477 = vpop.f32.mrf.mxu0
        %v5478 = vadd.f32 %v5461, %v5477
        %v5479 = vpop.f32.mrf.mxu0
        %v5480 = vadd.f32 %v5461, %v5479
        %5481 = vmatmul.bf16.gmra.mxu0 %v5454
        %v5482 = vpop.f32.mrf.mxu0
        %v5483 = vadd.f32 %v5461, %v5482
        %v5484 = vpop.f32.mrf.mxu0
        %v5485 = vadd.f32 %v5461, %v5484
        %5486 = vmatmul.bf16.gmra.mxu0 %v5455
        %v5487 = vpop.f32.mrf.mxu0
        %v5488 = vadd.f32 %v5461, %v5487
        %v5489 = vpop.f32.mrf.mxu0
        %v5490 = vadd.f32 %v5461, %v5489
        %5491 = vmatmul.bf16.gmra.mxu0 %v5456
        %v5492 = vpop.f32.mrf.mxu0
        %v5493 = vadd.f32 %v5461, %v5492
        %v5494 = vpop.f32.mrf.mxu0
        %v5495 = vadd.f32 %v5461, %v5494
        %5496 = vmatmul.bf16.gmra.mxu0 %v5457
        %v5497 = vpop.f32.mrf.mxu0
        %v5498 = vadd.f32 %v5461, %v5497
        %v5499 = vpop.f32.mrf.mxu0
        %v5500 = vadd.f32 %v5461, %v5499
        %5501 = vmatmul.bf16.gmra.mxu0 %v5458
        %v5502 = vpop.f32.mrf.mxu0
        %v5503 = vadd.f32 %v5461, %v5502
        %v5504 = vpop.f32.mrf.mxu0
        %v5505 = vadd.f32 %v5461, %v5504
        %5506 = vmatmul.bf16.gmra.mxu0 %v5459
        %v5507 = vpop.f32.mrf.mxu0
        %v5508 = vadd.f32 %v5461, %v5507
        %v5509 = vpop.f32.mrf.mxu0
        %v5510 = vadd.f32 %v5461, %v5509
        %5511 = vdwg.mxu0
        %v5512 = vtanh.pop %v5473
        %v5513 = vtanh.pop %v5475
        %v5514 = vtanh.pop %v5478
        %v5515 = vtanh.pop %v5480
        %v5516 = vtanh.pop %v5483
        %v5517 = vtanh.pop %v5485
        %v5518 = vtanh.pop %v5488
        %v5519 = vtanh.pop %v5490
        %v5520 = vtanh.pop %v5493
        %v5521 = vtanh.pop %v5495
        %v5522 = vtanh.pop %v5498
        %v5523 = vtanh.pop %v5500
        %v5524 = vtanh.pop %v5503
        %v5525 = vtanh.pop %v5505
        %v5526 = vtanh.pop %v5508
        %v5527 = vtanh.pop %v5510
        %v5528 = vpack.c.bf16 %v5513, %v5512
        %v5529 = vpack.c.bf16 %v5515, %v5514
        %v5530 = vpack.c.bf16 %v5517, %v5516
        %v5531 = vpack.c.bf16 %v5519, %v5518
        %v5532 = vpack.c.bf16 %v5521, %v5520
        %v5533 = vpack.c.bf16 %v5523, %v5522
        %v5534 = vpack.c.bf16 %v5525, %v5524
        %v5535 = vpack.c.bf16 %v5527, %v5526
        %5536 = vmatpush.bf16.msra.mxu0 %v538
        %5537 = vmatpush.bf16.msra.mxu0 %v537
        %5538 = vmatpush.bf16.msra.mxu0 %v536
        %5539 = vmatpush.bf16.msra.mxu0 %v535
        %5540 = vmatpush.bf16.msra.mxu0 %v534
        %5541 = vmatpush.bf16.msra.mxu0 %v533
        %5542 = vmatpush.bf16.msra.mxu0 %v532
        %5543 = vmatpush.bf16.msra.mxu0 %v531
        %5544 = vmatmul.bf16.gmra.mxu0 %v5528
        %v5545 = vpop.f32.mrf.mxu0
        %v5546 = vadd.f32 %v497, %v5545
        %v5547 = vpop.f32.mrf.mxu0
        %v5548 = vadd.f32 %v497, %v5547
        %5549 = vmatmul.bf16.gmra.mxu0 %v5529
        %v5550 = vpop.f32.mrf.mxu0
        %v5551 = vadd.f32 %v497, %v5550
        %v5552 = vpop.f32.mrf.mxu0
        %v5553 = vadd.f32 %v497, %v5552
        %5554 = vmatmul.bf16.gmra.mxu0 %v5530
        %v5555 = vpop.f32.mrf.mxu0
        %v5556 = vadd.f32 %v497, %v5555
        %v5557 = vpop.f32.mrf.mxu0
        %v5558 = vadd.f32 %v497, %v5557
        %5559 = vmatmul.bf16.gmra.mxu0 %v5531
        %v5560 = vpop.f32.mrf.mxu0
        %v5561 = vadd.f32 %v497, %v5560
        %v5562 = vpop.f32.mrf.mxu0
        %v5563 = vadd.f32 %v497, %v5562
        %5564 = vmatmul.bf16.gmra.mxu0 %v5532
        %v5565 = vpop.f32.mrf.mxu0
        %v5566 = vadd.f32 %v497, %v5565
        %v5567 = vpop.f32.mrf.mxu0
        %v5568 = vadd.f32 %v497, %v5567
        %5569 = vmatmul.bf16.gmra.mxu0 %v5533
        %v5570 = vpop.f32.mrf.mxu0
        %v5571 = vadd.f32 %v497, %v5570
        %v5572 = vpop.f32.mrf.mxu0
        %v5573 = vadd.f32 %v497, %v5572
        %5574 = vmatmul.bf16.gmra.mxu0 %v5534
        %v5575 = vpop.f32.mrf.mxu0
        %v5576 = vadd.f32 %v497, %v5575
        %v5577 = vpop.f32.mrf.mxu0
        %v5578 = vadd.f32 %v497, %v5577
        %5579 = vmatmul.bf16.gmra.mxu0 %v5535
        %v5580 = vpop.f32.mrf.mxu0
        %v5581 = vadd.f32 %v497, %v5580
        %v5582 = vpop.f32.mrf.mxu0
        %v5583 = vadd.f32 %v497, %v5582
        %5584 = vdwg.mxu0
        %v5585 = vadd.f32 %v5404, %v5546
        %v5586 = vadd.f32 %v5405, %v5548
        %v5587 = vadd.f32 %v5406, %v5551
        %v5588 = vadd.f32 %v5407, %v5553
        %v5589 = vadd.f32 %v5408, %v5556
        %v5590 = vadd.f32 %v5409, %v5558
        %v5591 = vadd.f32 %v5410, %v5561
        %v5592 = vadd.f32 %v5411, %v5563
        %v5593 = vadd.f32 %v5412, %v5566
        %v5594 = vadd.f32 %v5413, %v5568
        %v5595 = vadd.f32 %v5414, %v5571
        %v5596 = vadd.f32 %v5415, %v5573
        %v5597 = vadd.f32 %v5416, %v5576
        %v5598 = vadd.f32 %v5417, %v5578
        %v5599 = vadd.f32 %v5418, %v5581
        %v5600 = vadd.f32 %v5419, %v5583
        %v5601 = vmul.f32 %v5585, 0.023809524
        %v5602 = vmul.f32 %v5586, 0.023809524
        %v5603 = vmul.f32 %v5587, 0.023809524
        %v5604 = vmul.f32 %v5588, 0.023809524
        %v5605 = vmul.f32 %v5589, 0.023809524
        %v5606 = vmul.f32 %v5590, 0.023809524
        %v5607 = vmul.f32 %v5591, 0.023809524
        %v5608 = vmul.f32 %v5592, 0.023809524
        %v5609 = vmul.f32 %v5593, 0.023809524
        %v5610 = vmul.f32 %v5594, 0.023809524
        %v5611 = vmul.f32 %v5595, 0.023809524
        %v5612 = vmul.f32 %v5596, 0.023809524
        %v5613 = vmul.f32 %v5597, 0.023809524
        %v5614 = vmul.f32 %v5598, 0.023809524
        %v5615 = vmul.f32 %v5599, 0.023809524
        %v5616 = vmul.f32 %v5600, 0.023809524
        %v5617 = vadd.f32 %v4874, %v5601
        %v5618 = vadd.f32 %v4875, %v5602
        %v5619 = vadd.f32 %v4876, %v5603
        %v5620 = vadd.f32 %v4877, %v5604
        %v5621 = vadd.f32 %v4878, %v5605
        %v5622 = vadd.f32 %v4879, %v5606
        %v5623 = vadd.f32 %v4880, %v5607
        %v5624 = vadd.f32 %v4881, %v5608
        %v5625 = vadd.f32 %v4882, %v5609
        %v5626 = vadd.f32 %v4883, %v5610
        %v5627 = vadd.f32 %v4884, %v5611
        %v5628 = vadd.f32 %v4885, %v5612
        %v5629 = vadd.f32 %v4886, %v5613
        %v5630 = vadd.f32 %v4887, %v5614
        %v5631 = vadd.f32 %v4888, %v5615
        %v5632 = vadd.f32 %v4889, %v5616
        %5633 = vst [vmem:[%s304] sm:$0xff] %v5617
        %5634 = vst [vmem:[%s304 + $0x8] sm:$0xff] %v5618
        %5635 = vst [vmem:[%s304 + $0x10] sm:$0xff] %v5619
        %5636 = vst [vmem:[%s304 + $0x18] sm:$0xff] %v5620
        %5637 = vst [vmem:[%s304 + $0x20] sm:$0xff] %v5621
        %5638 = vst [vmem:[%s304 + $0x28] sm:$0xff] %v5622
        %5639 = vst [vmem:[%s304 + $0x30] sm:$0xff] %v5623
        %5640 = vst [vmem:[%s304 + $0x38] sm:$0xff] %v5624
        %5641 = vst [vmem:[%s304 + $0x40] sm:$0xff] %v5625
        %5642 = vst [vmem:[%s304 + $0x48] sm:$0xff] %v5626
        %5643 = vst [vmem:[%s304 + $0x50] sm:$0xff] %v5627
        %5644 = vst [vmem:[%s304 + $0x58] sm:$0xff] %v5628
        %5645 = vst [vmem:[%s304 + $0x60] sm:$0xff] %v5629
        %5646 = vst [vmem:[%s304 + $0x68] sm:$0xff] %v5630
        %5647 = vst [vmem:[%s304 + $0x70] sm:$0xff] %v5631
        %5648 = vst [vmem:[%s304 + $0x78] sm:$0xff] %v5632
        %s5649 = sand.u32 %s163, 1
        %s5650 = scalar_lea.sflag [#allocation4], %s5649
        %s5651 = sand.u32 %s163, 1
        %s5652 = smul.addr %s5651, 128
        %s5653 = scalar_lea.vmem [#allocation8], %s5652
        // Predicated region
        $region57: #{tpu_custom_call.1} parent=43 // pred_check
          %p5654 = pneg %p173
        $region58: #{tpu_custom_call.1} parent=43 // pred_check_branch
          %5656 = sbr.rel (%p5654) target = $region60
        $region59: #{tpu_custom_call.1} parent=43 // pred_region
          %s5657 = smul.u32 16, %s24
          %5659 = vsyncadd %s5650, 0
          %s5660 = smul.addr %s5657, 8
          %s5661 = scalar_lea.hbm %s6, %s5660
          %s5662 = sshll.u32 %s5653, 4
          %s5663 = int_to_ptr.vmem [resolvable:$true] %s5662
          %s5664 = sshll.u32 %s5661, 4
          %s5665 = int_to_ptr.hbm [resolvable:$true] %s5664
          %5670 = dma.vmem_to_hbm [thread:$0]  %s5663, 2048, %s5665, %s5650, 128, 128, 8
        $region60: #{tpu_custom_call.1} parent=43 // pred_fallthru
          _
      $region44: #{tpu_custom_call.1} parent=5 // pred_fallthru
        _
      %p5671 = scmp.le.s32.totalorder 2, %s19
      // Predicated region
      $region61: #{tpu_custom_call.1} parent=5 // pred_check
        %p5672 = pneg %p5671
      $region62: #{tpu_custom_call.1} parent=5 // pred_check_branch
        %5674 = sbr.rel (%p5672) target = $region64
      $region63: #{tpu_custom_call.1} parent=5 // pred_region
        %s5675 = ssub.s32 %s19, 2
        // Predicated region
        $region65: #{tpu_custom_call.1} parent=63 // pred_check
          %p5676 = pneg %p179
        $region66: #{tpu_custom_call.1} parent=63 // pred_check_branch
          %5678 = sbr.rel (%p5676) target = $region68
        $region67: #{tpu_custom_call.1} parent=63 // pred_region
          %s5679 = sand.u32 %s164, 1
          %s5680 = scalar_lea.sflag [#allocation4], %s5679
          %s5681 = sand.u32 %s164, 1
          %s5682 = smul.addr %s5681, 128
          %s5683 = scalar_lea.vmem [#allocation8], %s5682
          %5685 = dma.done %s5680, 2048
        $region68: #{tpu_custom_call.1} parent=63 // pred_fallthru
          _
      $region64: #{tpu_custom_call.1} parent=5 // pred_fallthru
        _
    $region6: #{tpu_custom_call.1} parent=1 // loop_footer
      %s23 = sadd.s32 1, %s19
    $region7: #{tpu_custom_call.1} parent=1 // loop_footer_branch
      %18 = sbr.rel target = $region3
    $region8: #{tpu_custom_call.1} parent=1 // loop_exit
      _
    %5686 = vsyncpa [#allocation3], 1
    %s5687 = scalar_lea.sflag [#allocation3], 1
    %5688 = vsyncpa %s5687, 1
    %5689 = vsyncpa [#allocation6], 1
    %5690 = vsyncpa [#allocation4], 1
    %s5691 = scalar_lea.sflag [#allocation4], 1
    %5692 = vsyncpa %s5691, 1

</llo_original>
